<compile_context>
chip_gen: v5e
topology: v5e:2x2
jax: 0.10.0
libtpu: 0.0.40
codegen_flags: <defaults>
</compile_context>

<pallas_src>
import jax
import jax.numpy as jnp
from jax.experimental import pallas as pl
from jax.experimental.pallas import tpu as pltpu


# ----------------------------- Pallas kernels ------------------------------

def conv_bn_relu_kernel(p_ref, w_ref, scale_ref, bias_ref, o_ref):
    """3x3 conv as one (TM, 9*Cin) x (9*Cin, Cout) bf16 matmul + folded BN + ReLU.

    p_ref:     (TM, 9*Cin)   bf16 im2col patch tile
    w_ref:     (9*Cin, Cout) bf16 weights
    scale_ref: (1, Cout)     f32  gamma / sqrt(var + eps)
    bias_ref:  (1, Cout)     f32  (conv_bias - mean) * scale + beta
    o_ref:     (TM, Cout)    bf16
    """
    acc = jnp.dot(p_ref[...], w_ref[...], preferred_element_type=jnp.float32)
    y = acc * scale_ref[...] + bias_ref[...]          # f32 epilogue
    o_ref[...] = jnp.maximum(y, 0.0).astype(o_ref.dtype)


def maxpool_kernel(x_ref, o_ref):
    """2x2 / stride-2 max pool over one image.

    x_ref: (1, H, W/2, 2*C)  -- width pairs pre-merged into lanes (free reshape)
    o_ref: (1, H/2, W/2, C)
    """
    _, h, wh, c2 = x_ref.shape
    c = c2 // 2
    x = x_ref[0].reshape(h // 2, 2, wh, c2)           # split leading dim only
    m = jnp.maximum(x[:, 0], x[:, 1])                 # row pairs   (VPU)
    o_ref[0] = jnp.maximum(m[..., :c], m[..., c:])    # column pairs (lane slice)


def gap_classifier_kernel(x_ref, w1_ref, b1_ref, w2_ref, b2_ref, o_ref):
    """Global average pool + Linear(128,64) + ReLU + Linear(64,num_classes).

    x_ref: (TN, H*W, 128) bf16
    """
    feat = jnp.mean(x_ref[...].astype(jnp.float32), axis=1)     # (TN, 128) f32
    h = jnp.dot(feat, w1_ref[...], preferred_element_type=jnp.float32) + b1_ref[...]
    h = jnp.maximum(h, 0.0)
    # TODO(synk): nn.Dropout(0.5) is eval-mode identity here (no RNG masking).
    o_ref[...] = jnp.dot(h, w2_ref[...], preferred_element_type=jnp.float32) + b2_ref[...]


# ------------------------------ JAX wrappers --------------------------------

def _pick_tile(m, cap=1024):
    """Largest power-of-two tile (>=8) dividing m, capped; else full m."""
    for t in (1024, 512, 256, 128, 64, 32, 16, 8):
        if t <= cap and t <= m and m % t == 0:
            return t
    return m


def conv_bn_relu(x_nhwc, w, scale, bias):
    """x_nhwc: (N, H, W, Cin) bf16; w: (9*Cin, Cout) bf16; scale/bias: (1, Cout) f32."""
    N, H, W, Cin = x_nhwc.shape
    Cout = w.shape[-1]
    K9 = 9 * Cin
    xp = jnp.pad(x_nhwc, ((0, 0), (1, 1), (1, 1), (0, 0)))
    # Single (M, 9*Cin) im2col slab, tap order (dy*3+dx) matching the weight layout.
    cols = jnp.concatenate(
        [xp[:, dy:dy + H, dx:dx + W, :] for dy in range(3) for dx in range(3)],
        axis=-1,
    ).reshape(N * H * W, K9)
    M = N * H * W
    TM = _pick_tile(M)

    out = pl.pallas_call(
        conv_bn_relu_kernel,
        out_shape=jax.ShapeDtypeStruct((M, Cout), jnp.bfloat16),
        grid=(M // TM,),
        in_specs=[
            pl.BlockSpec((TM, K9), lambda i: (i, 0)),
            pl.BlockSpec((K9, Cout), lambda i: (0, 0)),
            pl.BlockSpec((1, Cout), lambda i: (0, 0)),
            pl.BlockSpec((1, Cout), lambda i: (0, 0)),
        ],
        out_specs=pl.BlockSpec((TM, Cout), lambda i: (i, 0)),
        compiler_params=pltpu.CompilerParams(dimension_semantics=("parallel",)),
    )(cols, w, scale, bias)
    return out.reshape(N, H, W, Cout)


def maxpool2(x_nhwc):
    """2x2 / stride-2 max pool.  Assumes even H, W (true for this net: 16->8->4->2)."""
    N, H, W, C = x_nhwc.shape
    Hh, Wh = H // 2, W // 2
    # Free (contiguous, trailing-dims) reshape: no HBM transpose / copy.
    xr = x_nhwc.reshape(N, H, Wh, 2 * C)
    return pl.pallas_call(
        maxpool_kernel,
        out_shape=jax.ShapeDtypeStruct((N, Hh, Wh, C), x_nhwc.dtype),
        grid=(N,),
        in_specs=[pl.BlockSpec((1, H, Wh, 2 * C), lambda n: (n, 0, 0, 0))],
        out_specs=pl.BlockSpec((1, Hh, Wh, C), lambda n: (n, 0, 0, 0)),
        compiler_params=pltpu.CompilerParams(dimension_semantics=("parallel",)),
    )(xr)


def gap_classifier(x_nhwc, w1, b1, w2, b2):
    N, H, W, C = x_nhwc.shape
    HW = H * W
    num_classes = w2.shape[-1]
    hidden = w1.shape[-1]
    xr = x_nhwc.reshape(N, HW, C)
    TN = N if N <= 128 else _pick_tile(N, cap=128)
    return pl.pallas_call(
        gap_classifier_kernel,
        out_shape=jax.ShapeDtypeStruct((N, num_classes), jnp.float32),
        grid=(N // TN,),
        in_specs=[
            pl.BlockSpec((TN, HW, C), lambda i: (i, 0, 0)),
            pl.BlockSpec((C, hidden), lambda i: (0, 0)),
            pl.BlockSpec((1, hidden), lambda i: (0, 0)),
            pl.BlockSpec((hidden, num_classes), lambda i: (0, 0)),
            pl.BlockSpec((1, num_classes), lambda i: (0, 0)),
        ],
        out_specs=pl.BlockSpec((TN, num_classes), lambda i: (i, 0)),
        compiler_params=pltpu.CompilerParams(dimension_semantics=("parallel",)),
    )(xr, w1, b1, w2, b2)


# --------------------------- parameter construction -------------------------

def _fold_bn(conv_b, gamma, beta, mean, var, eps=1e-5):
    scale = gamma / jnp.sqrt(var + eps)
    bias = (conv_b - mean) * scale + beta
    return scale.reshape(1, -1), bias.reshape(1, -1)


def _conv_bn_params(key, cin, cout):
    k1, k2, k3, k4, k5, k6 = jax.random.split(key, 6)
    # PyTorch conv weight layout (Cout, Cin, kh, kw), kaiming-ish init.
    w_pt = jax.random.normal(k1, (cout, cin, 3, 3), jnp.float32) * (2.0 / (cin * 9)) ** 0.5
    b = 0.01 * jax.random.normal(k2, (cout,), jnp.float32)
    gamma = 1.0 + 0.1 * jax.random.normal(k3, (cout,), jnp.float32)
    beta = 0.1 * jax.random.normal(k4, (cout,), jnp.float32)
    mean = 0.1 * jax.random.normal(k5, (cout,), jnp.float32)
    var = 1.0 + 0.1 * jnp.abs(jax.random.normal(k6, (cout,), jnp.float32))
    # -> (9*Cin, Cout), row index = (kh*3 + kw)*Cin + cin to match im2col concat order.
    w = jnp.transpose(w_pt, (2, 3, 1, 0)).reshape(9 * cin, cout).astype(jnp.bfloat16)
    scale, bias = _fold_bn(b, gamma, beta, mean, var)
    return {"w": w, "scale": scale, "bias": bias}


def make_params(key, num_classes=10):
    # Eval-mode BN with synthetic running stats (training-mode BN not supported).
    keys = jax.random.split(key, 10)
    params = {
        "block1": [_conv_bn_params(keys[0], 3, 32), _conv_bn_params(keys[1], 32, 32)],
        "block2": [_conv_bn_params(keys[2], 32, 64), _conv_bn_params(keys[3], 64, 64)],
        "block3": [_conv_bn_params(keys[4], 64, 128), _conv_bn_params(keys[5], 128, 128)],
    }
    w1_pt = jax.random.normal(keys[6], (64, 128), jnp.float32) * (1.0 / 128) ** 0.5
    b1_pt = 0.01 * jax.random.normal(keys[7], (64,), jnp.float32)
    w2_pt = jax.random.normal(keys[8], (num_classes, 64), jnp.float32) * (1.0 / 64) ** 0.5
    b2_pt = 0.01 * jax.random.normal(keys[9], (num_classes,), jnp.float32)
    params["w1"] = w1_pt.T                      # (128, 64)
    params["b1"] = b1_pt.reshape(1, -1)         # (1, 64)
    params["w2"] = w2_pt.T                      # (64, num_classes)
    params["b2"] = b2_pt.reshape(1, -1)         # (1, num_classes)
    return params


# -------------------------------- forward -----------------------------------

def net_forward(x_nchw, params):
    # NCHW -> NHWC, bf16 activations between layers (f32 epilogues inside kernels).
    x = jnp.transpose(x_nchw, (0, 2, 3, 1)).astype(jnp.bfloat16)
    for blk in ("block1", "block2", "block3"):
        for p in params[blk]:
            x = conv_bn_relu(x, p["w"], p["scale"], p["bias"])
        x = maxpool2(x)
    return gap_classifier(x, params["w1"], params["b1"], params["w2"], params["b2"])


if __name__ == "__main__":
    key = jax.random.PRNGKey(0)
    k_x, k_p = jax.random.split(key)
    # Module-consistent small shapes: batch=2, 3 input channels, 16x16 spatial.
    x = jax.random.normal(k_x, (2, 3, 16, 16), jnp.float32)
    params = make_params(k_p, num_classes=10)

    fwd = jax.jit(net_forward)
    out = fwd(x, params)
    jax.block_until_ready(out)
    assert out.shape == (2, 10), out.shape
    assert bool(jnp.all(jnp.isfinite(out)))
    print("KERNEL_OK")
</pallas_src>

<mosaic_0001>
module attributes {stable_mosaic.version = 11 : i64} {
  func.func @conv_bn_relu_kernel(%arg0: i32, %arg1: memref<512x27xbf16, #tpu.memory_space<vmem>>, %arg2: memref<27x32xbf16, #tpu.memory_space<vmem>>, %arg3: memref<1x32xf32, #tpu.memory_space<vmem>>, %arg4: memref<1x32xf32, #tpu.memory_space<vmem>>, %arg5: memref<512x32xbf16, #tpu.memory_space<vmem>>) attributes {dimension_semantics = [#tpu.dimension_semantics<parallel>], iteration_bounds = array<i64: 1>, scalar_prefetch = 0 : i64, scratch_operands = 0 : i64, tpu.core_type = #tpu.core_type<tc>, window_params = [{transform_indices = @transform_0, window_bounds = array<i64: 512, 27>}, {pipeline_mode = #tpu.pipeline_mode<synchronous>, transform_indices = @transform_1, window_bounds = array<i64: 27, 32>}, {pipeline_mode = #tpu.pipeline_mode<synchronous>, transform_indices = @transform_2, window_bounds = array<i64: 1, 32>}, {pipeline_mode = #tpu.pipeline_mode<synchronous>, transform_indices = @transform_3, window_bounds = array<i64: 1, 32>}, {transform_indices = @transform_4, window_bounds = array<i64: 512, 32>}]} {
    %c0 = arith.constant 0 : index
    %c0_0 = arith.constant 0 : index
    %0 = vector.load %arg1[%c0, %c0_0] : memref<512x27xbf16, #tpu.memory_space<vmem>>, vector<512x27xbf16>
    %c0_1 = arith.constant 0 : index
    %c0_2 = arith.constant 0 : index
    %1 = vector.load %arg2[%c0_1, %c0_2] : memref<27x32xbf16, #tpu.memory_space<vmem>>, vector<27x32xbf16>
    %cst = arith.constant dense<0.000000e+00> : vector<512x32xf32>
    %2 = tpu.matmul %0, %1, %cst {dimension_numbers = #tpu.dot_dimension_numbers<[1], [0], [0], [1], [0, 0, 1, 1], [], []>} : vector<512x27xbf16>, vector<27x32xbf16>, vector<512x32xf32> -> vector<512x32xf32>
    %c0_3 = arith.constant 0 : index
    %c0_4 = arith.constant 0 : index
    %3 = vector.load %arg3[%c0_3, %c0_4] : memref<1x32xf32, #tpu.memory_space<vmem>>, vector<1x32xf32>
    %4 = vector.broadcast %3 : vector<1x32xf32> to vector<512x32xf32>
    %5 = arith.mulf %2, %4 : vector<512x32xf32>
    %c0_5 = arith.constant 0 : index
    %c0_6 = arith.constant 0 : index
    %6 = vector.load %arg4[%c0_5, %c0_6] : memref<1x32xf32, #tpu.memory_space<vmem>>, vector<1x32xf32>
    %7 = vector.broadcast %6 : vector<1x32xf32> to vector<512x32xf32>
    %8 = arith.addf %5, %7 : vector<512x32xf32>
    %cst_7 = arith.constant 0.000000e+00 : f32
    %9 = vector.broadcast %cst_7 : f32 to vector<512x32xf32>
    %10 = arith.maximumf %8, %9 : vector<512x32xf32>
    %11 = arith.truncf %10 : vector<512x32xf32> to vector<512x32xbf16>
    %c0_8 = arith.constant 0 : index
    %c0_9 = arith.constant 0 : index
    %12 = vector.load %arg5[%c0_8, %c0_9] : memref<512x32xbf16, #tpu.memory_space<vmem>>, vector<512x32xbf16>
    tpu.vector_store %arg5[%c0_8, %c0_9], %11 {strides = array<i32>} : memref<512x32xbf16, #tpu.memory_space<vmem>>, vector<512x32xbf16>,
    return
  }
  func.func @transform_0(%arg0: i32) -> (i32, i32) {
    %c0_i32 = arith.constant 0 : i32
    %c0_i32_0 = arith.constant 0 : i32
    return %arg0, %c0_i32 : i32, i32
  }
  func.func @transform_1(%arg0: i32) -> (i32, i32) {
    %c0_i32 = arith.constant 0 : i32
    %c0_i32_0 = arith.constant 0 : i32
    %c0_i32_1 = arith.constant 0 : i32
    return %c0_i32, %c0_i32_0 : i32, i32
  }
  func.func @transform_2(%arg0: i32) -> (i32, i32) {
    %c0_i32 = arith.constant 0 : i32
    %c0_i32_0 = arith.constant 0 : i32
    %c0_i32_1 = arith.constant 0 : i32
    return %c0_i32, %c0_i32_0 : i32, i32
  }
  func.func @transform_3(%arg0: i32) -> (i32, i32) {
    %c0_i32 = arith.constant 0 : i32
    %c0_i32_0 = arith.constant 0 : i32
    %c0_i32_1 = arith.constant 0 : i32
    return %c0_i32, %c0_i32_0 : i32, i32
  }
  func.func @transform_4(%arg0: i32) -> (i32, i32) {
    %c0_i32 = arith.constant 0 : i32
    %c0_i32_0 = arith.constant 0 : i32
    return %arg0, %c0_i32 : i32, i32
  }
}

module attributes {stable_mosaic.version = 11 : i64} {
  func.func @conv_bn_relu_kernel(%arg0: i32, %arg1: memref<512x288xbf16, #tpu.memory_space<vmem>>, %arg2: memref<288x32xbf16, #tpu.memory_space<vmem>>, %arg3: memref<1x32xf32, #tpu.memory_space<vmem>>, %arg4: memref<1x32xf32, #tpu.memory_space<vmem>>, %arg5: memref<512x32xbf16, #tpu.memory_space<vmem>>) attributes {dimension_semantics = [#tpu.dimension_semantics<parallel>], iteration_bounds = array<i64: 1>, scalar_prefetch = 0 : i64, scratch_operands = 0 : i64, tpu.core_type = #tpu.core_type<tc>, window_params = [{transform_indices = @transform_0, window_bounds = array<i64: 512, 288>}, {pipeline_mode = #tpu.pipeline_mode<synchronous>, transform_indices = @transform_1, window_bounds = array<i64: 288, 32>}, {pipeline_mode = #tpu.pipeline_mode<synchronous>, transform_indices = @transform_2, window_bounds = array<i64: 1, 32>}, {pipeline_mode = #tpu.pipeline_mode<synchronous>, transform_indices = @transform_3, window_bounds = array<i64: 1, 32>}, {transform_indices = @transform_4, window_bounds = array<i64: 512, 32>}]} {
    %c0 = arith.constant 0 : index
    %c0_0 = arith.constant 0 : index
    %0 = vector.load %arg1[%c0, %c0_0] : memref<512x288xbf16, #tpu.memory_space<vmem>>, vector<512x288xbf16>
    %c0_1 = arith.constant 0 : index
    %c0_2 = arith.constant 0 : index
    %1 = vector.load %arg2[%c0_1, %c0_2] : memref<288x32xbf16, #tpu.memory_space<vmem>>, vector<288x32xbf16>
    %cst = arith.constant dense<0.000000e+00> : vector<512x32xf32>
    %2 = tpu.matmul %0, %1, %cst {dimension_numbers = #tpu.dot_dimension_numbers<[1], [0], [0], [1], [0, 0, 1, 1], [], []>} : vector<512x288xbf16>, vector<288x32xbf16>, vector<512x32xf32> -> vector<512x32xf32>
    %c0_3 = arith.constant 0 : index
    %c0_4 = arith.constant 0 : index
    %3 = vector.load %arg3[%c0_3, %c0_4] : memref<1x32xf32, #tpu.memory_space<vmem>>, vector<1x32xf32>
    %4 = vector.broadcast %3 : vector<1x32xf32> to vector<512x32xf32>
    %5 = arith.mulf %2, %4 : vector<512x32xf32>
    %c0_5 = arith.constant 0 : index
    %c0_6 = arith.constant 0 : index
    %6 = vector.load %arg4[%c0_5, %c0_6] : memref<1x32xf32, #tpu.memory_space<vmem>>, vector<1x32xf32>
    %7 = vector.broadcast %6 : vector<1x32xf32> to vector<512x32xf32>
    %8 = arith.addf %5, %7 : vector<512x32xf32>
    %cst_7 = arith.constant 0.000000e+00 : f32
    %9 = vector.broadcast %cst_7 : f32 to vector<512x32xf32>
    %10 = arith.maximumf %8, %9 : vector<512x32xf32>
    %11 = arith.truncf %10 : vector<512x32xf32> to vector<512x32xbf16>
    %c0_8 = arith.constant 0 : index
    %c0_9 = arith.constant 0 : index
    %12 = vector.load %arg5[%c0_8, %c0_9] : memref<512x32xbf16, #tpu.memory_space<vmem>>, vector<512x32xbf16>
    tpu.vector_store %arg5[%c0_8, %c0_9], %11 {strides = array<i32>} : memref<512x32xbf16, #tpu.memory_space<vmem>>, vector<512x32xbf16>,
    return
  }
  func.func @transform_0(%arg0: i32) -> (i32, i32) {
    %c0_i32 = arith.constant 0 : i32
    %c0_i32_0 = arith.constant 0 : i32
    return %arg0, %c0_i32 : i32, i32
  }
  func.func @transform_1(%arg0: i32) -> (i32, i32) {
    %c0_i32 = arith.constant 0 : i32
    %c0_i32_0 = arith.constant 0 : i32
    %c0_i32_1 = arith.constant 0 : i32
    return %c0_i32, %c0_i32_0 : i32, i32
  }
  func.func @transform_2(%arg0: i32) -> (i32, i32) {
    %c0_i32 = arith.constant 0 : i32
    %c0_i32_0 = arith.constant 0 : i32
    %c0_i32_1 = arith.constant 0 : i32
    return %c0_i32, %c0_i32_0 : i32, i32
  }
  func.func @transform_3(%arg0: i32) -> (i32, i32) {
    %c0_i32 = arith.constant 0 : i32
    %c0_i32_0 = arith.constant 0 : i32
    %c0_i32_1 = arith.constant 0 : i32
    return %c0_i32, %c0_i32_0 : i32, i32
  }
  func.func @transform_4(%arg0: i32) -> (i32, i32) {
    %c0_i32 = arith.constant 0 : i32
    %c0_i32_0 = arith.constant 0 : i32
    return %arg0, %c0_i32 : i32, i32
  }
}

module attributes {stable_mosaic.version = 11 : i64} {
  func.func @maxpool_kernel(%arg0: i32, %arg1: memref<1x16x8x64xbf16, #tpu.memory_space<vmem>>, %arg2: memref<1x8x8x32xbf16, #tpu.memory_space<vmem>>) attributes {dimension_semantics = [#tpu.dimension_semantics<parallel>], iteration_bounds = array<i64: 2>, scalar_prefetch = 0 : i64, scratch_operands = 0 : i64, tpu.core_type = #tpu.core_type<tc>, window_params = [{transform_indices = @transform_0, window_bounds = array<i64: 1, 16, 8, 64>}, {transform_indices = @transform_1, window_bounds = array<i64: 1, 8, 8, 32>}]} {
    %c0 = arith.constant 0 : index
    %c0_0 = arith.constant 0 : index
    %c0_1 = arith.constant 0 : index
    %c0_2 = arith.constant 0 : index
    %0 = vector.load %arg1[%c0, %c0_0, %c0_1, %c0_2] : memref<1x16x8x64xbf16, #tpu.memory_space<vmem>>, vector<1x16x8x64xbf16>
    %1 = vector.shape_cast %0 : vector<1x16x8x64xbf16> to vector<16x8x64xbf16>
    %2 = vector.shape_cast %1 : vector<16x8x64xbf16> to vector<8x2x8x64xbf16>
    %3 = vector.extract_strided_slice %2 {offsets = [0, 0, 0, 0], sizes = [8, 1, 8, 64], strides = [1, 1, 1, 1]} : vector<8x2x8x64xbf16> to vector<8x1x8x64xbf16>
    %4 = vector.shape_cast %3 : vector<8x1x8x64xbf16> to vector<8x8x64xbf16>
    %5 = vector.extract_strided_slice %2 {offsets = [0, 1, 0, 0], sizes = [8, 1, 8, 64], strides = [1, 1, 1, 1]} : vector<8x2x8x64xbf16> to vector<8x1x8x64xbf16>
    %6 = vector.shape_cast %5 : vector<8x1x8x64xbf16> to vector<8x8x64xbf16>
    %7 = arith.maximumf %4, %6 : vector<8x8x64xbf16>
    %8 = vector.extract_strided_slice %7 {offsets = [0, 0, 0], sizes = [8, 8, 32], strides = [1, 1, 1]} : vector<8x8x64xbf16> to vector<8x8x32xbf16>
    %9 = vector.extract_strided_slice %7 {offsets = [0, 0, 32], sizes = [8, 8, 32], strides = [1, 1, 1]} : vector<8x8x64xbf16> to vector<8x8x32xbf16>
    %10 = arith.maximumf %8, %9 : vector<8x8x32xbf16>
    %c0_3 = arith.constant 0 : index
    %c0_4 = arith.constant 0 : index
    %c0_5 = arith.constant 0 : index
    %c0_6 = arith.constant 0 : index
    %11 = vector.load %arg2[%c0_3, %c0_4, %c0_5, %c0_6] : memref<1x8x8x32xbf16, #tpu.memory_space<vmem>>, vector<1x8x8x32xbf16>
    %12 = vector.shape_cast %11 : vector<1x8x8x32xbf16> to vector<8x8x32xbf16>
    %13 = vector.shape_cast %10 : vector<8x8x32xbf16> to vector<1x8x8x32xbf16>
    tpu.vector_store %arg2[%c0_3, %c0_4, %c0_5, %c0_6], %13 {strides = array<i32>} : memref<1x8x8x32xbf16, #tpu.memory_space<vmem>>, vector<1x8x8x32xbf16>,
    return
  }
  func.func @transform_0(%arg0: i32) -> (i32, i32, i32, i32) {
    %c0_i32 = arith.constant 0 : i32
    %c0_i32_0 = arith.constant 0 : i32
    %c0_i32_1 = arith.constant 0 : i32
    %c0_i32_2 = arith.constant 0 : i32
    return %arg0, %c0_i32, %c0_i32_0, %c0_i32_1 : i32, i32, i32, i32
  }
  func.func @transform_1(%arg0: i32) -> (i32, i32, i32, i32) {
    %c0_i32 = arith.constant 0 : i32
    %c0_i32_0 = arith.constant 0 : i32
    %c0_i32_1 = arith.constant 0 : i32
    %c0_i32_2 = arith.constant 0 : i32
    return %arg0, %c0_i32, %c0_i32_0, %c0_i32_1 : i32, i32, i32, i32
  }
}

module attributes {stable_mosaic.version = 11 : i64} {
  func.func @conv_bn_relu_kernel(%arg0: i32, %arg1: memref<128x288xbf16, #tpu.memory_space<vmem>>, %arg2: memref<288x64xbf16, #tpu.memory_space<vmem>>, %arg3: memref<1x64xf32, #tpu.memory_space<vmem>>, %arg4: memref<1x64xf32, #tpu.memory_space<vmem>>, %arg5: memref<128x64xbf16, #tpu.memory_space<vmem>>) attributes {dimension_semantics = [#tpu.dimension_semantics<parallel>], iteration_bounds = array<i64: 1>, scalar_prefetch = 0 : i64, scratch_operands = 0 : i64, tpu.core_type = #tpu.core_type<tc>, window_params = [{transform_indices = @transform_0, window_bounds = array<i64: 128, 288>}, {pipeline_mode = #tpu.pipeline_mode<synchronous>, transform_indices = @transform_1, window_bounds = array<i64: 288, 64>}, {pipeline_mode = #tpu.pipeline_mode<synchronous>, transform_indices = @transform_2, window_bounds = array<i64: 1, 64>}, {pipeline_mode = #tpu.pipeline_mode<synchronous>, transform_indices = @transform_3, window_bounds = array<i64: 1, 64>}, {transform_indices = @transform_4, window_bounds = array<i64: 128, 64>}]} {
    %c0 = arith.constant 0 : index
    %c0_0 = arith.constant 0 : index
    %0 = vector.load %arg1[%c0, %c0_0] : memref<128x288xbf16, #tpu.memory_space<vmem>>, vector<128x288xbf16>
    %c0_1 = arith.constant 0 : index
    %c0_2 = arith.constant 0 : index
    %1 = vector.load %arg2[%c0_1, %c0_2] : memref<288x64xbf16, #tpu.memory_space<vmem>>, vector<288x64xbf16>
    %cst = arith.constant dense<0.000000e+00> : vector<128x64xf32>
    %2 = tpu.matmul %0, %1, %cst {dimension_numbers = #tpu.dot_dimension_numbers<[1], [0], [0], [1], [0, 0, 1, 1], [], []>} : vector<128x288xbf16>, vector<288x64xbf16>, vector<128x64xf32> -> vector<128x64xf32>
    %c0_3 = arith.constant 0 : index
    %c0_4 = arith.constant 0 : index
    %3 = vector.load %arg3[%c0_3, %c0_4] : memref<1x64xf32, #tpu.memory_space<vmem>>, vector<1x64xf32>
    %4 = vector.broadcast %3 : vector<1x64xf32> to vector<128x64xf32>
    %5 = arith.mulf %2, %4 : vector<128x64xf32>
    %c0_5 = arith.constant 0 : index
    %c0_6 = arith.constant 0 : index
    %6 = vector.load %arg4[%c0_5, %c0_6] : memref<1x64xf32, #tpu.memory_space<vmem>>, vector<1x64xf32>
    %7 = vector.broadcast %6 : vector<1x64xf32> to vector<128x64xf32>
    %8 = arith.addf %5, %7 : vector<128x64xf32>
    %cst_7 = arith.constant 0.000000e+00 : f32
    %9 = vector.broadcast %cst_7 : f32 to vector<128x64xf32>
    %10 = arith.maximumf %8, %9 : vector<128x64xf32>
    %11 = arith.truncf %10 : vector<128x64xf32> to vector<128x64xbf16>
    %c0_8 = arith.constant 0 : index
    %c0_9 = arith.constant 0 : index
    %12 = vector.load %arg5[%c0_8, %c0_9] : memref<128x64xbf16, #tpu.memory_space<vmem>>, vector<128x64xbf16>
    tpu.vector_store %arg5[%c0_8, %c0_9], %11 {strides = array<i32>} : memref<128x64xbf16, #tpu.memory_space<vmem>>, vector<128x64xbf16>,
    return
  }
  func.func @transform_0(%arg0: i32) -> (i32, i32) {
    %c0_i32 = arith.constant 0 : i32
    %c0_i32_0 = arith.constant 0 : i32
    return %arg0, %c0_i32 : i32, i32
  }
  func.func @transform_1(%arg0: i32) -> (i32, i32) {
    %c0_i32 = arith.constant 0 : i32
    %c0_i32_0 = arith.constant 0 : i32
    %c0_i32_1 = arith.constant 0 : i32
    return %c0_i32, %c0_i32_0 : i32, i32
  }
  func.func @transform_2(%arg0: i32) -> (i32, i32) {
    %c0_i32 = arith.constant 0 : i32
    %c0_i32_0 = arith.constant 0 : i32
    %c0_i32_1 = arith.constant 0 : i32
    return %c0_i32, %c0_i32_0 : i32, i32
  }
  func.func @transform_3(%arg0: i32) -> (i32, i32) {
    %c0_i32 = arith.constant 0 : i32
    %c0_i32_0 = arith.constant 0 : i32
    %c0_i32_1 = arith.constant 0 : i32
    return %c0_i32, %c0_i32_0 : i32, i32
  }
  func.func @transform_4(%arg0: i32) -> (i32, i32) {
    %c0_i32 = arith.constant 0 : i32
    %c0_i32_0 = arith.constant 0 : i32
    return %arg0, %c0_i32 : i32, i32
  }
}

module attributes {stable_mosaic.version = 11 : i64} {
  func.func @conv_bn_relu_kernel(%arg0: i32, %arg1: memref<128x576xbf16, #tpu.memory_space<vmem>>, %arg2: memref<576x64xbf16, #tpu.memory_space<vmem>>, %arg3: memref<1x64xf32, #tpu.memory_space<vmem>>, %arg4: memref<1x64xf32, #tpu.memory_space<vmem>>, %arg5: memref<128x64xbf16, #tpu.memory_space<vmem>>) attributes {dimension_semantics = [#tpu.dimension_semantics<parallel>], iteration_bounds = array<i64: 1>, scalar_prefetch = 0 : i64, scratch_operands = 0 : i64, tpu.core_type = #tpu.core_type<tc>, window_params = [{transform_indices = @transform_0, window_bounds = array<i64: 128, 576>}, {pipeline_mode = #tpu.pipeline_mode<synchronous>, transform_indices = @transform_1, window_bounds = array<i64: 576, 64>}, {pipeline_mode = #tpu.pipeline_mode<synchronous>, transform_indices = @transform_2, window_bounds = array<i64: 1, 64>}, {pipeline_mode = #tpu.pipeline_mode<synchronous>, transform_indices = @transform_3, window_bounds = array<i64: 1, 64>}, {transform_indices = @transform_4, window_bounds = array<i64: 128, 64>}]} {
    %c0 = arith.constant 0 : index
    %c0_0 = arith.constant 0 : index
    %0 = vector.load %arg1[%c0, %c0_0] : memref<128x576xbf16, #tpu.memory_space<vmem>>, vector<128x576xbf16>
    %c0_1 = arith.constant 0 : index
    %c0_2 = arith.constant 0 : index
    %1 = vector.load %arg2[%c0_1, %c0_2] : memref<576x64xbf16, #tpu.memory_space<vmem>>, vector<576x64xbf16>
    %cst = arith.constant dense<0.000000e+00> : vector<128x64xf32>
    %2 = tpu.matmul %0, %1, %cst {dimension_numbers = #tpu.dot_dimension_numbers<[1], [0], [0], [1], [0, 0, 1, 1], [], []>} : vector<128x576xbf16>, vector<576x64xbf16>, vector<128x64xf32> -> vector<128x64xf32>
    %c0_3 = arith.constant 0 : index
    %c0_4 = arith.constant 0 : index
    %3 = vector.load %arg3[%c0_3, %c0_4] : memref<1x64xf32, #tpu.memory_space<vmem>>, vector<1x64xf32>
    %4 = vector.broadcast %3 : vector<1x64xf32> to vector<128x64xf32>
    %5 = arith.mulf %2, %4 : vector<128x64xf32>
    %c0_5 = arith.constant 0 : index
    %c0_6 = arith.constant 0 : index
    %6 = vector.load %arg4[%c0_5, %c0_6] : memref<1x64xf32, #tpu.memory_space<vmem>>, vector<1x64xf32>
    %7 = vector.broadcast %6 : vector<1x64xf32> to vector<128x64xf32>
    %8 = arith.addf %5, %7 : vector<128x64xf32>
    %cst_7 = arith.constant 0.000000e+00 : f32
    %9 = vector.broadcast %cst_7 : f32 to vector<128x64xf32>
    %10 = arith.maximumf %8, %9 : vector<128x64xf32>
    %11 = arith.truncf %10 : vector<128x64xf32> to vector<128x64xbf16>
    %c0_8 = arith.constant 0 : index
    %c0_9 = arith.constant 0 : index
    %12 = vector.load %arg5[%c0_8, %c0_9] : memref<128x64xbf16, #tpu.memory_space<vmem>>, vector<128x64xbf16>
    tpu.vector_store %arg5[%c0_8, %c0_9], %11 {strides = array<i32>} : memref<128x64xbf16, #tpu.memory_space<vmem>>, vector<128x64xbf16>,
    return
  }
  func.func @transform_0(%arg0: i32) -> (i32, i32) {
    %c0_i32 = arith.constant 0 : i32
    %c0_i32_0 = arith.constant 0 : i32
    return %arg0, %c0_i32 : i32, i32
  }
  func.func @transform_1(%arg0: i32) -> (i32, i32) {
    %c0_i32 = arith.constant 0 : i32
    %c0_i32_0 = arith.constant 0 : i32
    %c0_i32_1 = arith.constant 0 : i32
    return %c0_i32, %c0_i32_0 : i32, i32
  }
  func.func @transform_2(%arg0: i32) -> (i32, i32) {
    %c0_i32 = arith.constant 0 : i32
    %c0_i32_0 = arith.constant 0 : i32
    %c0_i32_1 = arith.constant 0 : i32
    return %c0_i32, %c0_i32_0 : i32, i32
  }
  func.func @transform_3(%arg0: i32) -> (i32, i32) {
    %c0_i32 = arith.constant 0 : i32
    %c0_i32_0 = arith.constant 0 : i32
    %c0_i32_1 = arith.constant 0 : i32
    return %c0_i32, %c0_i32_0 : i32, i32
  }
  func.func @transform_4(%arg0: i32) -> (i32, i32) {
    %c0_i32 = arith.constant 0 : i32
    %c0_i32_0 = arith.constant 0 : i32
    return %arg0, %c0_i32 : i32, i32
  }
}

module attributes {stable_mosaic.version = 11 : i64} {
  func.func @maxpool_kernel(%arg0: i32, %arg1: memref<1x8x4x128xbf16, #tpu.memory_space<vmem>>, %arg2: memref<1x4x4x64xbf16, #tpu.memory_space<vmem>>) attributes {dimension_semantics = [#tpu.dimension_semantics<parallel>], iteration_bounds = array<i64: 2>, scalar_prefetch = 0 : i64, scratch_operands = 0 : i64, tpu.core_type = #tpu.core_type<tc>, window_params = [{transform_indices = @transform_0, window_bounds = array<i64: 1, 8, 4, 128>}, {transform_indices = @transform_1, window_bounds = array<i64: 1, 4, 4, 64>}]} {
    %c0 = arith.constant 0 : index
    %c0_0 = arith.constant 0 : index
    %c0_1 = arith.constant 0 : index
    %c0_2 = arith.constant 0 : index
    %0 = vector.load %arg1[%c0, %c0_0, %c0_1, %c0_2] : memref<1x8x4x128xbf16, #tpu.memory_space<vmem>>, vector<1x8x4x128xbf16>
    %1 = vector.shape_cast %0 : vector<1x8x4x128xbf16> to vector<8x4x128xbf16>
    %2 = vector.shape_cast %1 : vector<8x4x128xbf16> to vector<4x2x4x128xbf16>
    %3 = vector.extract_strided_slice %2 {offsets = [0, 0, 0, 0], sizes = [4, 1, 4, 128], strides = [1, 1, 1, 1]} : vector<4x2x4x128xbf16> to vector<4x1x4x128xbf16>
    %4 = vector.shape_cast %3 : vector<4x1x4x128xbf16> to vector<4x4x128xbf16>
    %5 = vector.extract_strided_slice %2 {offsets = [0, 1, 0, 0], sizes = [4, 1, 4, 128], strides = [1, 1, 1, 1]} : vector<4x2x4x128xbf16> to vector<4x1x4x128xbf16>
    %6 = vector.shape_cast %5 : vector<4x1x4x128xbf16> to vector<4x4x128xbf16>
    %7 = arith.maximumf %4, %6 : vector<4x4x128xbf16>
    %8 = vector.extract_strided_slice %7 {offsets = [0, 0, 0], sizes = [4, 4, 64], strides = [1, 1, 1]} : vector<4x4x128xbf16> to vector<4x4x64xbf16>
    %9 = vector.extract_strided_slice %7 {offsets = [0, 0, 64], sizes = [4, 4, 64], strides = [1, 1, 1]} : vector<4x4x128xbf16> to vector<4x4x64xbf16>
    %10 = arith.maximumf %8, %9 : vector<4x4x64xbf16>
    %c0_3 = arith.constant 0 : index
    %c0_4 = arith.constant 0 : index
    %c0_5 = arith.constant 0 : index
    %c0_6 = arith.constant 0 : index
    %11 = vector.load %arg2[%c0_3, %c0_4, %c0_5, %c0_6] : memref<1x4x4x64xbf16, #tpu.memory_space<vmem>>, vector<1x4x4x64xbf16>
    %12 = vector.shape_cast %11 : vector<1x4x4x64xbf16> to vector<4x4x64xbf16>
    %13 = vector.shape_cast %10 : vector<4x4x64xbf16> to vector<1x4x4x64xbf16>
    tpu.vector_store %arg2[%c0_3, %c0_4, %c0_5, %c0_6], %13 {strides = array<i32>} : memref<1x4x4x64xbf16, #tpu.memory_space<vmem>>, vector<1x4x4x64xbf16>,
    return
  }
  func.func @transform_0(%arg0: i32) -> (i32, i32, i32, i32) {
    %c0_i32 = arith.constant 0 : i32
    %c0_i32_0 = arith.constant 0 : i32
    %c0_i32_1 = arith.constant 0 : i32
    %c0_i32_2 = arith.constant 0 : i32
    return %arg0, %c0_i32, %c0_i32_0, %c0_i32_1 : i32, i32, i32, i32
  }
  func.func @transform_1(%arg0: i32) -> (i32, i32, i32, i32) {
    %c0_i32 = arith.constant 0 : i32
    %c0_i32_0 = arith.constant 0 : i32
    %c0_i32_1 = arith.constant 0 : i32
    %c0_i32_2 = arith.constant 0 : i32
    return %arg0, %c0_i32, %c0_i32_0, %c0_i32_1 : i32, i32, i32, i32
  }
}

module attributes {stable_mosaic.version = 11 : i64} {
  func.func @conv_bn_relu_kernel(%arg0: i32, %arg1: memref<32x576xbf16, #tpu.memory_space<vmem>>, %arg2: memref<576x128xbf16, #tpu.memory_space<vmem>>, %arg3: memref<1x128xf32, #tpu.memory_space<vmem>>, %arg4: memref<1x128xf32, #tpu.memory_space<vmem>>, %arg5: memref<32x128xbf16, #tpu.memory_space<vmem>>) attributes {dimension_semantics = [#tpu.dimension_semantics<parallel>], iteration_bounds = array<i64: 1>, scalar_prefetch = 0 : i64, scratch_operands = 0 : i64, tpu.core_type = #tpu.core_type<tc>, window_params = [{transform_indices = @transform_0, window_bounds = array<i64: 32, 576>}, {pipeline_mode = #tpu.pipeline_mode<synchronous>, transform_indices = @transform_1, window_bounds = array<i64: 576, 128>}, {pipeline_mode = #tpu.pipeline_mode<synchronous>, transform_indices = @transform_2, window_bounds = array<i64: 1, 128>}, {pipeline_mode = #tpu.pipeline_mode<synchronous>, transform_indices = @transform_3, window_bounds = array<i64: 1, 128>}, {transform_indices = @transform_4, window_bounds = array<i64: 32, 128>}]} {
    %c0 = arith.constant 0 : index
    %c0_0 = arith.constant 0 : index
    %0 = vector.load %arg1[%c0, %c0_0] : memref<32x576xbf16, #tpu.memory_space<vmem>>, vector<32x576xbf16>
    %c0_1 = arith.constant 0 : index
    %c0_2 = arith.constant 0 : index
    %1 = vector.load %arg2[%c0_1, %c0_2] : memref<576x128xbf16, #tpu.memory_space<vmem>>, vector<576x128xbf16>
    %cst = arith.constant dense<0.000000e+00> : vector<32x128xf32>
    %2 = tpu.matmul %0, %1, %cst {dimension_numbers = #tpu.dot_dimension_numbers<[1], [0], [0], [1], [0, 0, 1, 1], [], []>} : vector<32x576xbf16>, vector<576x128xbf16>, vector<32x128xf32> -> vector<32x128xf32>
    %c0_3 = arith.constant 0 : index
    %c0_4 = arith.constant 0 : index
    %3 = vector.load %arg3[%c0_3, %c0_4] : memref<1x128xf32, #tpu.memory_space<vmem>>, vector<1x128xf32>
    %4 = vector.broadcast %3 : vector<1x128xf32> to vector<32x128xf32>
    %5 = arith.mulf %2, %4 : vector<32x128xf32>
    %c0_5 = arith.constant 0 : index
    %c0_6 = arith.constant 0 : index
    %6 = vector.load %arg4[%c0_5, %c0_6] : memref<1x128xf32, #tpu.memory_space<vmem>>, vector<1x128xf32>
    %7 = vector.broadcast %6 : vector<1x128xf32> to vector<32x128xf32>
    %8 = arith.addf %5, %7 : vector<32x128xf32>
    %cst_7 = arith.constant 0.000000e+00 : f32
    %9 = vector.broadcast %cst_7 : f32 to vector<32x128xf32>
    %10 = arith.maximumf %8, %9 : vector<32x128xf32>
    %11 = arith.truncf %10 : vector<32x128xf32> to vector<32x128xbf16>
    %c0_8 = arith.constant 0 : index
    %c0_9 = arith.constant 0 : index
    %12 = vector.load %arg5[%c0_8, %c0_9] : memref<32x128xbf16, #tpu.memory_space<vmem>>, vector<32x128xbf16>
    tpu.vector_store %arg5[%c0_8, %c0_9], %11 {strides = array<i32>} : memref<32x128xbf16, #tpu.memory_space<vmem>>, vector<32x128xbf16>,
    return
  }
  func.func @transform_0(%arg0: i32) -> (i32, i32) {
    %c0_i32 = arith.constant 0 : i32
    %c0_i32_0 = arith.constant 0 : i32
    return %arg0, %c0_i32 : i32, i32
  }
  func.func @transform_1(%arg0: i32) -> (i32, i32) {
    %c0_i32 = arith.constant 0 : i32
    %c0_i32_0 = arith.constant 0 : i32
    %c0_i32_1 = arith.constant 0 : i32
    return %c0_i32, %c0_i32_0 : i32, i32
  }
  func.func @transform_2(%arg0: i32) -> (i32, i32) {
    %c0_i32 = arith.constant 0 : i32
    %c0_i32_0 = arith.constant 0 : i32
    %c0_i32_1 = arith.constant 0 : i32
    return %c0_i32, %c0_i32_0 : i32, i32
  }
  func.func @transform_3(%arg0: i32) -> (i32, i32) {
    %c0_i32 = arith.constant 0 : i32
    %c0_i32_0 = arith.constant 0 : i32
    %c0_i32_1 = arith.constant 0 : i32
    return %c0_i32, %c0_i32_0 : i32, i32
  }
  func.func @transform_4(%arg0: i32) -> (i32, i32) {
    %c0_i32 = arith.constant 0 : i32
    %c0_i32_0 = arith.constant 0 : i32
    return %arg0, %c0_i32 : i32, i32
  }
}

module attributes {stable_mosaic.version = 11 : i64} {
  func.func @gap_classifier_kernel(%arg0: i32, %arg1: memref<2x4x128xbf16, #tpu.memory_space<vmem>>, %arg2: memref<128x64xf32, #tpu.memory_space<vmem>>, %arg3: memref<1x64xf32, #tpu.memory_space<vmem>>, %arg4: memref<64x10xf32, #tpu.memory_space<vmem>>, %arg5: memref<1x10xf32, #tpu.memory_space<vmem>>, %arg6: memref<2x10xf32, #tpu.memory_space<vmem>>) attributes {dimension_semantics = [#tpu.dimension_semantics<parallel>], iteration_bounds = array<i64: 1>, scalar_prefetch = 0 : i64, scratch_operands = 0 : i64, tpu.core_type = #tpu.core_type<tc>, window_params = [{transform_indices = @transform_0, window_bounds = array<i64: 2, 4, 128>}, {pipeline_mode = #tpu.pipeline_mode<synchronous>, transform_indices = @transform_1, window_bounds = array<i64: 128, 64>}, {pipeline_mode = #tpu.pipeline_mode<synchronous>, transform_indices = @transform_2, window_bounds = array<i64: 1, 64>}, {pipeline_mode = #tpu.pipeline_mode<synchronous>, transform_indices = @transform_3, window_bounds = array<i64: 64, 10>}, {pipeline_mode = #tpu.pipeline_mode<synchronous>, transform_indices = @transform_4, window_bounds = array<i64: 1, 10>}, {transform_indices = @transform_5, window_bounds = array<i64: 2, 10>}]} {
    %c0 = arith.constant 0 : index
    %c0_0 = arith.constant 0 : index
    %c0_1 = arith.constant 0 : index
    %0 = vector.load %arg1[%c0, %c0_0, %c0_1] : memref<2x4x128xbf16, #tpu.memory_space<vmem>>, vector<2x4x128xbf16>
    %1 = arith.extf %0 : vector<2x4x128xbf16> to vector<2x4x128xf32>
    %cst = arith.constant dense<0.000000e+00> : vector<2x128xf32>
    %2 = vector.multi_reduction <add>, %1, %cst [1] : vector<2x4x128xf32> to vector<2x128xf32>
    %cst_2 = arith.constant 4.000000e+00 : f32
    %3 = vector.broadcast %cst_2 : f32 to vector<2x128xf32>
    %4 = arith.divf %2, %3 : vector<2x128xf32>
    %c0_3 = arith.constant 0 : index
    %c0_4 = arith.constant 0 : index
    %5 = vector.load %arg2[%c0_3, %c0_4] : memref<128x64xf32, #tpu.memory_space<vmem>>, vector<128x64xf32>
    %cst_5 = arith.constant dense<0.000000e+00> : vector<2x64xf32>
    %6 = tpu.matmul %4, %5, %cst_5 {dimension_numbers = #tpu.dot_dimension_numbers<[1], [0], [0], [1], [0, 0, 1, 1], [], []>} : vector<2x128xf32>, vector<128x64xf32>, vector<2x64xf32> -> vector<2x64xf32>
    %c0_6 = arith.constant 0 : index
    %c0_7 = arith.constant 0 : index
    %7 = vector.load %arg3[%c0_6, %c0_7] : memref<1x64xf32, #tpu.memory_space<vmem>>, vector<1x64xf32>
    %8 = vector.broadcast %7 : vector<1x64xf32> to vector<2x64xf32>
    %9 = arith.addf %6, %8 : vector<2x64xf32>
    %cst_8 = arith.constant 0.000000e+00 : f32
    %10 = vector.broadcast %cst_8 : f32 to vector<2x64xf32>
    %11 = arith.maximumf %9, %10 : vector<2x64xf32>
    %c0_9 = arith.constant 0 : index
    %c0_10 = arith.constant 0 : index
    %12 = vector.load %arg4[%c0_9, %c0_10] : memref<64x10xf32, #tpu.memory_space<vmem>>, vector<64x10xf32>
    %cst_11 = arith.constant dense<0.000000e+00> : vector<2x10xf32>
    %13 = tpu.matmul %11, %12, %cst_11 {dimension_numbers = #tpu.dot_dimension_numbers<[1], [0], [0], [1], [0, 0, 1, 1], [], []>} : vector<2x64xf32>, vector<64x10xf32>, vector<2x10xf32> -> vector<2x10xf32>
    %c0_12 = arith.constant 0 : index
    %c0_13 = arith.constant 0 : index
    %14 = vector.load %arg5[%c0_12, %c0_13] : memref<1x10xf32, #tpu.memory_space<vmem>>, vector<1x10xf32>
    %15 = vector.broadcast %14 : vector<1x10xf32> to vector<2x10xf32>
    %16 = arith.addf %13, %15 : vector<2x10xf32>
    %c0_14 = arith.constant 0 : index
    %c0_15 = arith.constant 0 : index
    %17 = vector.load %arg6[%c0_14, %c0_15] : memref<2x10xf32, #tpu.memory_space<vmem>>, vector<2x10xf32>
    tpu.vector_store %arg6[%c0_14, %c0_15], %16 {strides = array<i32>} : memref<2x10xf32, #tpu.memory_space<vmem>>, vector<2x10xf32>,
    return
  }
  func.func @transform_0(%arg0: i32) -> (i32, i32, i32) {
    %c0_i32 = arith.constant 0 : i32
    %c0_i32_0 = arith.constant 0 : i32
    %c0_i32_1 = arith.constant 0 : i32
    return %arg0, %c0_i32, %c0_i32_0 : i32, i32, i32
  }
  func.func @transform_1(%arg0: i32) -> (i32, i32) {
    %c0_i32 = arith.constant 0 : i32
    %c0_i32_0 = arith.constant 0 : i32
    %c0_i32_1 = arith.constant 0 : i32
    return %c0_i32, %c0_i32_0 : i32, i32
  }
  func.func @transform_2(%arg0: i32) -> (i32, i32) {
    %c0_i32 = arith.constant 0 : i32
    %c0_i32_0 = arith.constant 0 : i32
    %c0_i32_1 = arith.constant 0 : i32
    return %c0_i32, %c0_i32_0 : i32, i32
  }
  func.func @transform_3(%arg0: i32) -> (i32, i32) {
    %c0_i32 = arith.constant 0 : i32
    %c0_i32_0 = arith.constant 0 : i32
    %c0_i32_1 = arith.constant 0 : i32
    return %c0_i32, %c0_i32_0 : i32, i32
  }
  func.func @transform_4(%arg0: i32) -> (i32, i32) {
    %c0_i32 = arith.constant 0 : i32
    %c0_i32_0 = arith.constant 0 : i32
    %c0_i32_1 = arith.constant 0 : i32
    return %c0_i32, %c0_i32_0 : i32, i32
  }
  func.func @transform_5(%arg0: i32) -> (i32, i32) {
    %c0_i32 = arith.constant 0 : i32
    %c0_i32_0 = arith.constant 0 : i32
    return %arg0, %c0_i32 : i32, i32
  }
}

module attributes {stable_mosaic.version = 11 : i64} {
  func.func @conv_bn_relu_kernel(%arg0: i32, %arg1: memref<32x1152xbf16, #tpu.memory_space<vmem>>, %arg2: memref<1152x128xbf16, #tpu.memory_space<vmem>>, %arg3: memref<1x128xf32, #tpu.memory_space<vmem>>, %arg4: memref<1x128xf32, #tpu.memory_space<vmem>>, %arg5: memref<32x128xbf16, #tpu.memory_space<vmem>>) attributes {dimension_semantics = [#tpu.dimension_semantics<parallel>], iteration_bounds = array<i64: 1>, scalar_prefetch = 0 : i64, scratch_operands = 0 : i64, tpu.core_type = #tpu.core_type<tc>, window_params = [{transform_indices = @transform_0, window_bounds = array<i64: 32, 1152>}, {pipeline_mode = #tpu.pipeline_mode<synchronous>, transform_indices = @transform_1, window_bounds = array<i64: 1152, 128>}, {pipeline_mode = #tpu.pipeline_mode<synchronous>, transform_indices = @transform_2, window_bounds = array<i64: 1, 128>}, {pipeline_mode = #tpu.pipeline_mode<synchronous>, transform_indices = @transform_3, window_bounds = array<i64: 1, 128>}, {transform_indices = @transform_4, window_bounds = array<i64: 32, 128>}]} {
    %c0 = arith.constant 0 : index
    %c0_0 = arith.constant 0 : index
    %0 = vector.load %arg1[%c0, %c0_0] : memref<32x1152xbf16, #tpu.memory_space<vmem>>, vector<32x1152xbf16>
    %c0_1 = arith.constant 0 : index
    %c0_2 = arith.constant 0 : index
    %1 = vector.load %arg2[%c0_1, %c0_2] : memref<1152x128xbf16, #tpu.memory_space<vmem>>, vector<1152x128xbf16>
    %cst = arith.constant dense<0.000000e+00> : vector<32x128xf32>
    %2 = tpu.matmul %0, %1, %cst {dimension_numbers = #tpu.dot_dimension_numbers<[1], [0], [0], [1], [0, 0, 1, 1], [], []>} : vector<32x1152xbf16>, vector<1152x128xbf16>, vector<32x128xf32> -> vector<32x128xf32>
    %c0_3 = arith.constant 0 : index
    %c0_4 = arith.constant 0 : index
    %3 = vector.load %arg3[%c0_3, %c0_4] : memref<1x128xf32, #tpu.memory_space<vmem>>, vector<1x128xf32>
    %4 = vector.broadcast %3 : vector<1x128xf32> to vector<32x128xf32>
    %5 = arith.mulf %2, %4 : vector<32x128xf32>
    %c0_5 = arith.constant 0 : index
    %c0_6 = arith.constant 0 : index
    %6 = vector.load %arg4[%c0_5, %c0_6] : memref<1x128xf32, #tpu.memory_space<vmem>>, vector<1x128xf32>
    %7 = vector.broadcast %6 : vector<1x128xf32> to vector<32x128xf32>
    %8 = arith.addf %5, %7 : vector<32x128xf32>
    %cst_7 = arith.constant 0.000000e+00 : f32
    %9 = vector.broadcast %cst_7 : f32 to vector<32x128xf32>
    %10 = arith.maximumf %8, %9 : vector<32x128xf32>
    %11 = arith.truncf %10 : vector<32x128xf32> to vector<32x128xbf16>
    %c0_8 = arith.constant 0 : index
    %c0_9 = arith.constant 0 : index
    %12 = vector.load %arg5[%c0_8, %c0_9] : memref<32x128xbf16, #tpu.memory_space<vmem>>, vector<32x128xbf16>
    tpu.vector_store %arg5[%c0_8, %c0_9], %11 {strides = array<i32>} : memref<32x128xbf16, #tpu.memory_space<vmem>>, vector<32x128xbf16>,
    return
  }
  func.func @transform_0(%arg0: i32) -> (i32, i32) {
    %c0_i32 = arith.constant 0 : i32
    %c0_i32_0 = arith.constant 0 : i32
    return %arg0, %c0_i32 : i32, i32
  }
  func.func @transform_1(%arg0: i32) -> (i32, i32) {
    %c0_i32 = arith.constant 0 : i32
    %c0_i32_0 = arith.constant 0 : i32
    %c0_i32_1 = arith.constant 0 : i32
    return %c0_i32, %c0_i32_0 : i32, i32
  }
  func.func @transform_2(%arg0: i32) -> (i32, i32) {
    %c0_i32 = arith.constant 0 : i32
    %c0_i32_0 = arith.constant 0 : i32
    %c0_i32_1 = arith.constant 0 : i32
    return %c0_i32, %c0_i32_0 : i32, i32
  }
  func.func @transform_3(%arg0: i32) -> (i32, i32) {
    %c0_i32 = arith.constant 0 : i32
    %c0_i32_0 = arith.constant 0 : i32
    %c0_i32_1 = arith.constant 0 : i32
    return %c0_i32, %c0_i32_0 : i32, i32
  }
  func.func @transform_4(%arg0: i32) -> (i32, i32) {
    %c0_i32 = arith.constant 0 : i32
    %c0_i32_0 = arith.constant 0 : i32
    return %arg0, %c0_i32 : i32, i32
  }
}

module attributes {stable_mosaic.version = 11 : i64} {
  func.func @maxpool_kernel(%arg0: i32, %arg1: memref<1x4x2x256xbf16, #tpu.memory_space<vmem>>, %arg2: memref<1x2x2x128xbf16, #tpu.memory_space<vmem>>) attributes {dimension_semantics = [#tpu.dimension_semantics<parallel>], iteration_bounds = array<i64: 2>, scalar_prefetch = 0 : i64, scratch_operands = 0 : i64, tpu.core_type = #tpu.core_type<tc>, window_params = [{transform_indices = @transform_0, window_bounds = array<i64: 1, 4, 2, 256>}, {transform_indices = @transform_1, window_bounds = array<i64: 1, 2, 2, 128>}]} {
    %c0 = arith.constant 0 : index
    %c0_0 = arith.constant 0 : index
    %c0_1 = arith.constant 0 : index
    %c0_2 = arith.constant 0 : index
    %0 = vector.load %arg1[%c0, %c0_0, %c0_1, %c0_2] : memref<1x4x2x256xbf16, #tpu.memory_space<vmem>>, vector<1x4x2x256xbf16>
    %1 = vector.shape_cast %0 : vector<1x4x2x256xbf16> to vector<4x2x256xbf16>
    %2 = vector.shape_cast %1 : vector<4x2x256xbf16> to vector<2x2x2x256xbf16>
    %3 = vector.extract_strided_slice %2 {offsets = [0, 0, 0, 0], sizes = [2, 1, 2, 256], strides = [1, 1, 1, 1]} : vector<2x2x2x256xbf16> to vector<2x1x2x256xbf16>
    %4 = vector.shape_cast %3 : vector<2x1x2x256xbf16> to vector<2x2x256xbf16>
    %5 = vector.extract_strided_slice %2 {offsets = [0, 1, 0, 0], sizes = [2, 1, 2, 256], strides = [1, 1, 1, 1]} : vector<2x2x2x256xbf16> to vector<2x1x2x256xbf16>
    %6 = vector.shape_cast %5 : vector<2x1x2x256xbf16> to vector<2x2x256xbf16>
    %7 = arith.maximumf %4, %6 : vector<2x2x256xbf16>
    %8 = vector.extract_strided_slice %7 {offsets = [0, 0, 0], sizes = [2, 2, 128], strides = [1, 1, 1]} : vector<2x2x256xbf16> to vector<2x2x128xbf16>
    %9 = vector.extract_strided_slice %7 {offsets = [0, 0, 128], sizes = [2, 2, 128], strides = [1, 1, 1]} : vector<2x2x256xbf16> to vector<2x2x128xbf16>
    %10 = arith.maximumf %8, %9 : vector<2x2x128xbf16>
    %c0_3 = arith.constant 0 : index
    %c0_4 = arith.constant 0 : index
    %c0_5 = arith.constant 0 : index
    %c0_6 = arith.constant 0 : index
    %11 = vector.load %arg2[%c0_3, %c0_4, %c0_5, %c0_6] : memref<1x2x2x128xbf16, #tpu.memory_space<vmem>>, vector<1x2x2x128xbf16>
    %12 = vector.shape_cast %11 : vector<1x2x2x128xbf16> to vector<2x2x128xbf16>
    %13 = vector.shape_cast %10 : vector<2x2x128xbf16> to vector<1x2x2x128xbf16>
    tpu.vector_store %arg2[%c0_3, %c0_4, %c0_5, %c0_6], %13 {strides = array<i32>} : memref<1x2x2x128xbf16, #tpu.memory_space<vmem>>, vector<1x2x2x128xbf16>,
    return
  }
  func.func @transform_0(%arg0: i32) -> (i32, i32, i32, i32) {
    %c0_i32 = arith.constant 0 : i32
    %c0_i32_0 = arith.constant 0 : i32
    %c0_i32_1 = arith.constant 0 : i32
    %c0_i32_2 = arith.constant 0 : i32
    return %arg0, %c0_i32, %c0_i32_0, %c0_i32_1 : i32, i32, i32, i32
  }
  func.func @transform_1(%arg0: i32) -> (i32, i32, i32, i32) {
    %c0_i32 = arith.constant 0 : i32
    %c0_i32_0 = arith.constant 0 : i32
    %c0_i32_1 = arith.constant 0 : i32
    %c0_i32_2 = arith.constant 0 : i32
    return %arg0, %c0_i32, %c0_i32_0, %c0_i32_1 : i32, i32, i32, i32
  }
}

</mosaic_0001>

<llo_original>
// kernel: net_forward.10
$region0: #{net_forward.10}
  #allocation0 [shape = 'u32[]', space=smem, size = 0x4, offset = 0x4, fixed_abs, tag = 'smem constant byte address 0x4 - core index']
  #allocation1 [shape = 'u32[72,128]{1,0:T(1,128)}', space=vmem, size = 0x9000, scoped, tag = 'internal scratch']
  %s0 = inlined_call_operand.vmem [shape: bf16[512,27], index: 0, kind: input, shape index: {}]
  %s1 = inlined_call_operand.vmem [shape: bf16[27,32], index: 1, kind: input, shape index: {}]
  %s2 = inlined_call_operand.vmem [shape: f32[1,32], index: 2, kind: input, shape index: {}]
  %s3 = inlined_call_operand.vmem [shape: f32[1,32], index: 3, kind: input, shape index: {}]
  %s4 = inlined_call_operand.vmem [shape: bf16[512,32], index: 4, kind: output, shape index: {}]
  %s5 = sld [smem:[#allocation0]]
  $region26: #{net_forward.10} parent=0
    _
  %s7 = ssub.s32 1, %s5
  %s8 = scalar_select 0, %s7, %s5
  // Predicated region
  $region2: #{net_forward.10} parent=0 // pred_check
    _
  $region3: #{net_forward.10} parent=0 // pred_check_branch
    %10 = sbr.rel (0) target = $region5
  $region4: #{net_forward.10} parent=0 // pred_region
    _
  $region5: #{net_forward.10} parent=0 // pred_fallthru
    _
  // Predicated region
  $region6: #{net_forward.10} parent=0 // pred_check
    _
  $region7: #{net_forward.10} parent=0 // pred_check_branch
    %12 = sbr.rel (0) target = $region9
  $region8: #{net_forward.10} parent=0 // pred_region
    _
  $region9: #{net_forward.10} parent=0 // pred_fallthru
    _
  // Predicated region
  $region10: #{net_forward.10} parent=0 // pred_check
    _
  $region11: #{net_forward.10} parent=0 // pred_check_branch
    %14 = sbr.rel (0) target = $region13
  $region12: #{net_forward.10} parent=0 // pred_region
    _
  $region13: #{net_forward.10} parent=0 // pred_fallthru
    _
  // Predicated region
  $region14: #{net_forward.10} parent=0 // pred_check
    _
  $region15: #{net_forward.10} parent=0 // pred_check_branch
    %16 = sbr.rel (0) target = $region17
  $region16: #{net_forward.10} parent=0 // pred_region
    _
  $region17: #{net_forward.10} parent=0 // pred_fallthru
    _
  %v18 = vld [vmem:[%s0] sm:$0xf]
  %v19 = vld [vmem:[%s0 + $0x4] sm:$0xf]
  %v20 = vld [vmem:[%s0 + $0x8] sm:$0xf]
  %v21 = vld [vmem:[%s0 + $0xc] sm:$0xf]
  %v22 = vld [vmem:[%s0 + $0x10] sm:$0xf]
  %v23 = vld [vmem:[%s0 + $0x14] sm:$0xf]
  %v24 = vld [vmem:[%s0 + $0x18] sm:$0xf]
  %v25 = vld [vmem:[%s0 + $0x1c] sm:$0xf]
  %v26 = vld [vmem:[%s0 + $0x20] sm:$0xf]
  %v27 = vld [vmem:[%s0 + $0x24] sm:$0xf]
  %v28 = vld [vmem:[%s0 + $0x28] sm:$0xf]
  %v29 = vld [vmem:[%s0 + $0x2c] sm:$0xf]
  %v30 = vld [vmem:[%s0 + $0x30] sm:$0xf]
  %v31 = vld [vmem:[%s0 + $0x34] sm:$0xf]
  %v32 = vld [vmem:[%s0 + $0x38] sm:$0xf]
  %v33 = vld [vmem:[%s0 + $0x3c] sm:$0xf]
  %v34 = vld [vmem:[%s0 + $0x40] sm:$0xf]
  %v35 = vld [vmem:[%s0 + $0x44] sm:$0xf]
  %v36 = vld [vmem:[%s0 + $0x48] sm:$0xf]
  %v37 = vld [vmem:[%s0 + $0x4c] sm:$0xf]
  %v38 = vld [vmem:[%s0 + $0x50] sm:$0xf]
  %v39 = vld [vmem:[%s0 + $0x54] sm:$0xf]
  %v40 = vld [vmem:[%s0 + $0x58] sm:$0xf]
  %v41 = vld [vmem:[%s0 + $0x5c] sm:$0xf]
  %v42 = vld [vmem:[%s0 + $0x60] sm:$0xf]
  %v43 = vld [vmem:[%s0 + $0x64] sm:$0xf]
  %v44 = vld [vmem:[%s0 + $0x68] sm:$0xf]
  %v45 = vld [vmem:[%s0 + $0x6c] sm:$0xf]
  %v46 = vld [vmem:[%s0 + $0x70] sm:$0xf]
  %v47 = vld [vmem:[%s0 + $0x74] sm:$0xf]
  %v48 = vld [vmem:[%s0 + $0x78] sm:$0xf]
  %v49 = vld [vmem:[%s0 + $0x7c] sm:$0xf]
  %v50 = vld [vmem:[%s0 + $0x80] sm:$0xf]
  %v51 = vld [vmem:[%s0 + $0x84] sm:$0xf]
  %v52 = vld [vmem:[%s0 + $0x88] sm:$0xf]
  %v53 = vld [vmem:[%s0 + $0x8c] sm:$0xf]
  %v54 = vld [vmem:[%s0 + $0x90] sm:$0xf]
  %v55 = vld [vmem:[%s0 + $0x94] sm:$0xf]
  %v56 = vld [vmem:[%s0 + $0x98] sm:$0xf]
  %v57 = vld [vmem:[%s0 + $0x9c] sm:$0xf]
  %v58 = vld [vmem:[%s0 + $0xa0] sm:$0xf]
  %v59 = vld [vmem:[%s0 + $0xa4] sm:$0xf]
  %v60 = vld [vmem:[%s0 + $0xa8] sm:$0xf]
  %v61 = vld [vmem:[%s0 + $0xac] sm:$0xf]
  %v62 = vld [vmem:[%s0 + $0xb0] sm:$0xf]
  %v63 = vld [vmem:[%s0 + $0xb4] sm:$0xf]
  %v64 = vld [vmem:[%s0 + $0xb8] sm:$0xf]
  %v65 = vld [vmem:[%s0 + $0xbc] sm:$0xf]
  %v66 = vld [vmem:[%s0 + $0xc0] sm:$0xf]
  %v67 = vld [vmem:[%s0 + $0xc4] sm:$0xf]
  %v68 = vld [vmem:[%s0 + $0xc8] sm:$0xf]
  %v69 = vld [vmem:[%s0 + $0xcc] sm:$0xf]
  %v70 = vld [vmem:[%s0 + $0xd0] sm:$0xf]
  %v71 = vld [vmem:[%s0 + $0xd4] sm:$0xf]
  %v72 = vld [vmem:[%s0 + $0xd8] sm:$0xf]
  %v73 = vld [vmem:[%s0 + $0xdc] sm:$0xf]
  %v74 = vld [vmem:[%s0 + $0xe0] sm:$0xf]
  %v75 = vld [vmem:[%s0 + $0xe4] sm:$0xf]
  %v76 = vld [vmem:[%s0 + $0xe8] sm:$0xf]
  %v77 = vld [vmem:[%s0 + $0xec] sm:$0xf]
  %v78 = vld [vmem:[%s0 + $0xf0] sm:$0xf]
  %v79 = vld [vmem:[%s0 + $0xf4] sm:$0xf]
  %v80 = vld [vmem:[%s0 + $0xf8] sm:$0xf]
  %v81 = vld [vmem:[%s0 + $0xfc] sm:$0xf]
  %v82 = vld [vmem:[%s1] sm:$0xf]
  %v83 = vld [vmem:[%s1 + $0x4] sm:$0xf]
  %v84 = vld [vmem:[%s1 + $0x8] sm:$0xf]
  %v85 = vld [vmem:[%s1 + $0xc] sm:$0x3]
  %v150 = vunpack.c.l.b16 %v18
  %v151 = vunpack.c.l.b16 %v19
  %v152 = vunpack.c.l.b16 %v20
  %v153 = vunpack.c.l.b16 %v21
  %v154 = vunpack.c.l.b16 %v22
  %v155 = vunpack.c.l.b16 %v23
  %v156 = vunpack.c.l.b16 %v24
  %v157 = vunpack.c.l.b16 %v25
  %v158 = vunpack.c.l.b16 %v26
  %v159 = vunpack.c.l.b16 %v27
  %v160 = vunpack.c.l.b16 %v28
  %v161 = vunpack.c.l.b16 %v29
  %v162 = vunpack.c.l.b16 %v30
  %v163 = vunpack.c.l.b16 %v31
  %v164 = vunpack.c.l.b16 %v32
  %v165 = vunpack.c.l.b16 %v33
  %v166 = vunpack.c.l.b16 %v34
  %v167 = vunpack.c.l.b16 %v35
  %v168 = vunpack.c.l.b16 %v36
  %v169 = vunpack.c.l.b16 %v37
  %v170 = vunpack.c.l.b16 %v38
  %v171 = vunpack.c.l.b16 %v39
  %v172 = vunpack.c.l.b16 %v40
  %v173 = vunpack.c.l.b16 %v41
  %v174 = vunpack.c.l.b16 %v42
  %v175 = vunpack.c.l.b16 %v43
  %v176 = vunpack.c.l.b16 %v44
  %v177 = vunpack.c.l.b16 %v45
  %v178 = vunpack.c.l.b16 %v46
  %v179 = vunpack.c.l.b16 %v47
  %v180 = vunpack.c.l.b16 %v48
  %v181 = vunpack.c.l.b16 %v49
  %v182 = vunpack.c.l.b16 %v50
  %v183 = vunpack.c.l.b16 %v51
  %v184 = vunpack.c.l.b16 %v52
  %v185 = vunpack.c.l.b16 %v53
  %v186 = vunpack.c.l.b16 %v54
  %v187 = vunpack.c.l.b16 %v55
  %v188 = vunpack.c.l.b16 %v56
  %v189 = vunpack.c.l.b16 %v57
  %v190 = vunpack.c.l.b16 %v58
  %v191 = vunpack.c.l.b16 %v59
  %v192 = vunpack.c.l.b16 %v60
  %v193 = vunpack.c.l.b16 %v61
  %v194 = vunpack.c.l.b16 %v62
  %v195 = vunpack.c.l.b16 %v63
  %v196 = vunpack.c.l.b16 %v64
  %v197 = vunpack.c.l.b16 %v65
  %v198 = vunpack.c.l.b16 %v66
  %v199 = vunpack.c.l.b16 %v67
  %v200 = vunpack.c.l.b16 %v68
  %v201 = vunpack.c.l.b16 %v69
  %v202 = vunpack.c.l.b16 %v70
  %v203 = vunpack.c.l.b16 %v71
  %v204 = vunpack.c.l.b16 %v72
  %v205 = vunpack.c.l.b16 %v73
  %v206 = vunpack.c.l.b16 %v74
  %v207 = vunpack.c.l.b16 %v75
  %v208 = vunpack.c.l.b16 %v76
  %v209 = vunpack.c.l.b16 %v77
  %v210 = vunpack.c.l.b16 %v78
  %v211 = vunpack.c.l.b16 %v79
  %v212 = vunpack.c.l.b16 %v80
  %v213 = vunpack.c.l.b16 %v81
  %v214 = vpack.c.b16 %v151, %v150
  %v215 = vpack.c.b16 %v153, %v152
  %v216 = vpack.c.b16 %v155, %v154
  %v217 = vpack.c.b16 %v157, %v156
  %v218 = vpack.c.b16 %v159, %v158
  %v219 = vpack.c.b16 %v161, %v160
  %v220 = vpack.c.b16 %v163, %v162
  %v221 = vpack.c.b16 %v165, %v164
  %v222 = vpack.c.b16 %v167, %v166
  %v223 = vpack.c.b16 %v169, %v168
  %v224 = vpack.c.b16 %v171, %v170
  %v225 = vpack.c.b16 %v173, %v172
  %v226 = vpack.c.b16 %v175, %v174
  %v227 = vpack.c.b16 %v177, %v176
  %v228 = vpack.c.b16 %v179, %v178
  %v229 = vpack.c.b16 %v181, %v180
  %v230 = vpack.c.b16 %v183, %v182
  %v231 = vpack.c.b16 %v185, %v184
  %v232 = vpack.c.b16 %v187, %v186
  %v233 = vpack.c.b16 %v189, %v188
  %v234 = vpack.c.b16 %v191, %v190
  %v235 = vpack.c.b16 %v193, %v192
  %v236 = vpack.c.b16 %v195, %v194
  %v237 = vpack.c.b16 %v197, %v196
  %v238 = vpack.c.b16 %v199, %v198
  %v239 = vpack.c.b16 %v201, %v200
  %v240 = vpack.c.b16 %v203, %v202
  %v241 = vpack.c.b16 %v205, %v204
  %v242 = vpack.c.b16 %v207, %v206
  %v243 = vpack.c.b16 %v209, %v208
  %v244 = vpack.c.b16 %v211, %v210
  %v245 = vpack.c.b16 %v213, %v212
  %v250 = vunpack.c.l.b16 %v82
  %v251 = vunpack.c.l.b16 %v83
  %v252 = vunpack.c.l.b16 %v84
  %v253 = vunpack.c.l.b16 %v85
  %v254 = vpack.c.b16 %v251, %v250
  %v255 = vpack.c.b16 %v253, %v252
  %vm257 = vcmask 220160
  %v259 = vsel %vm257, %v214, 0
  %v262 = vsel %vm257, %v215, 0
  %v265 = vsel %vm257, %v216, 0
  %v268 = vsel %vm257, %v217, 0
  %v271 = vsel %vm257, %v218, 0
  %v274 = vsel %vm257, %v219, 0
  %v277 = vsel %vm257, %v220, 0
  %v280 = vsel %vm257, %v221, 0
  %v283 = vsel %vm257, %v222, 0
  %v286 = vsel %vm257, %v223, 0
  %v289 = vsel %vm257, %v224, 0
  %v292 = vsel %vm257, %v225, 0
  %v295 = vsel %vm257, %v226, 0
  %v298 = vsel %vm257, %v227, 0
  %v301 = vsel %vm257, %v228, 0
  %v304 = vsel %vm257, %v229, 0
  %v307 = vsel %vm257, %v230, 0
  %v310 = vsel %vm257, %v231, 0
  %v313 = vsel %vm257, %v232, 0
  %v316 = vsel %vm257, %v233, 0
  %v319 = vsel %vm257, %v234, 0
  %v322 = vsel %vm257, %v235, 0
  %v325 = vsel %vm257, %v236, 0
  %v328 = vsel %vm257, %v237, 0
  %v331 = vsel %vm257, %v238, 0
  %v334 = vsel %vm257, %v239, 0
  %v337 = vsel %vm257, %v240, 0
  %v340 = vsel %vm257, %v241, 0
  %v343 = vsel %vm257, %v242, 0
  %v346 = vsel %vm257, %v243, 0
  %v349 = vsel %vm257, %v244, 0
  %v352 = vsel %vm257, %v245, 0
  %vm354 = vcmask 1044480
  %vm355 = vcmask 1045504
  %v356 = vsel %vm354, 4294967295, 65535
  %v357 = vsel %vm355, %v356, 0
  %v359 = vand.u32 %v255, %v357
  %361 = vmatpush.bf16.msra.mxu0 0
  %362 = vmatpush.bf16.msra.mxu0 0
  %363 = vmatpush.bf16.msra.mxu0 0
  %364 = vmatpush.bf16.msra.mxu0 0
  %365 = vmatpush.bf16.msra.mxu0 0
  %366 = vmatpush.bf16.msra.mxu0 0
  %367 = vmatpush.bf16.msra.mxu0 %v359
  %368 = vmatpush.bf16.msra.mxu0 %v254
  %369 = vmatmul.bf16.gmra.mxu0 %v259
  %v370 = vpop.f32.mrf.mxu0
  %v371 = vadd.f32 0.0, %v370
  %v372 = vpop.f32.mrf.mxu0
  %v373 = vadd.f32 0.0, %v372
  %374 = vmatmul.bf16.gmra.mxu0 %v262
  %v375 = vpop.f32.mrf.mxu0
  %v376 = vadd.f32 0.0, %v375
  %v377 = vpop.f32.mrf.mxu0
  %v378 = vadd.f32 0.0, %v377
  %379 = vmatmul.bf16.gmra.mxu0 %v265
  %v380 = vpop.f32.mrf.mxu0
  %v381 = vadd.f32 0.0, %v380
  %v382 = vpop.f32.mrf.mxu0
  %v383 = vadd.f32 0.0, %v382
  %384 = vmatmul.bf16.gmra.mxu0 %v268
  %v385 = vpop.f32.mrf.mxu0
  %v386 = vadd.f32 0.0, %v385
  %v387 = vpop.f32.mrf.mxu0
  %v388 = vadd.f32 0.0, %v387
  %389 = vmatmul.bf16.gmra.mxu0 %v271
  %v390 = vpop.f32.mrf.mxu0
  %v391 = vadd.f32 0.0, %v390
  %v392 = vpop.f32.mrf.mxu0
  %v393 = vadd.f32 0.0, %v392
  %394 = vmatmul.bf16.gmra.mxu0 %v274
  %v395 = vpop.f32.mrf.mxu0
  %v396 = vadd.f32 0.0, %v395
  %v397 = vpop.f32.mrf.mxu0
  %v398 = vadd.f32 0.0, %v397
  %399 = vmatmul.bf16.gmra.mxu0 %v277
  %v400 = vpop.f32.mrf.mxu0
  %v401 = vadd.f32 0.0, %v400
  %v402 = vpop.f32.mrf.mxu0
  %v403 = vadd.f32 0.0, %v402
  %404 = vmatmul.bf16.gmra.mxu0 %v280
  %v405 = vpop.f32.mrf.mxu0
  %v406 = vadd.f32 0.0, %v405
  %v407 = vpop.f32.mrf.mxu0
  %v408 = vadd.f32 0.0, %v407
  %409 = vmatmul.bf16.gmra.mxu0 %v283
  %v410 = vpop.f32.mrf.mxu0
  %v411 = vadd.f32 0.0, %v410
  %v412 = vpop.f32.mrf.mxu0
  %v413 = vadd.f32 0.0, %v412
  %414 = vmatmul.bf16.gmra.mxu0 %v286
  %v415 = vpop.f32.mrf.mxu0
  %v416 = vadd.f32 0.0, %v415
  %v417 = vpop.f32.mrf.mxu0
  %v418 = vadd.f32 0.0, %v417
  %419 = vmatmul.bf16.gmra.mxu0 %v289
  %v420 = vpop.f32.mrf.mxu0
  %v421 = vadd.f32 0.0, %v420
  %v422 = vpop.f32.mrf.mxu0
  %v423 = vadd.f32 0.0, %v422
  %424 = vmatmul.bf16.gmra.mxu0 %v292
  %v425 = vpop.f32.mrf.mxu0
  %v426 = vadd.f32 0.0, %v425
  %v427 = vpop.f32.mrf.mxu0
  %v428 = vadd.f32 0.0, %v427
  %429 = vmatmul.bf16.gmra.mxu0 %v295
  %v430 = vpop.f32.mrf.mxu0
  %v431 = vadd.f32 0.0, %v430
  %v432 = vpop.f32.mrf.mxu0
  %v433 = vadd.f32 0.0, %v432
  %434 = vmatmul.bf16.gmra.mxu0 %v298
  %v435 = vpop.f32.mrf.mxu0
  %v436 = vadd.f32 0.0, %v435
  %v437 = vpop.f32.mrf.mxu0
  %v438 = vadd.f32 0.0, %v437
  %439 = vmatmul.bf16.gmra.mxu0 %v301
  %v440 = vpop.f32.mrf.mxu0
  %v441 = vadd.f32 0.0, %v440
  %v442 = vpop.f32.mrf.mxu0
  %v443 = vadd.f32 0.0, %v442
  %444 = vmatmul.bf16.gmra.mxu0 %v304
  %v445 = vpop.f32.mrf.mxu0
  %v446 = vadd.f32 0.0, %v445
  %v447 = vpop.f32.mrf.mxu0
  %v448 = vadd.f32 0.0, %v447
  %449 = vmatmul.bf16.gmra.mxu0 %v307
  %v450 = vpop.f32.mrf.mxu0
  %v451 = vadd.f32 0.0, %v450
  %v452 = vpop.f32.mrf.mxu0
  %v453 = vadd.f32 0.0, %v452
  %454 = vmatmul.bf16.gmra.mxu0 %v310
  %v455 = vpop.f32.mrf.mxu0
  %v456 = vadd.f32 0.0, %v455
  %v457 = vpop.f32.mrf.mxu0
  %v458 = vadd.f32 0.0, %v457
  %459 = vmatmul.bf16.gmra.mxu0 %v313
  %v460 = vpop.f32.mrf.mxu0
  %v461 = vadd.f32 0.0, %v460
  %v462 = vpop.f32.mrf.mxu0
  %v463 = vadd.f32 0.0, %v462
  %464 = vmatmul.bf16.gmra.mxu0 %v316
  %v465 = vpop.f32.mrf.mxu0
  %v466 = vadd.f32 0.0, %v465
  %v467 = vpop.f32.mrf.mxu0
  %v468 = vadd.f32 0.0, %v467
  %469 = vmatmul.bf16.gmra.mxu0 %v319
  %v470 = vpop.f32.mrf.mxu0
  %v471 = vadd.f32 0.0, %v470
  %v472 = vpop.f32.mrf.mxu0
  %v473 = vadd.f32 0.0, %v472
  %474 = vmatmul.bf16.gmra.mxu0 %v322
  %v475 = vpop.f32.mrf.mxu0
  %v476 = vadd.f32 0.0, %v475
  %v477 = vpop.f32.mrf.mxu0
  %v478 = vadd.f32 0.0, %v477
  %479 = vmatmul.bf16.gmra.mxu0 %v325
  %v480 = vpop.f32.mrf.mxu0
  %v481 = vadd.f32 0.0, %v480
  %v482 = vpop.f32.mrf.mxu0
  %v483 = vadd.f32 0.0, %v482
  %484 = vmatmul.bf16.gmra.mxu0 %v328
  %v485 = vpop.f32.mrf.mxu0
  %v486 = vadd.f32 0.0, %v485
  %v487 = vpop.f32.mrf.mxu0
  %v488 = vadd.f32 0.0, %v487
  %489 = vmatmul.bf16.gmra.mxu0 %v331
  %v490 = vpop.f32.mrf.mxu0
  %v491 = vadd.f32 0.0, %v490
  %v492 = vpop.f32.mrf.mxu0
  %v493 = vadd.f32 0.0, %v492
  %494 = vmatmul.bf16.gmra.mxu0 %v334
  %v495 = vpop.f32.mrf.mxu0
  %v496 = vadd.f32 0.0, %v495
  %v497 = vpop.f32.mrf.mxu0
  %v498 = vadd.f32 0.0, %v497
  %499 = vmatmul.bf16.gmra.mxu0 %v337
  %v500 = vpop.f32.mrf.mxu0
  %v501 = vadd.f32 0.0, %v500
  %v502 = vpop.f32.mrf.mxu0
  %v503 = vadd.f32 0.0, %v502
  %504 = vmatmul.bf16.gmra.mxu0 %v340
  %v505 = vpop.f32.mrf.mxu0
  %v506 = vadd.f32 0.0, %v505
  %v507 = vpop.f32.mrf.mxu0
  %v508 = vadd.f32 0.0, %v507
  %509 = vmatmul.bf16.gmra.mxu0 %v343
  %v510 = vpop.f32.mrf.mxu0
  %v511 = vadd.f32 0.0, %v510
  %v512 = vpop.f32.mrf.mxu0
  %v513 = vadd.f32 0.0, %v512
  %514 = vmatmul.bf16.gmra.mxu0 %v346
  %v515 = vpop.f32.mrf.mxu0
  %v516 = vadd.f32 0.0, %v515
  %v517 = vpop.f32.mrf.mxu0
  %v518 = vadd.f32 0.0, %v517
  %519 = vmatmul.bf16.gmra.mxu0 %v349
  %v520 = vpop.f32.mrf.mxu0
  %v521 = vadd.f32 0.0, %v520
  %v522 = vpop.f32.mrf.mxu0
  %v523 = vadd.f32 0.0, %v522
  %524 = vmatmul.bf16.gmra.mxu0 %v352
  %v525 = vpop.f32.mrf.mxu0
  %v526 = vadd.f32 0.0, %v525
  %v527 = vpop.f32.mrf.mxu0
  %v528 = vadd.f32 0.0, %v527
  %529 = vdwg.mxu0
  %v530 = vld [vmem:[%s2] sm:$0x1]
  %v532 = vperm.slane %v530, 0
  %v534 = vmul.f32 %v371, %v532
  %v535 = vmul.f32 %v373, %v532
  %v536 = vmul.f32 %v376, %v532
  %v537 = vmul.f32 %v378, %v532
  %v538 = vmul.f32 %v381, %v532
  %v539 = vmul.f32 %v383, %v532
  %v540 = vmul.f32 %v386, %v532
  %v541 = vmul.f32 %v388, %v532
  %v542 = vmul.f32 %v391, %v532
  %v543 = vmul.f32 %v393, %v532
  %v544 = vmul.f32 %v396, %v532
  %v545 = vmul.f32 %v398, %v532
  %v546 = vmul.f32 %v401, %v532
  %v547 = vmul.f32 %v403, %v532
  %v548 = vmul.f32 %v406, %v532
  %v549 = vmul.f32 %v408, %v532
  %v550 = vmul.f32 %v411, %v532
  %v551 = vmul.f32 %v413, %v532
  %v552 = vmul.f32 %v416, %v532
  %v553 = vmul.f32 %v418, %v532
  %v554 = vmul.f32 %v421, %v532
  %v555 = vmul.f32 %v423, %v532
  %v556 = vmul.f32 %v426, %v532
  %v557 = vmul.f32 %v428, %v532
  %v558 = vmul.f32 %v431, %v532
  %v559 = vmul.f32 %v433, %v532
  %v560 = vmul.f32 %v436, %v532
  %v561 = vmul.f32 %v438, %v532
  %v562 = vmul.f32 %v441, %v532
  %v563 = vmul.f32 %v443, %v532
  %v564 = vmul.f32 %v446, %v532
  %v565 = vmul.f32 %v448, %v532
  %v566 = vmul.f32 %v451, %v532
  %v567 = vmul.f32 %v453, %v532
  %v568 = vmul.f32 %v456, %v532
  %v569 = vmul.f32 %v458, %v532
  %v570 = vmul.f32 %v461, %v532
  %v571 = vmul.f32 %v463, %v532
  %v572 = vmul.f32 %v466, %v532
  %v573 = vmul.f32 %v468, %v532
  %v574 = vmul.f32 %v471, %v532
  %v575 = vmul.f32 %v473, %v532
  %v576 = vmul.f32 %v476, %v532
  %v577 = vmul.f32 %v478, %v532
  %v578 = vmul.f32 %v481, %v532
  %v579 = vmul.f32 %v483, %v532
  %v580 = vmul.f32 %v486, %v532
  %v581 = vmul.f32 %v488, %v532
  %v582 = vmul.f32 %v491, %v532
  %v583 = vmul.f32 %v493, %v532
  %v584 = vmul.f32 %v496, %v532
  %v585 = vmul.f32 %v498, %v532
  %v586 = vmul.f32 %v501, %v532
  %v587 = vmul.f32 %v503, %v532
  %v588 = vmul.f32 %v506, %v532
  %v589 = vmul.f32 %v508, %v532
  %v590 = vmul.f32 %v511, %v532
  %v591 = vmul.f32 %v513, %v532
  %v592 = vmul.f32 %v516, %v532
  %v593 = vmul.f32 %v518, %v532
  %v594 = vmul.f32 %v521, %v532
  %v595 = vmul.f32 %v523, %v532
  %v596 = vmul.f32 %v526, %v532
  %v597 = vmul.f32 %v528, %v532
  %v598 = vld [vmem:[%s3] sm:$0x1]
  %v600 = vperm.slane %v598, 0
  %v602 = vadd.f32 %v534, %v600
  %v603 = vadd.f32 %v535, %v600
  %v604 = vadd.f32 %v536, %v600
  %v605 = vadd.f32 %v537, %v600
  %v606 = vadd.f32 %v538, %v600
  %v607 = vadd.f32 %v539, %v600
  %v608 = vadd.f32 %v540, %v600
  %v609 = vadd.f32 %v541, %v600
  %v610 = vadd.f32 %v542, %v600
  %v611 = vadd.f32 %v543, %v600
  %v612 = vadd.f32 %v544, %v600
  %v613 = vadd.f32 %v545, %v600
  %v614 = vadd.f32 %v546, %v600
  %v615 = vadd.f32 %v547, %v600
  %v616 = vadd.f32 %v548, %v600
  %v617 = vadd.f32 %v549, %v600
  %v618 = vadd.f32 %v550, %v600
  %v619 = vadd.f32 %v551, %v600
  %v620 = vadd.f32 %v552, %v600
  %v621 = vadd.f32 %v553, %v600
  %v622 = vadd.f32 %v554, %v600
  %v623 = vadd.f32 %v555, %v600
  %v624 = vadd.f32 %v556, %v600
  %v625 = vadd.f32 %v557, %v600
  %v626 = vadd.f32 %v558, %v600
  %v627 = vadd.f32 %v559, %v600
  %v628 = vadd.f32 %v560, %v600
  %v629 = vadd.f32 %v561, %v600
  %v630 = vadd.f32 %v562, %v600
  %v631 = vadd.f32 %v563, %v600
  %v632 = vadd.f32 %v564, %v600
  %v633 = vadd.f32 %v565, %v600
  %v634 = vadd.f32 %v566, %v600
  %v635 = vadd.f32 %v567, %v600
  %v636 = vadd.f32 %v568, %v600
  %v637 = vadd.f32 %v569, %v600
  %v638 = vadd.f32 %v570, %v600
  %v639 = vadd.f32 %v571, %v600
  %v640 = vadd.f32 %v572, %v600
  %v641 = vadd.f32 %v573, %v600
  %v642 = vadd.f32 %v574, %v600
  %v643 = vadd.f32 %v575, %v600
  %v644 = vadd.f32 %v576, %v600
  %v645 = vadd.f32 %v577, %v600
  %v646 = vadd.f32 %v578, %v600
  %v647 = vadd.f32 %v579, %v600
  %v648 = vadd.f32 %v580, %v600
  %v649 = vadd.f32 %v581, %v600
  %v650 = vadd.f32 %v582, %v600
  %v651 = vadd.f32 %v583, %v600
  %v652 = vadd.f32 %v584, %v600
  %v653 = vadd.f32 %v585, %v600
  %v654 = vadd.f32 %v586, %v600
  %v655 = vadd.f32 %v587, %v600
  %v656 = vadd.f32 %v588, %v600
  %v657 = vadd.f32 %v589, %v600
  %v658 = vadd.f32 %v590, %v600
  %v659 = vadd.f32 %v591, %v600
  %v660 = vadd.f32 %v592, %v600
  %v661 = vadd.f32 %v593, %v600
  %v662 = vadd.f32 %v594, %v600
  %v663 = vadd.f32 %v595, %v600
  %v664 = vadd.f32 %v596, %v600
  %v665 = vadd.f32 %v597, %v600
  %v666 = vmax.f32 %v602, 0.0
  %v667 = vmax.f32 %v603, 0.0
  %v668 = vmax.f32 %v604, 0.0
  %v669 = vmax.f32 %v605, 0.0
  %v670 = vmax.f32 %v606, 0.0
  %v671 = vmax.f32 %v607, 0.0
  %v672 = vmax.f32 %v608, 0.0
  %v673 = vmax.f32 %v609, 0.0
  %v674 = vmax.f32 %v610, 0.0
  %v675 = vmax.f32 %v611, 0.0
  %v676 = vmax.f32 %v612, 0.0
  %v677 = vmax.f32 %v613, 0.0
  %v678 = vmax.f32 %v614, 0.0
  %v679 = vmax.f32 %v615, 0.0
  %v680 = vmax.f32 %v616, 0.0
  %v681 = vmax.f32 %v617, 0.0
  %v682 = vmax.f32 %v618, 0.0
  %v683 = vmax.f32 %v619, 0.0
  %v684 = vmax.f32 %v620, 0.0
  %v685 = vmax.f32 %v621, 0.0
  %v686 = vmax.f32 %v622, 0.0
  %v687 = vmax.f32 %v623, 0.0
  %v688 = vmax.f32 %v624, 0.0
  %v689 = vmax.f32 %v625, 0.0
  %v690 = vmax.f32 %v626, 0.0
  %v691 = vmax.f32 %v627, 0.0
  %v692 = vmax.f32 %v628, 0.0
  %v693 = vmax.f32 %v629, 0.0
  %v694 = vmax.f32 %v630, 0.0
  %v695 = vmax.f32 %v631, 0.0
  %v696 = vmax.f32 %v632, 0.0
  %v697 = vmax.f32 %v633, 0.0
  %v698 = vmax.f32 %v634, 0.0
  %v699 = vmax.f32 %v635, 0.0
  %v700 = vmax.f32 %v636, 0.0
  %v701 = vmax.f32 %v637, 0.0
  %v702 = vmax.f32 %v638, 0.0
  %v703 = vmax.f32 %v639, 0.0
  %v704 = vmax.f32 %v640, 0.0
  %v705 = vmax.f32 %v641, 0.0
  %v706 = vmax.f32 %v642, 0.0
  %v707 = vmax.f32 %v643, 0.0
  %v708 = vmax.f32 %v644, 0.0
  %v709 = vmax.f32 %v645, 0.0
  %v710 = vmax.f32 %v646, 0.0
  %v711 = vmax.f32 %v647, 0.0
  %v712 = vmax.f32 %v648, 0.0
  %v713 = vmax.f32 %v649, 0.0
  %v714 = vmax.f32 %v650, 0.0
  %v715 = vmax.f32 %v651, 0.0
  %v716 = vmax.f32 %v652, 0.0
  %v717 = vmax.f32 %v653, 0.0
  %v718 = vmax.f32 %v654, 0.0
  %v719 = vmax.f32 %v655, 0.0
  %v720 = vmax.f32 %v656, 0.0
  %v721 = vmax.f32 %v657, 0.0
  %v722 = vmax.f32 %v658, 0.0
  %v723 = vmax.f32 %v659, 0.0
  %v724 = vmax.f32 %v660, 0.0
  %v725 = vmax.f32 %v661, 0.0
  %v726 = vmax.f32 %v662, 0.0
  %v727 = vmax.f32 %v663, 0.0
  %v728 = vmax.f32 %v664, 0.0
  %v729 = vmax.f32 %v665, 0.0
  %v730 = vpack.c.bf16 %v666, %v666
  %v731 = vpack.c.bf16 %v667, %v667
  %v732 = vpack.c.bf16 %v668, %v668
  %v733 = vpack.c.bf16 %v669, %v669
  %v734 = vpack.c.bf16 %v670, %v670
  %v735 = vpack.c.bf16 %v671, %v671
  %v736 = vpack.c.bf16 %v672, %v672
  %v737 = vpack.c.bf16 %v673, %v673
  %v738 = vpack.c.bf16 %v674, %v674
  %v739 = vpack.c.bf16 %v675, %v675
  %v740 = vpack.c.bf16 %v676, %v676
  %v741 = vpack.c.bf16 %v677, %v677
  %v742 = vpack.c.bf16 %v678, %v678
  %v743 = vpack.c.bf16 %v679, %v679
  %v744 = vpack.c.bf16 %v680, %v680
  %v745 = vpack.c.bf16 %v681, %v681
  %v746 = vpack.c.bf16 %v682, %v682
  %v747 = vpack.c.bf16 %v683, %v683
  %v748 = vpack.c.bf16 %v684, %v684
  %v749 = vpack.c.bf16 %v685, %v685
  %v750 = vpack.c.bf16 %v686, %v686
  %v751 = vpack.c.bf16 %v687, %v687
  %v752 = vpack.c.bf16 %v688, %v688
  %v753 = vpack.c.bf16 %v689, %v689
  %v754 = vpack.c.bf16 %v690, %v690
  %v755 = vpack.c.bf16 %v691, %v691
  %v756 = vpack.c.bf16 %v692, %v692
  %v757 = vpack.c.bf16 %v693, %v693
  %v758 = vpack.c.bf16 %v694, %v694
  %v759 = vpack.c.bf16 %v695, %v695
  %v760 = vpack.c.bf16 %v696, %v696
  %v761 = vpack.c.bf16 %v697, %v697
  %v762 = vpack.c.bf16 %v698, %v698
  %v763 = vpack.c.bf16 %v699, %v699
  %v764 = vpack.c.bf16 %v700, %v700
  %v765 = vpack.c.bf16 %v701, %v701
  %v766 = vpack.c.bf16 %v702, %v702
  %v767 = vpack.c.bf16 %v703, %v703
  %v768 = vpack.c.bf16 %v704, %v704
  %v769 = vpack.c.bf16 %v705, %v705
  %v770 = vpack.c.bf16 %v706, %v706
  %v771 = vpack.c.bf16 %v707, %v707
  %v772 = vpack.c.bf16 %v708, %v708
  %v773 = vpack.c.bf16 %v709, %v709
  %v774 = vpack.c.bf16 %v710, %v710
  %v775 = vpack.c.bf16 %v711, %v711
  %v776 = vpack.c.bf16 %v712, %v712
  %v777 = vpack.c.bf16 %v713, %v713
  %v778 = vpack.c.bf16 %v714, %v714
  %v779 = vpack.c.bf16 %v715, %v715
  %v780 = vpack.c.bf16 %v716, %v716
  %v781 = vpack.c.bf16 %v717, %v717
  %v782 = vpack.c.bf16 %v718, %v718
  %v783 = vpack.c.bf16 %v719, %v719
  %v784 = vpack.c.bf16 %v720, %v720
  %v785 = vpack.c.bf16 %v721, %v721
  %v786 = vpack.c.bf16 %v722, %v722
  %v787 = vpack.c.bf16 %v723, %v723
  %v788 = vpack.c.bf16 %v724, %v724
  %v789 = vpack.c.bf16 %v725, %v725
  %v790 = vpack.c.bf16 %v726, %v726
  %v791 = vpack.c.bf16 %v727, %v727
  %v792 = vpack.c.bf16 %v728, %v728
  %v793 = vpack.c.bf16 %v729, %v729
  %vm794 = vcmask 257024
  %795 = vst.msk [vmem:[%s4] sm:$0xf] %vm794, %v730
  %796 = vst.msk [vmem:[%s4 + $0x4] sm:$0xf] %vm794, %v731
  %797 = vst.msk [vmem:[%s4 + $0x8] sm:$0xf] %vm794, %v732
  %798 = vst.msk [vmem:[%s4 + $0xc] sm:$0xf] %vm794, %v733
  %799 = vst.msk [vmem:[%s4 + $0x10] sm:$0xf] %vm794, %v734
  %800 = vst.msk [vmem:[%s4 + $0x14] sm:$0xf] %vm794, %v735
  %801 = vst.msk [vmem:[%s4 + $0x18] sm:$0xf] %vm794, %v736
  %802 = vst.msk [vmem:[%s4 + $0x1c] sm:$0xf] %vm794, %v737
  %803 = vst.msk [vmem:[%s4 + $0x20] sm:$0xf] %vm794, %v738
  %804 = vst.msk [vmem:[%s4 + $0x24] sm:$0xf] %vm794, %v739
  %805 = vst.msk [vmem:[%s4 + $0x28] sm:$0xf] %vm794, %v740
  %806 = vst.msk [vmem:[%s4 + $0x2c] sm:$0xf] %vm794, %v741
  %807 = vst.msk [vmem:[%s4 + $0x30] sm:$0xf] %vm794, %v742
  %808 = vst.msk [vmem:[%s4 + $0x34] sm:$0xf] %vm794, %v743
  %809 = vst.msk [vmem:[%s4 + $0x38] sm:$0xf] %vm794, %v744
  %810 = vst.msk [vmem:[%s4 + $0x3c] sm:$0xf] %vm794, %v745
  %811 = vst.msk [vmem:[%s4 + $0x40] sm:$0xf] %vm794, %v746
  %812 = vst.msk [vmem:[%s4 + $0x44] sm:$0xf] %vm794, %v747
  %813 = vst.msk [vmem:[%s4 + $0x48] sm:$0xf] %vm794, %v748
  %814 = vst.msk [vmem:[%s4 + $0x4c] sm:$0xf] %vm794, %v749
  %815 = vst.msk [vmem:[%s4 + $0x50] sm:$0xf] %vm794, %v750
  %816 = vst.msk [vmem:[%s4 + $0x54] sm:$0xf] %vm794, %v751
  %817 = vst.msk [vmem:[%s4 + $0x58] sm:$0xf] %vm794, %v752
  %818 = vst.msk [vmem:[%s4 + $0x5c] sm:$0xf] %vm794, %v753
  %819 = vst.msk [vmem:[%s4 + $0x60] sm:$0xf] %vm794, %v754
  %820 = vst.msk [vmem:[%s4 + $0x64] sm:$0xf] %vm794, %v755
  %821 = vst.msk [vmem:[%s4 + $0x68] sm:$0xf] %vm794, %v756
  %822 = vst.msk [vmem:[%s4 + $0x6c] sm:$0xf] %vm794, %v757
  %823 = vst.msk [vmem:[%s4 + $0x70] sm:$0xf] %vm794, %v758
  %824 = vst.msk [vmem:[%s4 + $0x74] sm:$0xf] %vm794, %v759
  %825 = vst.msk [vmem:[%s4 + $0x78] sm:$0xf] %vm794, %v760
  %826 = vst.msk [vmem:[%s4 + $0x7c] sm:$0xf] %vm794, %v761
  %827 = vst.msk [vmem:[%s4 + $0x80] sm:$0xf] %vm794, %v762
  %828 = vst.msk [vmem:[%s4 + $0x84] sm:$0xf] %vm794, %v763
  %829 = vst.msk [vmem:[%s4 + $0x88] sm:$0xf] %vm794, %v764
  %830 = vst.msk [vmem:[%s4 + $0x8c] sm:$0xf] %vm794, %v765
  %831 = vst.msk [vmem:[%s4 + $0x90] sm:$0xf] %vm794, %v766
  %832 = vst.msk [vmem:[%s4 + $0x94] sm:$0xf] %vm794, %v767
  %833 = vst.msk [vmem:[%s4 + $0x98] sm:$0xf] %vm794, %v768
  %834 = vst.msk [vmem:[%s4 + $0x9c] sm:$0xf] %vm794, %v769
  %835 = vst.msk [vmem:[%s4 + $0xa0] sm:$0xf] %vm794, %v770
  %836 = vst.msk [vmem:[%s4 + $0xa4] sm:$0xf] %vm794, %v771
  %837 = vst.msk [vmem:[%s4 + $0xa8] sm:$0xf] %vm794, %v772
  %838 = vst.msk [vmem:[%s4 + $0xac] sm:$0xf] %vm794, %v773
  %839 = vst.msk [vmem:[%s4 + $0xb0] sm:$0xf] %vm794, %v774
  %840 = vst.msk [vmem:[%s4 + $0xb4] sm:$0xf] %vm794, %v775
  %841 = vst.msk [vmem:[%s4 + $0xb8] sm:$0xf] %vm794, %v776
  %842 = vst.msk [vmem:[%s4 + $0xbc] sm:$0xf] %vm794, %v777
  %843 = vst.msk [vmem:[%s4 + $0xc0] sm:$0xf] %vm794, %v778
  %844 = vst.msk [vmem:[%s4 + $0xc4] sm:$0xf] %vm794, %v779
  %845 = vst.msk [vmem:[%s4 + $0xc8] sm:$0xf] %vm794, %v780
  %846 = vst.msk [vmem:[%s4 + $0xcc] sm:$0xf] %vm794, %v781
  %847 = vst.msk [vmem:[%s4 + $0xd0] sm:$0xf] %vm794, %v782
  %848 = vst.msk [vmem:[%s4 + $0xd4] sm:$0xf] %vm794, %v783
  %849 = vst.msk [vmem:[%s4 + $0xd8] sm:$0xf] %vm794, %v784
  %850 = vst.msk [vmem:[%s4 + $0xdc] sm:$0xf] %vm794, %v785
  %851 = vst.msk [vmem:[%s4 + $0xe0] sm:$0xf] %vm794, %v786
  %852 = vst.msk [vmem:[%s4 + $0xe4] sm:$0xf] %vm794, %v787
  %853 = vst.msk [vmem:[%s4 + $0xe8] sm:$0xf] %vm794, %v788
  %854 = vst.msk [vmem:[%s4 + $0xec] sm:$0xf] %vm794, %v789
  %855 = vst.msk [vmem:[%s4 + $0xf0] sm:$0xf] %vm794, %v790
  %856 = vst.msk [vmem:[%s4 + $0xf4] sm:$0xf] %vm794, %v791
  %857 = vst.msk [vmem:[%s4 + $0xf8] sm:$0xf] %vm794, %v792
  %858 = vst.msk [vmem:[%s4 + $0xfc] sm:$0xf] %vm794, %v793
  // Predicated region
  $region18: #{net_forward.10} parent=0 // pred_check
    _
  $region19: #{net_forward.10} parent=0 // pred_check_branch
    %860 = sbr.rel (0) target = $region21
  $region20: #{net_forward.10} parent=0 // pred_region
    _
  $region21: #{net_forward.10} parent=0 // pred_fallthru
    _
  // Predicated region
  $region22: #{net_forward.10} parent=0 // pred_check
    _
  $region23: #{net_forward.10} parent=0 // pred_check_branch
    %862 = sbr.rel (0) target = $region25
  $region24: #{net_forward.10} parent=0 // pred_region
    _
  $region25: #{net_forward.10} parent=0 // pred_fallthru
    _

// kernel: net_forward.12
$region0: #{net_forward.12}
  #allocation0 [shape = 'u32[]', space=smem, size = 0x4, offset = 0x4, fixed_abs, tag = 'smem constant byte address 0x4 - core index']
  #allocation1 [shape = 'u32[72,128]{1,0:T(1,128)}', space=vmem, size = 0x9000, scoped, tag = 'internal scratch']
  %s0 = inlined_call_operand.vmem [shape: bf16[2,16,8,64], index: 0, kind: input, shape index: {}]
  %s1 = inlined_call_operand.vmem [shape: bf16[2,8,8,32], index: 1, kind: output, shape index: {}]
  %s2 = sld [smem:[#allocation0]]
  $region37: #{net_forward.12} parent=0
    _
  %s4 = ssub.s32 1, %s2
  %s5 = scalar_select 0, %s4, %s2
  loop: start=0, step=1, limit=4
  $region2: #{net_forward.12} parent=0 // loop_pre_header
    _
  $region3: #{net_forward.12} parent=0 // loop_header
    %s7 = sphi 0, %s11
    %p8 = scmp.ge.s32.totalorder %s7, 4
    %s17 = sphi 0, %s19
    %s20 = sphi 0, %s17
    %s21 = sphi 0, %s20
    %s37 = sphi 0, %s21
    %s43 = sphi 0, %s45
    %s46 = sphi 0, %s43
    %s47 = sphi 0, %s46
    %s63 = sphi 0, %s47
  $region4: #{net_forward.12} parent=0 // loop_header_branch
    %10 = sbr.rel (%p8) target = $region8
  $region5: #{net_forward.12} parent=0 // loop_body
    %s12 = ssub.s32 %s7, 1
    %s13 = ssub.s32 %s7, 2
    %s14 = sadd.s32 %s7, 1
    %s15 = ssub.s32 %s7, %s14
    %p16 = scmp.eq.s32.totalorder %s15, 0
    %s18 = sadd.s32 %s17, 1
    %s19 = scalar_select %p16, %s17, %s18
    %p22 = pneg %p16
    %p23 = scmp.eq.s32.totalorder %s7, 1
    %p24 = por %p22, %p23
    %p25 = scmp.ne.s32.totalorder %s17, %s20
    %p26 = scmp.eq.s32.totalorder %s7, 0
    %p27 = por %p25, %p26
    %p28 = scmp.ne.s32.totalorder %s17, %s20
    %p29 = scmp.eq.s32.totalorder %s12, 1
    %p30 = por %p28, %p29
    %p31 = scmp.ne.s32.totalorder %s20, %s21
    %p32 = scmp.eq.s32.totalorder %s12, 0
    %p33 = por %p31, %p32
    %p34 = scmp.ne.s32.totalorder %s20, %s21
    %p35 = scmp.eq.s32.totalorder %s13, 1
    %p36 = por %p34, %p35
    %p38 = scmp.ne.s32.totalorder %s21, %s37
    %p39 = scmp.eq.s32.totalorder %s13, 0
    %p40 = por %p38, %p39
    %s41 = ssub.s32 %s7, %s14
    %p42 = scmp.eq.s32.totalorder %s41, 0
    %s44 = sadd.s32 %s43, 1
    %s45 = scalar_select %p42, %s43, %s44
    %p48 = pneg %p42
    %p49 = scmp.eq.s32.totalorder %s7, 1
    %p50 = por %p48, %p49
    %p51 = scmp.ne.s32.totalorder %s43, %s46
    %p52 = scmp.eq.s32.totalorder %s7, 0
    %p53 = por %p51, %p52
    %p54 = scmp.ne.s32.totalorder %s43, %s46
    %p55 = scmp.eq.s32.totalorder %s12, 1
    %p56 = por %p54, %p55
    %p57 = scmp.ne.s32.totalorder %s46, %s47
    %p58 = scmp.eq.s32.totalorder %s12, 0
    %p59 = por %p57, %p58
    %p60 = scmp.ne.s32.totalorder %s46, %s47
    %p61 = scmp.eq.s32.totalorder %s13, 1
    %p62 = por %p60, %p61
    %p64 = scmp.ne.s32.totalorder %s47, %s63
    %p65 = scmp.eq.s32.totalorder %s13, 0
    %p66 = por %p64, %p65
    %p67 = scmp.le.s32.totalorder 1, %s7
    %p68 = scmp.lt.s32.totalorder %s7, 3
    %p69 = pnand %p67, %p68
    %p70 = pneg %p69
    // Predicated region
    $region9: #{net_forward.12} parent=5 // pred_check
      _
    $region10: #{net_forward.12} parent=5 // pred_check_branch
      %72 = sbr.rel (%p69) target = $region12
    $region11: #{net_forward.12} parent=5 // pred_region
      %s73 = ssub.s32 %s7, 1
    $region12: #{net_forward.12} parent=5 // pred_fallthru
      _
    %p74 = scmp.lt.s32.totalorder %s7, 2
    // Predicated region
    $region13: #{net_forward.12} parent=5 // pred_check
      %p75 = pneg %p74
    $region14: #{net_forward.12} parent=5 // pred_check_branch
      %77 = sbr.rel (%p75) target = $region16
    $region15: #{net_forward.12} parent=5 // pred_region
      // Predicated region
      $region17: #{net_forward.12} parent=15 // pred_check
        %p78 = pneg %p27
      $region18: #{net_forward.12} parent=15 // pred_check_branch
        %80 = sbr.rel (%p78) target = $region20
      $region19: #{net_forward.12} parent=15 // pred_region
        %p81 = scmp.lt.s32.totalorder %s7, 1
        %s82 = scalar_select %p81, %s7, 1
        %s83 = smul.addr %s82, 16
        %s84 = smul.addr %s83, 4
        %s85 = scalar_lea.vmem %s0, %s84
      $region20: #{net_forward.12} parent=15 // pred_fallthru
        _
    $region16: #{net_forward.12} parent=5 // pred_fallthru
      _
    %p86 = scmp.le.s32.totalorder 1, %s7
    %p87 = scmp.lt.s32.totalorder %s7, 3
    %p88 = pnand %p86, %p87
    %p89 = pneg %p88
    // Predicated region
    $region21: #{net_forward.12} parent=5 // pred_check
      _
    $region22: #{net_forward.12} parent=5 // pred_check_branch
      %91 = sbr.rel (%p88) target = $region24
    $region23: #{net_forward.12} parent=5 // pred_region
      %s92 = ssub.s32 %s7, 1
      %p93 = scmp.lt.s32.totalorder %s12, 1
      %s94 = scalar_select %p93, %s12, 1
      %s95 = smul.addr %s94, 16
      %s96 = smul.addr %s95, 4
      %s97 = scalar_lea.vmem %s0, %s96
      %p98 = pneg %p33
      %p99 = pneg %p30
      %p100 = pneg %p59
      %p101 = pneg %p56
      %p102 = scmp.lt.s32.totalorder %s12, 1
      %s103 = scalar_select %p102, %s12, 1
      %s104 = smul.addr %s103, 8
      %s105 = smul.addr %s104, 4
      %s106 = scalar_lea.vmem %s1, %s105
      %p107 = scmp.lt.s32.totalorder %s12, 1
      %s108 = scalar_select %p107, %s12, 1
      %s109 = smul.addr %s108, 16
      %s110 = smul.addr %s109, 4
      %s111 = scalar_lea.vmem %s0, %s110
      %p112 = scmp.lt.s32.totalorder %s12, 1
      %s113 = scalar_select %p112, %s12, 1
      %s114 = smul.addr %s113, 8
      %s115 = smul.addr %s114, 4
      %s116 = scalar_lea.vmem %s1, %s115
      %v117 = vld [vmem:[%s111] sm:$0xf]
      %v118 = vld [vmem:[%s111 + $0x4] sm:$0xf]
      %v119 = vld [vmem:[%s111 + $0x8] sm:$0xf]
      %v120 = vld [vmem:[%s111 + $0xc] sm:$0xf]
      %v121 = vld [vmem:[%s111 + $0x10] sm:$0xf]
      %v122 = vld [vmem:[%s111 + $0x14] sm:$0xf]
      %v123 = vld [vmem:[%s111 + $0x18] sm:$0xf]
      %v124 = vld [vmem:[%s111 + $0x1c] sm:$0xf]
      %v125 = vld [vmem:[%s111 + $0x20] sm:$0xf]
      %v126 = vld [vmem:[%s111 + $0x24] sm:$0xf]
      %v127 = vld [vmem:[%s111 + $0x28] sm:$0xf]
      %v128 = vld [vmem:[%s111 + $0x2c] sm:$0xf]
      %v129 = vld [vmem:[%s111 + $0x30] sm:$0xf]
      %v130 = vld [vmem:[%s111 + $0x34] sm:$0xf]
      %v131 = vld [vmem:[%s111 + $0x38] sm:$0xf]
      %v132 = vld [vmem:[%s111 + $0x3c] sm:$0xf]
      %v133 = vunpack.c.l.bf16 %v117
      %v134 = vunpack.c.l.bf16 %v119
      %v135 = vunpack.c.l.bf16 %v121
      %v136 = vunpack.c.l.bf16 %v123
      %v137 = vunpack.c.l.bf16 %v125
      %v138 = vunpack.c.l.bf16 %v127
      %v139 = vunpack.c.l.bf16 %v129
      %v140 = vunpack.c.l.bf16 %v131
      %v141 = vunpack.c.l.bf16 %v118
      %v142 = vunpack.c.l.bf16 %v120
      %v143 = vunpack.c.l.bf16 %v122
      %v144 = vunpack.c.l.bf16 %v124
      %v145 = vunpack.c.l.bf16 %v126
      %v146 = vunpack.c.l.bf16 %v128
      %v147 = vunpack.c.l.bf16 %v130
      %v148 = vunpack.c.l.bf16 %v132
      %v149 = vmax.f32 %v133, %v141
      %v150 = vmax.f32 %v134, %v142
      %v151 = vmax.f32 %v135, %v143
      %v152 = vmax.f32 %v136, %v144
      %v153 = vmax.f32 %v137, %v145
      %v154 = vmax.f32 %v138, %v146
      %v155 = vmax.f32 %v139, %v147
      %v156 = vmax.f32 %v140, %v148
      %v157 = vpack.c.bf16 %v149, %v149
      %v158 = vpack.c.bf16 %v150, %v150
      %v159 = vpack.c.bf16 %v151, %v151
      %v160 = vpack.c.bf16 %v152, %v152
      %v161 = vpack.c.bf16 %v153, %v153
      %v162 = vpack.c.bf16 %v154, %v154
      %v163 = vpack.c.bf16 %v155, %v155
      %v164 = vpack.c.bf16 %v156, %v156
      %v165 = vunpack.c.l.bf16 %v157
      %v166 = vunpack.c.l.bf16 %v158
      %v167 = vunpack.c.l.bf16 %v159
      %v168 = vunpack.c.l.bf16 %v160
      %v169 = vunpack.c.l.bf16 %v161
      %v170 = vunpack.c.l.bf16 %v162
      %v171 = vunpack.c.l.bf16 %v163
      %v172 = vunpack.c.l.bf16 %v164
      %181 = vrot.lane.b32.xlu0 %v165, 96
      %v182 = vpop.permute.xlu0 %181
      %183 = vrot.lane.b32.xlu0 %v166, 96
      %v184 = vpop.permute.xlu0 %183
      %185 = vrot.lane.b32.xlu0 %v167, 96
      %v186 = vpop.permute.xlu0 %185
      %187 = vrot.lane.b32.xlu0 %v168, 96
      %v188 = vpop.permute.xlu0 %187
      %189 = vrot.lane.b32.xlu0 %v169, 96
      %v190 = vpop.permute.xlu0 %189
      %191 = vrot.lane.b32.xlu0 %v170, 96
      %v192 = vpop.permute.xlu0 %191
      %193 = vrot.lane.b32.xlu0 %v171, 96
      %v194 = vpop.permute.xlu0 %193
      %195 = vrot.lane.b32.xlu0 %v172, 96
      %v196 = vpop.permute.xlu0 %195
      %v205 = vmax.f32 %v165, %v182
      %v206 = vmax.f32 %v166, %v184
      %v207 = vmax.f32 %v167, %v186
      %v208 = vmax.f32 %v168, %v188
      %v209 = vmax.f32 %v169, %v190
      %v210 = vmax.f32 %v170, %v192
      %v211 = vmax.f32 %v171, %v194
      %v212 = vmax.f32 %v172, %v196
      %v213 = vpack.c.bf16 %v205, %v205
      %v214 = vpack.c.bf16 %v206, %v206
      %v215 = vpack.c.bf16 %v207, %v207
      %v216 = vpack.c.bf16 %v208, %v208
      %v217 = vpack.c.bf16 %v209, %v209
      %v218 = vpack.c.bf16 %v210, %v210
      %v219 = vpack.c.bf16 %v211, %v211
      %v220 = vpack.c.bf16 %v212, %v212
      %vm221 = vcmask 257024
      %222 = vst.msk [vmem:[%s116] sm:$0xf] %vm221, %v213
      %223 = vst.msk [vmem:[%s116 + $0x4] sm:$0xf] %vm221, %v214
      %224 = vst.msk [vmem:[%s116 + $0x8] sm:$0xf] %vm221, %v215
      %225 = vst.msk [vmem:[%s116 + $0xc] sm:$0xf] %vm221, %v216
      %226 = vst.msk [vmem:[%s116 + $0x10] sm:$0xf] %vm221, %v217
      %227 = vst.msk [vmem:[%s116 + $0x14] sm:$0xf] %vm221, %v218
      %228 = vst.msk [vmem:[%s116 + $0x18] sm:$0xf] %vm221, %v219
      %229 = vst.msk [vmem:[%s116 + $0x1c] sm:$0xf] %vm221, %v220
      %p230 = scmp.lt.s32.totalorder %s12, 1
      %s231 = scalar_select %p230, %s12, 1
      %s232 = smul.addr %s231, 8
      %s233 = smul.addr %s232, 4
      %s234 = scalar_lea.vmem %s1, %s233
      // Predicated region
      $region25: #{net_forward.12} parent=23 // pred_check
        %p235 = pneg %p56
      $region26: #{net_forward.12} parent=23 // pred_check_branch
        %237 = sbr.rel (%p235) target = $region28
      $region27: #{net_forward.12} parent=23 // pred_region
        _
      $region28: #{net_forward.12} parent=23 // pred_fallthru
        _
    $region24: #{net_forward.12} parent=5 // pred_fallthru
      _
    %p238 = scmp.le.s32.totalorder 2, %s7
    // Predicated region
    $region29: #{net_forward.12} parent=5 // pred_check
      %p239 = pneg %p238
    $region30: #{net_forward.12} parent=5 // pred_check_branch
      %241 = sbr.rel (%p239) target = $region32
    $region31: #{net_forward.12} parent=5 // pred_region
      %s242 = ssub.s32 %s7, 2
      // Predicated region
      $region33: #{net_forward.12} parent=31 // pred_check
        %p243 = pneg %p62
      $region34: #{net_forward.12} parent=31 // pred_check_branch
        %245 = sbr.rel (%p243) target = $region36
      $region35: #{net_forward.12} parent=31 // pred_region
        %p246 = scmp.lt.s32.totalorder %s13, 1
        %s247 = scalar_select %p246, %s13, 1
        %s248 = smul.addr %s247, 8
        %s249 = smul.addr %s248, 4
        %s250 = scalar_lea.vmem %s1, %s249
      $region36: #{net_forward.12} parent=31 // pred_fallthru
        _
    $region32: #{net_forward.12} parent=5 // pred_fallthru
      _
  $region6: #{net_forward.12} parent=0 // loop_footer
    %s11 = sadd.s32 1, %s7
  $region7: #{net_forward.12} parent=0 // loop_footer_branch
    %6 = sbr.rel target = $region3
  $region8: #{net_forward.12} parent=0 // loop_exit
    _

// kernel: net_forward.11
$region0: #{net_forward.11}
  #allocation0 [shape = 'u32[]', space=smem, size = 0x4, offset = 0x4, fixed_abs, tag = 'smem constant byte address 0x4 - core index']
  #allocation1 [shape = 'u32[72,128]{1,0:T(1,128)}', space=vmem, size = 0x9000, scoped, tag = 'internal scratch']
  %s0 = inlined_call_operand.vmem [shape: bf16[512,288], index: 0, kind: input, shape index: {}]
  %s1 = inlined_call_operand.vmem [shape: bf16[288,32], index: 1, kind: input, shape index: {}]
  %s2 = inlined_call_operand.vmem [shape: f32[1,32], index: 2, kind: input, shape index: {}]
  %s3 = inlined_call_operand.vmem [shape: f32[1,32], index: 3, kind: input, shape index: {}]
  %s4 = inlined_call_operand.vmem [shape: bf16[512,32], index: 4, kind: output, shape index: {}]
  %s5 = sld [smem:[#allocation0]]
  $region26: #{net_forward.11} parent=0
    _
  %s7 = ssub.s32 1, %s5
  %s8 = scalar_select 0, %s7, %s5
  // Predicated region
  $region2: #{net_forward.11} parent=0 // pred_check
    _
  $region3: #{net_forward.11} parent=0 // pred_check_branch
    %10 = sbr.rel (0) target = $region5
  $region4: #{net_forward.11} parent=0 // pred_region
    _
  $region5: #{net_forward.11} parent=0 // pred_fallthru
    _
  // Predicated region
  $region6: #{net_forward.11} parent=0 // pred_check
    _
  $region7: #{net_forward.11} parent=0 // pred_check_branch
    %12 = sbr.rel (0) target = $region9
  $region8: #{net_forward.11} parent=0 // pred_region
    _
  $region9: #{net_forward.11} parent=0 // pred_fallthru
    _
  // Predicated region
  $region10: #{net_forward.11} parent=0 // pred_check
    _
  $region11: #{net_forward.11} parent=0 // pred_check_branch
    %14 = sbr.rel (0) target = $region13
  $region12: #{net_forward.11} parent=0 // pred_region
    _
  $region13: #{net_forward.11} parent=0 // pred_fallthru
    _
  // Predicated region
  $region14: #{net_forward.11} parent=0 // pred_check
    _
  $region15: #{net_forward.11} parent=0 // pred_check_branch
    %16 = sbr.rel (0) target = $region17
  $region16: #{net_forward.11} parent=0 // pred_region
    _
  $region17: #{net_forward.11} parent=0 // pred_fallthru
    _
  %v18 = vld [vmem:[%s0] sm:$0xff]
  %v19 = vld [vmem:[%s0 + $0x8] sm:$0xf]
  %v20 = vld [vmem:[%s0 + $0xc] sm:$0xff]
  %v21 = vld [vmem:[%s0 + $0x14] sm:$0xf]
  %v22 = vld [vmem:[%s0 + $0x18] sm:$0xff]
  %v23 = vld [vmem:[%s0 + $0x20] sm:$0xf]
  %v24 = vld [vmem:[%s0 + $0x24] sm:$0xff]
  %v25 = vld [vmem:[%s0 + $0x2c] sm:$0xf]
  %v26 = vld [vmem:[%s0 + $0x30] sm:$0xff]
  %v27 = vld [vmem:[%s0 + $0x38] sm:$0xf]
  %v28 = vld [vmem:[%s0 + $0x3c] sm:$0xff]
  %v29 = vld [vmem:[%s0 + $0x44] sm:$0xf]
  %v30 = vld [vmem:[%s0 + $0x48] sm:$0xff]
  %v31 = vld [vmem:[%s0 + $0x50] sm:$0xf]
  %v32 = vld [vmem:[%s0 + $0x54] sm:$0xff]
  %v33 = vld [vmem:[%s0 + $0x5c] sm:$0xf]
  %v34 = vld [vmem:[%s0 + $0x60] sm:$0xff]
  %v35 = vld [vmem:[%s0 + $0x68] sm:$0xf]
  %v36 = vld [vmem:[%s0 + $0x6c] sm:$0xff]
  %v37 = vld [vmem:[%s0 + $0x74] sm:$0xf]
  %v38 = vld [vmem:[%s0 + $0x78] sm:$0xff]
  %v39 = vld [vmem:[%s0 + $0x80] sm:$0xf]
  %v40 = vld [vmem:[%s0 + $0x84] sm:$0xff]
  %v41 = vld [vmem:[%s0 + $0x8c] sm:$0xf]
  %v42 = vld [vmem:[%s0 + $0x90] sm:$0xff]
  %v43 = vld [vmem:[%s0 + $0x98] sm:$0xf]
  %v44 = vld [vmem:[%s0 + $0x9c] sm:$0xff]
  %v45 = vld [vmem:[%s0 + $0xa4] sm:$0xf]
  %v46 = vld [vmem:[%s0 + $0xa8] sm:$0xff]
  %v47 = vld [vmem:[%s0 + $0xb0] sm:$0xf]
  %v48 = vld [vmem:[%s0 + $0xb4] sm:$0xff]
  %v49 = vld [vmem:[%s0 + $0xbc] sm:$0xf]
  %v50 = vld [vmem:[%s0 + $0xc0] sm:$0xff]
  %v51 = vld [vmem:[%s0 + $0xc8] sm:$0xf]
  %v52 = vld [vmem:[%s0 + $0xcc] sm:$0xff]
  %v53 = vld [vmem:[%s0 + $0xd4] sm:$0xf]
  %v54 = vld [vmem:[%s0 + $0xd8] sm:$0xff]
  %v55 = vld [vmem:[%s0 + $0xe0] sm:$0xf]
  %v56 = vld [vmem:[%s0 + $0xe4] sm:$0xff]
  %v57 = vld [vmem:[%s0 + $0xec] sm:$0xf]
  %v58 = vld [vmem:[%s0 + $0xf0] sm:$0xff]
  %v59 = vld [vmem:[%s0 + $0xf8] sm:$0xf]
  %v60 = vld [vmem:[%s0 + $0xfc] sm:$0xff]
  %v61 = vld [vmem:[%s0 + $0x104] sm:$0xf]
  %v62 = vld [vmem:[%s0 + $0x108] sm:$0xff]
  %v63 = vld [vmem:[%s0 + $0x110] sm:$0xf]
  %v64 = vld [vmem:[%s0 + $0x114] sm:$0xff]
  %v65 = vld [vmem:[%s0 + $0x11c] sm:$0xf]
  %v66 = vld [vmem:[%s0 + $0x120] sm:$0xff]
  %v67 = vld [vmem:[%s0 + $0x128] sm:$0xf]
  %v68 = vld [vmem:[%s0 + $0x12c] sm:$0xff]
  %v69 = vld [vmem:[%s0 + $0x134] sm:$0xf]
  %v70 = vld [vmem:[%s0 + $0x138] sm:$0xff]
  %v71 = vld [vmem:[%s0 + $0x140] sm:$0xf]
  %v72 = vld [vmem:[%s0 + $0x144] sm:$0xff]
  %v73 = vld [vmem:[%s0 + $0x14c] sm:$0xf]
  %v74 = vld [vmem:[%s0 + $0x150] sm:$0xff]
  %v75 = vld [vmem:[%s0 + $0x158] sm:$0xf]
  %v76 = vld [vmem:[%s0 + $0x15c] sm:$0xff]
  %v77 = vld [vmem:[%s0 + $0x164] sm:$0xf]
  %v78 = vld [vmem:[%s0 + $0x168] sm:$0xff]
  %v79 = vld [vmem:[%s0 + $0x170] sm:$0xf]
  %v80 = vld [vmem:[%s0 + $0x174] sm:$0xff]
  %v81 = vld [vmem:[%s0 + $0x17c] sm:$0xf]
  %v82 = vld [vmem:[%s0 + $0x180] sm:$0xff]
  %v83 = vld [vmem:[%s0 + $0x188] sm:$0xf]
  %v84 = vld [vmem:[%s0 + $0x18c] sm:$0xff]
  %v85 = vld [vmem:[%s0 + $0x194] sm:$0xf]
  %v86 = vld [vmem:[%s0 + $0x198] sm:$0xff]
  %v87 = vld [vmem:[%s0 + $0x1a0] sm:$0xf]
  %v88 = vld [vmem:[%s0 + $0x1a4] sm:$0xff]
  %v89 = vld [vmem:[%s0 + $0x1ac] sm:$0xf]
  %v90 = vld [vmem:[%s0 + $0x1b0] sm:$0xff]
  %v91 = vld [vmem:[%s0 + $0x1b8] sm:$0xf]
  %v92 = vld [vmem:[%s0 + $0x1bc] sm:$0xff]
  %v93 = vld [vmem:[%s0 + $0x1c4] sm:$0xf]
  %v94 = vld [vmem:[%s0 + $0x1c8] sm:$0xff]
  %v95 = vld [vmem:[%s0 + $0x1d0] sm:$0xf]
  %v96 = vld [vmem:[%s0 + $0x1d4] sm:$0xff]
  %v97 = vld [vmem:[%s0 + $0x1dc] sm:$0xf]
  %v98 = vld [vmem:[%s0 + $0x1e0] sm:$0xff]
  %v99 = vld [vmem:[%s0 + $0x1e8] sm:$0xf]
  %v100 = vld [vmem:[%s0 + $0x1ec] sm:$0xff]
  %v101 = vld [vmem:[%s0 + $0x1f4] sm:$0xf]
  %v102 = vld [vmem:[%s0 + $0x1f8] sm:$0xff]
  %v103 = vld [vmem:[%s0 + $0x200] sm:$0xf]
  %v104 = vld [vmem:[%s0 + $0x204] sm:$0xff]
  %v105 = vld [vmem:[%s0 + $0x20c] sm:$0xf]
  %v106 = vld [vmem:[%s0 + $0x210] sm:$0xff]
  %v107 = vld [vmem:[%s0 + $0x218] sm:$0xf]
  %v108 = vld [vmem:[%s0 + $0x21c] sm:$0xff]
  %v109 = vld [vmem:[%s0 + $0x224] sm:$0xf]
  %v110 = vld [vmem:[%s0 + $0x228] sm:$0xff]
  %v111 = vld [vmem:[%s0 + $0x230] sm:$0xf]
  %v112 = vld [vmem:[%s0 + $0x234] sm:$0xff]
  %v113 = vld [vmem:[%s0 + $0x23c] sm:$0xf]
  %v114 = vld [vmem:[%s0 + $0x240] sm:$0xff]
  %v115 = vld [vmem:[%s0 + $0x248] sm:$0xf]
  %v116 = vld [vmem:[%s0 + $0x24c] sm:$0xff]
  %v117 = vld [vmem:[%s0 + $0x254] sm:$0xf]
  %v118 = vld [vmem:[%s0 + $0x258] sm:$0xff]
  %v119 = vld [vmem:[%s0 + $0x260] sm:$0xf]
  %v120 = vld [vmem:[%s0 + $0x264] sm:$0xff]
  %v121 = vld [vmem:[%s0 + $0x26c] sm:$0xf]
  %v122 = vld [vmem:[%s0 + $0x270] sm:$0xff]
  %v123 = vld [vmem:[%s0 + $0x278] sm:$0xf]
  %v124 = vld [vmem:[%s0 + $0x27c] sm:$0xff]
  %v125 = vld [vmem:[%s0 + $0x284] sm:$0xf]
  %v126 = vld [vmem:[%s0 + $0x288] sm:$0xff]
  %v127 = vld [vmem:[%s0 + $0x290] sm:$0xf]
  %v128 = vld [vmem:[%s0 + $0x294] sm:$0xff]
  %v129 = vld [vmem:[%s0 + $0x29c] sm:$0xf]
  %v130 = vld [vmem:[%s0 + $0x2a0] sm:$0xff]
  %v131 = vld [vmem:[%s0 + $0x2a8] sm:$0xf]
  %v132 = vld [vmem:[%s0 + $0x2ac] sm:$0xff]
  %v133 = vld [vmem:[%s0 + $0x2b4] sm:$0xf]
  %v134 = vld [vmem:[%s0 + $0x2b8] sm:$0xff]
  %v135 = vld [vmem:[%s0 + $0x2c0] sm:$0xf]
  %v136 = vld [vmem:[%s0 + $0x2c4] sm:$0xff]
  %v137 = vld [vmem:[%s0 + $0x2cc] sm:$0xf]
  %v138 = vld [vmem:[%s0 + $0x2d0] sm:$0xff]
  %v139 = vld [vmem:[%s0 + $0x2d8] sm:$0xf]
  %v140 = vld [vmem:[%s0 + $0x2dc] sm:$0xff]
  %v141 = vld [vmem:[%s0 + $0x2e4] sm:$0xf]
  %v142 = vld [vmem:[%s0 + $0x2e8] sm:$0xff]
  %v143 = vld [vmem:[%s0 + $0x2f0] sm:$0xf]
  %v144 = vld [vmem:[%s0 + $0x2f4] sm:$0xff]
  %v145 = vld [vmem:[%s0 + $0x2fc] sm:$0xf]
  %v146 = vld [vmem:[%s1] sm:$0xf]
  %v147 = vld [vmem:[%s1 + $0x4] sm:$0xf]
  %v148 = vld [vmem:[%s1 + $0x8] sm:$0xf]
  %v149 = vld [vmem:[%s1 + $0xc] sm:$0xf]
  %v150 = vld [vmem:[%s1 + $0x10] sm:$0xf]
  %v151 = vld [vmem:[%s1 + $0x14] sm:$0xf]
  %v152 = vld [vmem:[%s1 + $0x18] sm:$0xf]
  %v153 = vld [vmem:[%s1 + $0x1c] sm:$0xf]
  %v154 = vld [vmem:[%s1 + $0x20] sm:$0xf]
  %v155 = vld [vmem:[%s1 + $0x24] sm:$0xf]
  %v156 = vld [vmem:[%s1 + $0x28] sm:$0xf]
  %v157 = vld [vmem:[%s1 + $0x2c] sm:$0xf]
  %v158 = vld [vmem:[%s1 + $0x30] sm:$0xf]
  %v159 = vld [vmem:[%s1 + $0x34] sm:$0xf]
  %v160 = vld [vmem:[%s1 + $0x38] sm:$0xf]
  %v161 = vld [vmem:[%s1 + $0x3c] sm:$0xf]
  %v162 = vld [vmem:[%s1 + $0x40] sm:$0xf]
  %v163 = vld [vmem:[%s1 + $0x44] sm:$0xf]
  %v164 = vld [vmem:[%s1 + $0x48] sm:$0xf]
  %v165 = vld [vmem:[%s1 + $0x4c] sm:$0xf]
  %v166 = vld [vmem:[%s1 + $0x50] sm:$0xf]
  %v167 = vld [vmem:[%s1 + $0x54] sm:$0xf]
  %v168 = vld [vmem:[%s1 + $0x58] sm:$0xf]
  %v169 = vld [vmem:[%s1 + $0x5c] sm:$0xf]
  %v170 = vld [vmem:[%s1 + $0x60] sm:$0xf]
  %v171 = vld [vmem:[%s1 + $0x64] sm:$0xf]
  %v172 = vld [vmem:[%s1 + $0x68] sm:$0xf]
  %v173 = vld [vmem:[%s1 + $0x6c] sm:$0xf]
  %v174 = vld [vmem:[%s1 + $0x70] sm:$0xf]
  %v175 = vld [vmem:[%s1 + $0x74] sm:$0xf]
  %v176 = vld [vmem:[%s1 + $0x78] sm:$0xf]
  %v177 = vld [vmem:[%s1 + $0x7c] sm:$0xf]
  %v178 = vld [vmem:[%s1 + $0x80] sm:$0xf]
  %v179 = vld [vmem:[%s1 + $0x84] sm:$0xf]
  %v180 = vld [vmem:[%s1 + $0x88] sm:$0xf]
  %v181 = vld [vmem:[%s1 + $0x8c] sm:$0xf]
  %v310 = vunpack.c.l.b16 %v18
  %v311 = vunpack.c.h.b16 %v18
  %v312 = vunpack.c.l.b16 %v19
  %v313 = vunpack.c.l.b16 %v20
  %v314 = vunpack.c.h.b16 %v20
  %v315 = vunpack.c.l.b16 %v21
  %v316 = vunpack.c.l.b16 %v22
  %v317 = vunpack.c.h.b16 %v22
  %v318 = vunpack.c.l.b16 %v23
  %v319 = vunpack.c.l.b16 %v24
  %v320 = vunpack.c.h.b16 %v24
  %v321 = vunpack.c.l.b16 %v25
  %v322 = vunpack.c.l.b16 %v26
  %v323 = vunpack.c.h.b16 %v26
  %v324 = vunpack.c.l.b16 %v27
  %v325 = vunpack.c.l.b16 %v28
  %v326 = vunpack.c.h.b16 %v28
  %v327 = vunpack.c.l.b16 %v29
  %v328 = vunpack.c.l.b16 %v30
  %v329 = vunpack.c.h.b16 %v30
  %v330 = vunpack.c.l.b16 %v31
  %v331 = vunpack.c.l.b16 %v32
  %v332 = vunpack.c.h.b16 %v32
  %v333 = vunpack.c.l.b16 %v33
  %v334 = vunpack.c.l.b16 %v34
  %v335 = vunpack.c.h.b16 %v34
  %v336 = vunpack.c.l.b16 %v35
  %v337 = vunpack.c.l.b16 %v36
  %v338 = vunpack.c.h.b16 %v36
  %v339 = vunpack.c.l.b16 %v37
  %v340 = vunpack.c.l.b16 %v38
  %v341 = vunpack.c.h.b16 %v38
  %v342 = vunpack.c.l.b16 %v39
  %v343 = vunpack.c.l.b16 %v40
  %v344 = vunpack.c.h.b16 %v40
  %v345 = vunpack.c.l.b16 %v41
  %v346 = vunpack.c.l.b16 %v42
  %v347 = vunpack.c.h.b16 %v42
  %v348 = vunpack.c.l.b16 %v43
  %v349 = vunpack.c.l.b16 %v44
  %v350 = vunpack.c.h.b16 %v44
  %v351 = vunpack.c.l.b16 %v45
  %v352 = vunpack.c.l.b16 %v46
  %v353 = vunpack.c.h.b16 %v46
  %v354 = vunpack.c.l.b16 %v47
  %v355 = vunpack.c.l.b16 %v48
  %v356 = vunpack.c.h.b16 %v48
  %v357 = vunpack.c.l.b16 %v49
  %v358 = vunpack.c.l.b16 %v50
  %v359 = vunpack.c.h.b16 %v50
  %v360 = vunpack.c.l.b16 %v51
  %v361 = vunpack.c.l.b16 %v52
  %v362 = vunpack.c.h.b16 %v52
  %v363 = vunpack.c.l.b16 %v53
  %v364 = vunpack.c.l.b16 %v54
  %v365 = vunpack.c.h.b16 %v54
  %v366 = vunpack.c.l.b16 %v55
  %v367 = vunpack.c.l.b16 %v56
  %v368 = vunpack.c.h.b16 %v56
  %v369 = vunpack.c.l.b16 %v57
  %v370 = vunpack.c.l.b16 %v58
  %v371 = vunpack.c.h.b16 %v58
  %v372 = vunpack.c.l.b16 %v59
  %v373 = vunpack.c.l.b16 %v60
  %v374 = vunpack.c.h.b16 %v60
  %v375 = vunpack.c.l.b16 %v61
  %v376 = vunpack.c.l.b16 %v62
  %v377 = vunpack.c.h.b16 %v62
  %v378 = vunpack.c.l.b16 %v63
  %v379 = vunpack.c.l.b16 %v64
  %v380 = vunpack.c.h.b16 %v64
  %v381 = vunpack.c.l.b16 %v65
  %v382 = vunpack.c.l.b16 %v66
  %v383 = vunpack.c.h.b16 %v66
  %v384 = vunpack.c.l.b16 %v67
  %v385 = vunpack.c.l.b16 %v68
  %v386 = vunpack.c.h.b16 %v68
  %v387 = vunpack.c.l.b16 %v69
  %v388 = vunpack.c.l.b16 %v70
  %v389 = vunpack.c.h.b16 %v70
  %v390 = vunpack.c.l.b16 %v71
  %v391 = vunpack.c.l.b16 %v72
  %v392 = vunpack.c.h.b16 %v72
  %v393 = vunpack.c.l.b16 %v73
  %v394 = vunpack.c.l.b16 %v74
  %v395 = vunpack.c.h.b16 %v74
  %v396 = vunpack.c.l.b16 %v75
  %v397 = vunpack.c.l.b16 %v76
  %v398 = vunpack.c.h.b16 %v76
  %v399 = vunpack.c.l.b16 %v77
  %v400 = vunpack.c.l.b16 %v78
  %v401 = vunpack.c.h.b16 %v78
  %v402 = vunpack.c.l.b16 %v79
  %v403 = vunpack.c.l.b16 %v80
  %v404 = vunpack.c.h.b16 %v80
  %v405 = vunpack.c.l.b16 %v81
  %v406 = vunpack.c.l.b16 %v82
  %v407 = vunpack.c.h.b16 %v82
  %v408 = vunpack.c.l.b16 %v83
  %v409 = vunpack.c.l.b16 %v84
  %v410 = vunpack.c.h.b16 %v84
  %v411 = vunpack.c.l.b16 %v85
  %v412 = vunpack.c.l.b16 %v86
  %v413 = vunpack.c.h.b16 %v86
  %v414 = vunpack.c.l.b16 %v87
  %v415 = vunpack.c.l.b16 %v88
  %v416 = vunpack.c.h.b16 %v88
  %v417 = vunpack.c.l.b16 %v89
  %v418 = vunpack.c.l.b16 %v90
  %v419 = vunpack.c.h.b16 %v90
  %v420 = vunpack.c.l.b16 %v91
  %v421 = vunpack.c.l.b16 %v92
  %v422 = vunpack.c.h.b16 %v92
  %v423 = vunpack.c.l.b16 %v93
  %v424 = vunpack.c.l.b16 %v94
  %v425 = vunpack.c.h.b16 %v94
  %v426 = vunpack.c.l.b16 %v95
  %v427 = vunpack.c.l.b16 %v96
  %v428 = vunpack.c.h.b16 %v96
  %v429 = vunpack.c.l.b16 %v97
  %v430 = vunpack.c.l.b16 %v98
  %v431 = vunpack.c.h.b16 %v98
  %v432 = vunpack.c.l.b16 %v99
  %v433 = vunpack.c.l.b16 %v100
  %v434 = vunpack.c.h.b16 %v100
  %v435 = vunpack.c.l.b16 %v101
  %v436 = vunpack.c.l.b16 %v102
  %v437 = vunpack.c.h.b16 %v102
  %v438 = vunpack.c.l.b16 %v103
  %v439 = vunpack.c.l.b16 %v104
  %v440 = vunpack.c.h.b16 %v104
  %v441 = vunpack.c.l.b16 %v105
  %v442 = vunpack.c.l.b16 %v106
  %v443 = vunpack.c.h.b16 %v106
  %v444 = vunpack.c.l.b16 %v107
  %v445 = vunpack.c.l.b16 %v108
  %v446 = vunpack.c.h.b16 %v108
  %v447 = vunpack.c.l.b16 %v109
  %v448 = vunpack.c.l.b16 %v110
  %v449 = vunpack.c.h.b16 %v110
  %v450 = vunpack.c.l.b16 %v111
  %v451 = vunpack.c.l.b16 %v112
  %v452 = vunpack.c.h.b16 %v112
  %v453 = vunpack.c.l.b16 %v113
  %v454 = vunpack.c.l.b16 %v114
  %v455 = vunpack.c.h.b16 %v114
  %v456 = vunpack.c.l.b16 %v115
  %v457 = vunpack.c.l.b16 %v116
  %v458 = vunpack.c.h.b16 %v116
  %v459 = vunpack.c.l.b16 %v117
  %v460 = vunpack.c.l.b16 %v118
  %v461 = vunpack.c.h.b16 %v118
  %v462 = vunpack.c.l.b16 %v119
  %v463 = vunpack.c.l.b16 %v120
  %v464 = vunpack.c.h.b16 %v120
  %v465 = vunpack.c.l.b16 %v121
  %v466 = vunpack.c.l.b16 %v122
  %v467 = vunpack.c.h.b16 %v122
  %v468 = vunpack.c.l.b16 %v123
  %v469 = vunpack.c.l.b16 %v124
  %v470 = vunpack.c.h.b16 %v124
  %v471 = vunpack.c.l.b16 %v125
  %v472 = vunpack.c.l.b16 %v126
  %v473 = vunpack.c.h.b16 %v126
  %v474 = vunpack.c.l.b16 %v127
  %v475 = vunpack.c.l.b16 %v128
  %v476 = vunpack.c.h.b16 %v128
  %v477 = vunpack.c.l.b16 %v129
  %v478 = vunpack.c.l.b16 %v130
  %v479 = vunpack.c.h.b16 %v130
  %v480 = vunpack.c.l.b16 %v131
  %v481 = vunpack.c.l.b16 %v132
  %v482 = vunpack.c.h.b16 %v132
  %v483 = vunpack.c.l.b16 %v133
  %v484 = vunpack.c.l.b16 %v134
  %v485 = vunpack.c.h.b16 %v134
  %v486 = vunpack.c.l.b16 %v135
  %v487 = vunpack.c.l.b16 %v136
  %v488 = vunpack.c.h.b16 %v136
  %v489 = vunpack.c.l.b16 %v137
  %v490 = vunpack.c.l.b16 %v138
  %v491 = vunpack.c.h.b16 %v138
  %v492 = vunpack.c.l.b16 %v139
  %v493 = vunpack.c.l.b16 %v140
  %v494 = vunpack.c.h.b16 %v140
  %v495 = vunpack.c.l.b16 %v141
  %v496 = vunpack.c.l.b16 %v142
  %v497 = vunpack.c.h.b16 %v142
  %v498 = vunpack.c.l.b16 %v143
  %v499 = vunpack.c.l.b16 %v144
  %v500 = vunpack.c.h.b16 %v144
  %v501 = vunpack.c.l.b16 %v145
  %v502 = vpack.c.b16 %v313, %v310
  %v503 = vpack.c.b16 %v314, %v311
  %v504 = vpack.c.b16 %v315, %v312
  %v505 = vpack.c.b16 %v319, %v316
  %v506 = vpack.c.b16 %v320, %v317
  %v507 = vpack.c.b16 %v321, %v318
  %v508 = vpack.c.b16 %v325, %v322
  %v509 = vpack.c.b16 %v326, %v323
  %v510 = vpack.c.b16 %v327, %v324
  %v511 = vpack.c.b16 %v331, %v328
  %v512 = vpack.c.b16 %v332, %v329
  %v513 = vpack.c.b16 %v333, %v330
  %v514 = vpack.c.b16 %v337, %v334
  %v515 = vpack.c.b16 %v338, %v335
  %v516 = vpack.c.b16 %v339, %v336
  %v517 = vpack.c.b16 %v343, %v340
  %v518 = vpack.c.b16 %v344, %v341
  %v519 = vpack.c.b16 %v345, %v342
  %v520 = vpack.c.b16 %v349, %v346
  %v521 = vpack.c.b16 %v350, %v347
  %v522 = vpack.c.b16 %v351, %v348
  %v523 = vpack.c.b16 %v355, %v352
  %v524 = vpack.c.b16 %v356, %v353
  %v525 = vpack.c.b16 %v357, %v354
  %v526 = vpack.c.b16 %v361, %v358
  %v527 = vpack.c.b16 %v362, %v359
  %v528 = vpack.c.b16 %v363, %v360
  %v529 = vpack.c.b16 %v367, %v364
  %v530 = vpack.c.b16 %v368, %v365
  %v531 = vpack.c.b16 %v369, %v366
  %v532 = vpack.c.b16 %v373, %v370
  %v533 = vpack.c.b16 %v374, %v371
  %v534 = vpack.c.b16 %v375, %v372
  %v535 = vpack.c.b16 %v379, %v376
  %v536 = vpack.c.b16 %v380, %v377
  %v537 = vpack.c.b16 %v381, %v378
  %v538 = vpack.c.b16 %v385, %v382
  %v539 = vpack.c.b16 %v386, %v383
  %v540 = vpack.c.b16 %v387, %v384
  %v541 = vpack.c.b16 %v391, %v388
  %v542 = vpack.c.b16 %v392, %v389
  %v543 = vpack.c.b16 %v393, %v390
  %v544 = vpack.c.b16 %v397, %v394
  %v545 = vpack.c.b16 %v398, %v395
  %v546 = vpack.c.b16 %v399, %v396
  %v547 = vpack.c.b16 %v403, %v400
  %v548 = vpack.c.b16 %v404, %v401
  %v549 = vpack.c.b16 %v405, %v402
  %v550 = vpack.c.b16 %v409, %v406
  %v551 = vpack.c.b16 %v410, %v407
  %v552 = vpack.c.b16 %v411, %v408
  %v553 = vpack.c.b16 %v415, %v412
  %v554 = vpack.c.b16 %v416, %v413
  %v555 = vpack.c.b16 %v417, %v414
  %v556 = vpack.c.b16 %v421, %v418
  %v557 = vpack.c.b16 %v422, %v419
  %v558 = vpack.c.b16 %v423, %v420
  %v559 = vpack.c.b16 %v427, %v424
  %v560 = vpack.c.b16 %v428, %v425
  %v561 = vpack.c.b16 %v429, %v426
  %v562 = vpack.c.b16 %v433, %v430
  %v563 = vpack.c.b16 %v434, %v431
  %v564 = vpack.c.b16 %v435, %v432
  %v565 = vpack.c.b16 %v439, %v436
  %v566 = vpack.c.b16 %v440, %v437
  %v567 = vpack.c.b16 %v441, %v438
  %v568 = vpack.c.b16 %v445, %v442
  %v569 = vpack.c.b16 %v446, %v443
  %v570 = vpack.c.b16 %v447, %v444
  %v571 = vpack.c.b16 %v451, %v448
  %v572 = vpack.c.b16 %v452, %v449
  %v573 = vpack.c.b16 %v453, %v450
  %v574 = vpack.c.b16 %v457, %v454
  %v575 = vpack.c.b16 %v458, %v455
  %v576 = vpack.c.b16 %v459, %v456
  %v577 = vpack.c.b16 %v463, %v460
  %v578 = vpack.c.b16 %v464, %v461
  %v579 = vpack.c.b16 %v465, %v462
  %v580 = vpack.c.b16 %v469, %v466
  %v581 = vpack.c.b16 %v470, %v467
  %v582 = vpack.c.b16 %v471, %v468
  %v583 = vpack.c.b16 %v475, %v472
  %v584 = vpack.c.b16 %v476, %v473
  %v585 = vpack.c.b16 %v477, %v474
  %v586 = vpack.c.b16 %v481, %v478
  %v587 = vpack.c.b16 %v482, %v479
  %v588 = vpack.c.b16 %v483, %v480
  %v589 = vpack.c.b16 %v487, %v484
  %v590 = vpack.c.b16 %v488, %v485
  %v591 = vpack.c.b16 %v489, %v486
  %v592 = vpack.c.b16 %v493, %v490
  %v593 = vpack.c.b16 %v494, %v491
  %v594 = vpack.c.b16 %v495, %v492
  %v595 = vpack.c.b16 %v499, %v496
  %v596 = vpack.c.b16 %v500, %v497
  %v597 = vpack.c.b16 %v501, %v498
  %v698 = vunpack.c.l.b16 %v146
  %v699 = vunpack.c.l.b16 %v147
  %v700 = vunpack.c.l.b16 %v148
  %v701 = vunpack.c.l.b16 %v149
  %v702 = vunpack.c.l.b16 %v150
  %v703 = vunpack.c.l.b16 %v151
  %v704 = vunpack.c.l.b16 %v152
  %v705 = vunpack.c.l.b16 %v153
  %v706 = vunpack.c.l.b16 %v154
  %v707 = vunpack.c.l.b16 %v155
  %v708 = vunpack.c.l.b16 %v156
  %v709 = vunpack.c.l.b16 %v157
  %v710 = vunpack.c.l.b16 %v158
  %v711 = vunpack.c.l.b16 %v159
  %v712 = vunpack.c.l.b16 %v160
  %v713 = vunpack.c.l.b16 %v161
  %v714 = vunpack.c.l.b16 %v162
  %v715 = vunpack.c.l.b16 %v163
  %v716 = vunpack.c.l.b16 %v164
  %v717 = vunpack.c.l.b16 %v165
  %v718 = vunpack.c.l.b16 %v166
  %v719 = vunpack.c.l.b16 %v167
  %v720 = vunpack.c.l.b16 %v168
  %v721 = vunpack.c.l.b16 %v169
  %v722 = vunpack.c.l.b16 %v170
  %v723 = vunpack.c.l.b16 %v171
  %v724 = vunpack.c.l.b16 %v172
  %v725 = vunpack.c.l.b16 %v173
  %v726 = vunpack.c.l.b16 %v174
  %v727 = vunpack.c.l.b16 %v175
  %v728 = vunpack.c.l.b16 %v176
  %v729 = vunpack.c.l.b16 %v177
  %v730 = vunpack.c.l.b16 %v178
  %v731 = vunpack.c.l.b16 %v179
  %v732 = vunpack.c.l.b16 %v180
  %v733 = vunpack.c.l.b16 %v181
  %v734 = vpack.c.b16 %v699, %v698
  %v735 = vpack.c.b16 %v701, %v700
  %v736 = vpack.c.b16 %v703, %v702
  %v737 = vpack.c.b16 %v705, %v704
  %v738 = vpack.c.b16 %v707, %v706
  %v739 = vpack.c.b16 %v709, %v708
  %v740 = vpack.c.b16 %v711, %v710
  %v741 = vpack.c.b16 %v713, %v712
  %v742 = vpack.c.b16 %v715, %v714
  %v743 = vpack.c.b16 %v717, %v716
  %v744 = vpack.c.b16 %v719, %v718
  %v745 = vpack.c.b16 %v721, %v720
  %v746 = vpack.c.b16 %v723, %v722
  %v747 = vpack.c.b16 %v725, %v724
  %v748 = vpack.c.b16 %v727, %v726
  %v749 = vpack.c.b16 %v729, %v728
  %v750 = vpack.c.b16 %v731, %v730
  %v751 = vpack.c.b16 %v733, %v732
  %vm770 = vcmask 261120
  %v772 = vsel %vm770, %v504, 0
  %v775 = vsel %vm770, %v507, 0
  %v778 = vsel %vm770, %v510, 0
  %v781 = vsel %vm770, %v513, 0
  %v784 = vsel %vm770, %v516, 0
  %v787 = vsel %vm770, %v519, 0
  %v790 = vsel %vm770, %v522, 0
  %v793 = vsel %vm770, %v525, 0
  %v796 = vsel %vm770, %v528, 0
  %v799 = vsel %vm770, %v531, 0
  %v802 = vsel %vm770, %v534, 0
  %v805 = vsel %vm770, %v537, 0
  %v808 = vsel %vm770, %v540, 0
  %v811 = vsel %vm770, %v543, 0
  %v814 = vsel %vm770, %v546, 0
  %v817 = vsel %vm770, %v549, 0
  %v820 = vsel %vm770, %v552, 0
  %v823 = vsel %vm770, %v555, 0
  %v826 = vsel %vm770, %v558, 0
  %v829 = vsel %vm770, %v561, 0
  %v832 = vsel %vm770, %v564, 0
  %v835 = vsel %vm770, %v567, 0
  %v838 = vsel %vm770, %v570, 0
  %v841 = vsel %vm770, %v573, 0
  %v844 = vsel %vm770, %v576, 0
  %v847 = vsel %vm770, %v579, 0
  %v850 = vsel %vm770, %v582, 0
  %v853 = vsel %vm770, %v585, 0
  %v856 = vsel %vm770, %v588, 0
  %v859 = vsel %vm770, %v591, 0
  %v862 = vsel %vm770, %v594, 0
  %v865 = vsel %vm770, %v597, 0
  %867 = vmatpush.bf16.msra.mxu0 %v741
  %868 = vmatpush.bf16.msra.mxu0 %v740
  %869 = vmatpush.bf16.msra.mxu0 %v739
  %870 = vmatpush.bf16.msra.mxu0 %v738
  %871 = vmatpush.bf16.msra.mxu0 %v737
  %872 = vmatpush.bf16.msra.mxu0 %v736
  %873 = vmatpush.bf16.msra.mxu0 %v735
  %874 = vmatpush.bf16.msra.mxu0 %v734
  %875 = vmatmul.bf16.gmra.mxu0 %v502
  %v876 = vpop.f32.mrf.mxu0
  %v877 = vadd.f32 0.0, %v876
  %v878 = vpop.f32.mrf.mxu0
  %v879 = vadd.f32 0.0, %v878
  %880 = vmatmul.bf16.gmra.mxu0 %v505
  %v881 = vpop.f32.mrf.mxu0
  %v882 = vadd.f32 0.0, %v881
  %v883 = vpop.f32.mrf.mxu0
  %v884 = vadd.f32 0.0, %v883
  %885 = vmatmul.bf16.gmra.mxu0 %v508
  %v886 = vpop.f32.mrf.mxu0
  %v887 = vadd.f32 0.0, %v886
  %v888 = vpop.f32.mrf.mxu0
  %v889 = vadd.f32 0.0, %v888
  %890 = vmatmul.bf16.gmra.mxu0 %v511
  %v891 = vpop.f32.mrf.mxu0
  %v892 = vadd.f32 0.0, %v891
  %v893 = vpop.f32.mrf.mxu0
  %v894 = vadd.f32 0.0, %v893
  %895 = vmatmul.bf16.gmra.mxu0 %v514
  %v896 = vpop.f32.mrf.mxu0
  %v897 = vadd.f32 0.0, %v896
  %v898 = vpop.f32.mrf.mxu0
  %v899 = vadd.f32 0.0, %v898
  %900 = vmatmul.bf16.gmra.mxu0 %v517
  %v901 = vpop.f32.mrf.mxu0
  %v902 = vadd.f32 0.0, %v901
  %v903 = vpop.f32.mrf.mxu0
  %v904 = vadd.f32 0.0, %v903
  %905 = vmatmul.bf16.gmra.mxu0 %v520
  %v906 = vpop.f32.mrf.mxu0
  %v907 = vadd.f32 0.0, %v906
  %v908 = vpop.f32.mrf.mxu0
  %v909 = vadd.f32 0.0, %v908
  %910 = vmatmul.bf16.gmra.mxu0 %v523
  %v911 = vpop.f32.mrf.mxu0
  %v912 = vadd.f32 0.0, %v911
  %v913 = vpop.f32.mrf.mxu0
  %v914 = vadd.f32 0.0, %v913
  %915 = vmatmul.bf16.gmra.mxu0 %v526
  %v916 = vpop.f32.mrf.mxu0
  %v917 = vadd.f32 0.0, %v916
  %v918 = vpop.f32.mrf.mxu0
  %v919 = vadd.f32 0.0, %v918
  %920 = vmatmul.bf16.gmra.mxu0 %v529
  %v921 = vpop.f32.mrf.mxu0
  %v922 = vadd.f32 0.0, %v921
  %v923 = vpop.f32.mrf.mxu0
  %v924 = vadd.f32 0.0, %v923
  %925 = vmatmul.bf16.gmra.mxu0 %v532
  %v926 = vpop.f32.mrf.mxu0
  %v927 = vadd.f32 0.0, %v926
  %v928 = vpop.f32.mrf.mxu0
  %v929 = vadd.f32 0.0, %v928
  %930 = vmatmul.bf16.gmra.mxu0 %v535
  %v931 = vpop.f32.mrf.mxu0
  %v932 = vadd.f32 0.0, %v931
  %v933 = vpop.f32.mrf.mxu0
  %v934 = vadd.f32 0.0, %v933
  %935 = vmatmul.bf16.gmra.mxu0 %v538
  %v936 = vpop.f32.mrf.mxu0
  %v937 = vadd.f32 0.0, %v936
  %v938 = vpop.f32.mrf.mxu0
  %v939 = vadd.f32 0.0, %v938
  %940 = vmatmul.bf16.gmra.mxu0 %v541
  %v941 = vpop.f32.mrf.mxu0
  %v942 = vadd.f32 0.0, %v941
  %v943 = vpop.f32.mrf.mxu0
  %v944 = vadd.f32 0.0, %v943
  %945 = vmatmul.bf16.gmra.mxu0 %v544
  %v946 = vpop.f32.mrf.mxu0
  %v947 = vadd.f32 0.0, %v946
  %v948 = vpop.f32.mrf.mxu0
  %v949 = vadd.f32 0.0, %v948
  %950 = vmatmul.bf16.gmra.mxu0 %v547
  %v951 = vpop.f32.mrf.mxu0
  %v952 = vadd.f32 0.0, %v951
  %v953 = vpop.f32.mrf.mxu0
  %v954 = vadd.f32 0.0, %v953
  %955 = vmatmul.bf16.gmra.mxu0 %v550
  %v956 = vpop.f32.mrf.mxu0
  %v957 = vadd.f32 0.0, %v956
  %v958 = vpop.f32.mrf.mxu0
  %v959 = vadd.f32 0.0, %v958
  %960 = vmatmul.bf16.gmra.mxu0 %v553
  %v961 = vpop.f32.mrf.mxu0
  %v962 = vadd.f32 0.0, %v961
  %v963 = vpop.f32.mrf.mxu0
  %v964 = vadd.f32 0.0, %v963
  %965 = vmatmul.bf16.gmra.mxu0 %v556
  %v966 = vpop.f32.mrf.mxu0
  %v967 = vadd.f32 0.0, %v966
  %v968 = vpop.f32.mrf.mxu0
  %v969 = vadd.f32 0.0, %v968
  %970 = vmatmul.bf16.gmra.mxu0 %v559
  %v971 = vpop.f32.mrf.mxu0
  %v972 = vadd.f32 0.0, %v971
  %v973 = vpop.f32.mrf.mxu0
  %v974 = vadd.f32 0.0, %v973
  %975 = vmatmul.bf16.gmra.mxu0 %v562
  %v976 = vpop.f32.mrf.mxu0
  %v977 = vadd.f32 0.0, %v976
  %v978 = vpop.f32.mrf.mxu0
  %v979 = vadd.f32 0.0, %v978
  %980 = vmatmul.bf16.gmra.mxu0 %v565
  %v981 = vpop.f32.mrf.mxu0
  %v982 = vadd.f32 0.0, %v981
  %v983 = vpop.f32.mrf.mxu0
  %v984 = vadd.f32 0.0, %v983
  %985 = vmatmul.bf16.gmra.mxu0 %v568
  %v986 = vpop.f32.mrf.mxu0
  %v987 = vadd.f32 0.0, %v986
  %v988 = vpop.f32.mrf.mxu0
  %v989 = vadd.f32 0.0, %v988
  %990 = vmatmul.bf16.gmra.mxu0 %v571
  %v991 = vpop.f32.mrf.mxu0
  %v992 = vadd.f32 0.0, %v991
  %v993 = vpop.f32.mrf.mxu0
  %v994 = vadd.f32 0.0, %v993
  %995 = vmatmul.bf16.gmra.mxu0 %v574
  %v996 = vpop.f32.mrf.mxu0
  %v997 = vadd.f32 0.0, %v996
  %v998 = vpop.f32.mrf.mxu0
  %v999 = vadd.f32 0.0, %v998
  %1000 = vmatmul.bf16.gmra.mxu0 %v577
  %v1001 = vpop.f32.mrf.mxu0
  %v1002 = vadd.f32 0.0, %v1001
  %v1003 = vpop.f32.mrf.mxu0
  %v1004 = vadd.f32 0.0, %v1003
  %1005 = vmatmul.bf16.gmra.mxu0 %v580
  %v1006 = vpop.f32.mrf.mxu0
  %v1007 = vadd.f32 0.0, %v1006
  %v1008 = vpop.f32.mrf.mxu0
  %v1009 = vadd.f32 0.0, %v1008
  %1010 = vmatmul.bf16.gmra.mxu0 %v583
  %v1011 = vpop.f32.mrf.mxu0
  %v1012 = vadd.f32 0.0, %v1011
  %v1013 = vpop.f32.mrf.mxu0
  %v1014 = vadd.f32 0.0, %v1013
  %1015 = vmatmul.bf16.gmra.mxu0 %v586
  %v1016 = vpop.f32.mrf.mxu0
  %v1017 = vadd.f32 0.0, %v1016
  %v1018 = vpop.f32.mrf.mxu0
  %v1019 = vadd.f32 0.0, %v1018
  %1020 = vmatmul.bf16.gmra.mxu0 %v589
  %v1021 = vpop.f32.mrf.mxu0
  %v1022 = vadd.f32 0.0, %v1021
  %v1023 = vpop.f32.mrf.mxu0
  %v1024 = vadd.f32 0.0, %v1023
  %1025 = vmatmul.bf16.gmra.mxu0 %v592
  %v1026 = vpop.f32.mrf.mxu0
  %v1027 = vadd.f32 0.0, %v1026
  %v1028 = vpop.f32.mrf.mxu0
  %v1029 = vadd.f32 0.0, %v1028
  %1030 = vmatmul.bf16.gmra.mxu0 %v595
  %v1031 = vpop.f32.mrf.mxu0
  %v1032 = vadd.f32 0.0, %v1031
  %v1033 = vpop.f32.mrf.mxu0
  %v1034 = vadd.f32 0.0, %v1033
  %1035 = vdwg.mxu0
  %1036 = vmatpush.bf16.msra.mxu0 %v749
  %1037 = vmatpush.bf16.msra.mxu0 %v748
  %1038 = vmatpush.bf16.msra.mxu0 %v747
  %1039 = vmatpush.bf16.msra.mxu0 %v746
  %1040 = vmatpush.bf16.msra.mxu0 %v745
  %1041 = vmatpush.bf16.msra.mxu0 %v744
  %1042 = vmatpush.bf16.msra.mxu0 %v743
  %1043 = vmatpush.bf16.msra.mxu0 %v742
  %1044 = vmatmul.bf16.gmra.mxu0 %v503
  %v1045 = vpop.f32.mrf.mxu0
  %v1046 = vadd.f32 %v877, %v1045
  %v1047 = vpop.f32.mrf.mxu0
  %v1048 = vadd.f32 %v879, %v1047
  %1049 = vmatmul.bf16.gmra.mxu0 %v506
  %v1050 = vpop.f32.mrf.mxu0
  %v1051 = vadd.f32 %v882, %v1050
  %v1052 = vpop.f32.mrf.mxu0
  %v1053 = vadd.f32 %v884, %v1052
  %1054 = vmatmul.bf16.gmra.mxu0 %v509
  %v1055 = vpop.f32.mrf.mxu0
  %v1056 = vadd.f32 %v887, %v1055
  %v1057 = vpop.f32.mrf.mxu0
  %v1058 = vadd.f32 %v889, %v1057
  %1059 = vmatmul.bf16.gmra.mxu0 %v512
  %v1060 = vpop.f32.mrf.mxu0
  %v1061 = vadd.f32 %v892, %v1060
  %v1062 = vpop.f32.mrf.mxu0
  %v1063 = vadd.f32 %v894, %v1062
  %1064 = vmatmul.bf16.gmra.mxu0 %v515
  %v1065 = vpop.f32.mrf.mxu0
  %v1066 = vadd.f32 %v897, %v1065
  %v1067 = vpop.f32.mrf.mxu0
  %v1068 = vadd.f32 %v899, %v1067
  %1069 = vmatmul.bf16.gmra.mxu0 %v518
  %v1070 = vpop.f32.mrf.mxu0
  %v1071 = vadd.f32 %v902, %v1070
  %v1072 = vpop.f32.mrf.mxu0
  %v1073 = vadd.f32 %v904, %v1072
  %1074 = vmatmul.bf16.gmra.mxu0 %v521
  %v1075 = vpop.f32.mrf.mxu0
  %v1076 = vadd.f32 %v907, %v1075
  %v1077 = vpop.f32.mrf.mxu0
  %v1078 = vadd.f32 %v909, %v1077
  %1079 = vmatmul.bf16.gmra.mxu0 %v524
  %v1080 = vpop.f32.mrf.mxu0
  %v1081 = vadd.f32 %v912, %v1080
  %v1082 = vpop.f32.mrf.mxu0
  %v1083 = vadd.f32 %v914, %v1082
  %1084 = vmatmul.bf16.gmra.mxu0 %v527
  %v1085 = vpop.f32.mrf.mxu0
  %v1086 = vadd.f32 %v917, %v1085
  %v1087 = vpop.f32.mrf.mxu0
  %v1088 = vadd.f32 %v919, %v1087
  %1089 = vmatmul.bf16.gmra.mxu0 %v530
  %v1090 = vpop.f32.mrf.mxu0
  %v1091 = vadd.f32 %v922, %v1090
  %v1092 = vpop.f32.mrf.mxu0
  %v1093 = vadd.f32 %v924, %v1092
  %1094 = vmatmul.bf16.gmra.mxu0 %v533
  %v1095 = vpop.f32.mrf.mxu0
  %v1096 = vadd.f32 %v927, %v1095
  %v1097 = vpop.f32.mrf.mxu0
  %v1098 = vadd.f32 %v929, %v1097
  %1099 = vmatmul.bf16.gmra.mxu0 %v536
  %v1100 = vpop.f32.mrf.mxu0
  %v1101 = vadd.f32 %v932, %v1100
  %v1102 = vpop.f32.mrf.mxu0
  %v1103 = vadd.f32 %v934, %v1102
  %1104 = vmatmul.bf16.gmra.mxu0 %v539
  %v1105 = vpop.f32.mrf.mxu0
  %v1106 = vadd.f32 %v937, %v1105
  %v1107 = vpop.f32.mrf.mxu0
  %v1108 = vadd.f32 %v939, %v1107
  %1109 = vmatmul.bf16.gmra.mxu0 %v542
  %v1110 = vpop.f32.mrf.mxu0
  %v1111 = vadd.f32 %v942, %v1110
  %v1112 = vpop.f32.mrf.mxu0
  %v1113 = vadd.f32 %v944, %v1112
  %1114 = vmatmul.bf16.gmra.mxu0 %v545
  %v1115 = vpop.f32.mrf.mxu0
  %v1116 = vadd.f32 %v947, %v1115
  %v1117 = vpop.f32.mrf.mxu0
  %v1118 = vadd.f32 %v949, %v1117
  %1119 = vmatmul.bf16.gmra.mxu0 %v548
  %v1120 = vpop.f32.mrf.mxu0
  %v1121 = vadd.f32 %v952, %v1120
  %v1122 = vpop.f32.mrf.mxu0
  %v1123 = vadd.f32 %v954, %v1122
  %1124 = vmatmul.bf16.gmra.mxu0 %v551
  %v1125 = vpop.f32.mrf.mxu0
  %v1126 = vadd.f32 %v957, %v1125
  %v1127 = vpop.f32.mrf.mxu0
  %v1128 = vadd.f32 %v959, %v1127
  %1129 = vmatmul.bf16.gmra.mxu0 %v554
  %v1130 = vpop.f32.mrf.mxu0
  %v1131 = vadd.f32 %v962, %v1130
  %v1132 = vpop.f32.mrf.mxu0
  %v1133 = vadd.f32 %v964, %v1132
  %1134 = vmatmul.bf16.gmra.mxu0 %v557
  %v1135 = vpop.f32.mrf.mxu0
  %v1136 = vadd.f32 %v967, %v1135
  %v1137 = vpop.f32.mrf.mxu0
  %v1138 = vadd.f32 %v969, %v1137
  %1139 = vmatmul.bf16.gmra.mxu0 %v560
  %v1140 = vpop.f32.mrf.mxu0
  %v1141 = vadd.f32 %v972, %v1140
  %v1142 = vpop.f32.mrf.mxu0
  %v1143 = vadd.f32 %v974, %v1142
  %1144 = vmatmul.bf16.gmra.mxu0 %v563
  %v1145 = vpop.f32.mrf.mxu0
  %v1146 = vadd.f32 %v977, %v1145
  %v1147 = vpop.f32.mrf.mxu0
  %v1148 = vadd.f32 %v979, %v1147
  %1149 = vmatmul.bf16.gmra.mxu0 %v566
  %v1150 = vpop.f32.mrf.mxu0
  %v1151 = vadd.f32 %v982, %v1150
  %v1152 = vpop.f32.mrf.mxu0
  %v1153 = vadd.f32 %v984, %v1152
  %1154 = vmatmul.bf16.gmra.mxu0 %v569
  %v1155 = vpop.f32.mrf.mxu0
  %v1156 = vadd.f32 %v987, %v1155
  %v1157 = vpop.f32.mrf.mxu0
  %v1158 = vadd.f32 %v989, %v1157
  %1159 = vmatmul.bf16.gmra.mxu0 %v572
  %v1160 = vpop.f32.mrf.mxu0
  %v1161 = vadd.f32 %v992, %v1160
  %v1162 = vpop.f32.mrf.mxu0
  %v1163 = vadd.f32 %v994, %v1162
  %1164 = vmatmul.bf16.gmra.mxu0 %v575
  %v1165 = vpop.f32.mrf.mxu0
  %v1166 = vadd.f32 %v997, %v1165
  %v1167 = vpop.f32.mrf.mxu0
  %v1168 = vadd.f32 %v999, %v1167
  %1169 = vmatmul.bf16.gmra.mxu0 %v578
  %v1170 = vpop.f32.mrf.mxu0
  %v1171 = vadd.f32 %v1002, %v1170
  %v1172 = vpop.f32.mrf.mxu0
  %v1173 = vadd.f32 %v1004, %v1172
  %1174 = vmatmul.bf16.gmra.mxu0 %v581
  %v1175 = vpop.f32.mrf.mxu0
  %v1176 = vadd.f32 %v1007, %v1175
  %v1177 = vpop.f32.mrf.mxu0
  %v1178 = vadd.f32 %v1009, %v1177
  %1179 = vmatmul.bf16.gmra.mxu0 %v584
  %v1180 = vpop.f32.mrf.mxu0
  %v1181 = vadd.f32 %v1012, %v1180
  %v1182 = vpop.f32.mrf.mxu0
  %v1183 = vadd.f32 %v1014, %v1182
  %1184 = vmatmul.bf16.gmra.mxu0 %v587
  %v1185 = vpop.f32.mrf.mxu0
  %v1186 = vadd.f32 %v1017, %v1185
  %v1187 = vpop.f32.mrf.mxu0
  %v1188 = vadd.f32 %v1019, %v1187
  %1189 = vmatmul.bf16.gmra.mxu0 %v590
  %v1190 = vpop.f32.mrf.mxu0
  %v1191 = vadd.f32 %v1022, %v1190
  %v1192 = vpop.f32.mrf.mxu0
  %v1193 = vadd.f32 %v1024, %v1192
  %1194 = vmatmul.bf16.gmra.mxu0 %v593
  %v1195 = vpop.f32.mrf.mxu0
  %v1196 = vadd.f32 %v1027, %v1195
  %v1197 = vpop.f32.mrf.mxu0
  %v1198 = vadd.f32 %v1029, %v1197
  %1199 = vmatmul.bf16.gmra.mxu0 %v596
  %v1200 = vpop.f32.mrf.mxu0
  %v1201 = vadd.f32 %v1032, %v1200
  %v1202 = vpop.f32.mrf.mxu0
  %v1203 = vadd.f32 %v1034, %v1202
  %1204 = vdwg.mxu0
  %1205 = vmatpush.bf16.msra.mxu0 0
  %1206 = vmatpush.bf16.msra.mxu0 0
  %1207 = vmatpush.bf16.msra.mxu0 0
  %1208 = vmatpush.bf16.msra.mxu0 0
  %1209 = vmatpush.bf16.msra.mxu0 0
  %1210 = vmatpush.bf16.msra.mxu0 0
  %1211 = vmatpush.bf16.msra.mxu0 %v751
  %1212 = vmatpush.bf16.msra.mxu0 %v750
  %1213 = vmatmul.bf16.gmra.mxu0 %v772
  %v1214 = vpop.f32.mrf.mxu0
  %v1215 = vadd.f32 %v1046, %v1214
  %v1216 = vpop.f32.mrf.mxu0
  %v1217 = vadd.f32 %v1048, %v1216
  %1218 = vmatmul.bf16.gmra.mxu0 %v775
  %v1219 = vpop.f32.mrf.mxu0
  %v1220 = vadd.f32 %v1051, %v1219
  %v1221 = vpop.f32.mrf.mxu0
  %v1222 = vadd.f32 %v1053, %v1221
  %1223 = vmatmul.bf16.gmra.mxu0 %v778
  %v1224 = vpop.f32.mrf.mxu0
  %v1225 = vadd.f32 %v1056, %v1224
  %v1226 = vpop.f32.mrf.mxu0
  %v1227 = vadd.f32 %v1058, %v1226
  %1228 = vmatmul.bf16.gmra.mxu0 %v781
  %v1229 = vpop.f32.mrf.mxu0
  %v1230 = vadd.f32 %v1061, %v1229
  %v1231 = vpop.f32.mrf.mxu0
  %v1232 = vadd.f32 %v1063, %v1231
  %1233 = vmatmul.bf16.gmra.mxu0 %v784
  %v1234 = vpop.f32.mrf.mxu0
  %v1235 = vadd.f32 %v1066, %v1234
  %v1236 = vpop.f32.mrf.mxu0
  %v1237 = vadd.f32 %v1068, %v1236
  %1238 = vmatmul.bf16.gmra.mxu0 %v787
  %v1239 = vpop.f32.mrf.mxu0
  %v1240 = vadd.f32 %v1071, %v1239
  %v1241 = vpop.f32.mrf.mxu0
  %v1242 = vadd.f32 %v1073, %v1241
  %1243 = vmatmul.bf16.gmra.mxu0 %v790
  %v1244 = vpop.f32.mrf.mxu0
  %v1245 = vadd.f32 %v1076, %v1244
  %v1246 = vpop.f32.mrf.mxu0
  %v1247 = vadd.f32 %v1078, %v1246
  %1248 = vmatmul.bf16.gmra.mxu0 %v793
  %v1249 = vpop.f32.mrf.mxu0
  %v1250 = vadd.f32 %v1081, %v1249
  %v1251 = vpop.f32.mrf.mxu0
  %v1252 = vadd.f32 %v1083, %v1251
  %1253 = vmatmul.bf16.gmra.mxu0 %v796
  %v1254 = vpop.f32.mrf.mxu0
  %v1255 = vadd.f32 %v1086, %v1254
  %v1256 = vpop.f32.mrf.mxu0
  %v1257 = vadd.f32 %v1088, %v1256
  %1258 = vmatmul.bf16.gmra.mxu0 %v799
  %v1259 = vpop.f32.mrf.mxu0
  %v1260 = vadd.f32 %v1091, %v1259
  %v1261 = vpop.f32.mrf.mxu0
  %v1262 = vadd.f32 %v1093, %v1261
  %1263 = vmatmul.bf16.gmra.mxu0 %v802
  %v1264 = vpop.f32.mrf.mxu0
  %v1265 = vadd.f32 %v1096, %v1264
  %v1266 = vpop.f32.mrf.mxu0
  %v1267 = vadd.f32 %v1098, %v1266
  %1268 = vmatmul.bf16.gmra.mxu0 %v805
  %v1269 = vpop.f32.mrf.mxu0
  %v1270 = vadd.f32 %v1101, %v1269
  %v1271 = vpop.f32.mrf.mxu0
  %v1272 = vadd.f32 %v1103, %v1271
  %1273 = vmatmul.bf16.gmra.mxu0 %v808
  %v1274 = vpop.f32.mrf.mxu0
  %v1275 = vadd.f32 %v1106, %v1274
  %v1276 = vpop.f32.mrf.mxu0
  %v1277 = vadd.f32 %v1108, %v1276
  %1278 = vmatmul.bf16.gmra.mxu0 %v811
  %v1279 = vpop.f32.mrf.mxu0
  %v1280 = vadd.f32 %v1111, %v1279
  %v1281 = vpop.f32.mrf.mxu0
  %v1282 = vadd.f32 %v1113, %v1281
  %1283 = vmatmul.bf16.gmra.mxu0 %v814
  %v1284 = vpop.f32.mrf.mxu0
  %v1285 = vadd.f32 %v1116, %v1284
  %v1286 = vpop.f32.mrf.mxu0
  %v1287 = vadd.f32 %v1118, %v1286
  %1288 = vmatmul.bf16.gmra.mxu0 %v817
  %v1289 = vpop.f32.mrf.mxu0
  %v1290 = vadd.f32 %v1121, %v1289
  %v1291 = vpop.f32.mrf.mxu0
  %v1292 = vadd.f32 %v1123, %v1291
  %1293 = vmatmul.bf16.gmra.mxu0 %v820
  %v1294 = vpop.f32.mrf.mxu0
  %v1295 = vadd.f32 %v1126, %v1294
  %v1296 = vpop.f32.mrf.mxu0
  %v1297 = vadd.f32 %v1128, %v1296
  %1298 = vmatmul.bf16.gmra.mxu0 %v823
  %v1299 = vpop.f32.mrf.mxu0
  %v1300 = vadd.f32 %v1131, %v1299
  %v1301 = vpop.f32.mrf.mxu0
  %v1302 = vadd.f32 %v1133, %v1301
  %1303 = vmatmul.bf16.gmra.mxu0 %v826
  %v1304 = vpop.f32.mrf.mxu0
  %v1305 = vadd.f32 %v1136, %v1304
  %v1306 = vpop.f32.mrf.mxu0
  %v1307 = vadd.f32 %v1138, %v1306
  %1308 = vmatmul.bf16.gmra.mxu0 %v829
  %v1309 = vpop.f32.mrf.mxu0
  %v1310 = vadd.f32 %v1141, %v1309
  %v1311 = vpop.f32.mrf.mxu0
  %v1312 = vadd.f32 %v1143, %v1311
  %1313 = vmatmul.bf16.gmra.mxu0 %v832
  %v1314 = vpop.f32.mrf.mxu0
  %v1315 = vadd.f32 %v1146, %v1314
  %v1316 = vpop.f32.mrf.mxu0
  %v1317 = vadd.f32 %v1148, %v1316
  %1318 = vmatmul.bf16.gmra.mxu0 %v835
  %v1319 = vpop.f32.mrf.mxu0
  %v1320 = vadd.f32 %v1151, %v1319
  %v1321 = vpop.f32.mrf.mxu0
  %v1322 = vadd.f32 %v1153, %v1321
  %1323 = vmatmul.bf16.gmra.mxu0 %v838
  %v1324 = vpop.f32.mrf.mxu0
  %v1325 = vadd.f32 %v1156, %v1324
  %v1326 = vpop.f32.mrf.mxu0
  %v1327 = vadd.f32 %v1158, %v1326
  %1328 = vmatmul.bf16.gmra.mxu0 %v841
  %v1329 = vpop.f32.mrf.mxu0
  %v1330 = vadd.f32 %v1161, %v1329
  %v1331 = vpop.f32.mrf.mxu0
  %v1332 = vadd.f32 %v1163, %v1331
  %1333 = vmatmul.bf16.gmra.mxu0 %v844
  %v1334 = vpop.f32.mrf.mxu0
  %v1335 = vadd.f32 %v1166, %v1334
  %v1336 = vpop.f32.mrf.mxu0
  %v1337 = vadd.f32 %v1168, %v1336
  %1338 = vmatmul.bf16.gmra.mxu0 %v847
  %v1339 = vpop.f32.mrf.mxu0
  %v1340 = vadd.f32 %v1171, %v1339
  %v1341 = vpop.f32.mrf.mxu0
  %v1342 = vadd.f32 %v1173, %v1341
  %1343 = vmatmul.bf16.gmra.mxu0 %v850
  %v1344 = vpop.f32.mrf.mxu0
  %v1345 = vadd.f32 %v1176, %v1344
  %v1346 = vpop.f32.mrf.mxu0
  %v1347 = vadd.f32 %v1178, %v1346
  %1348 = vmatmul.bf16.gmra.mxu0 %v853
  %v1349 = vpop.f32.mrf.mxu0
  %v1350 = vadd.f32 %v1181, %v1349
  %v1351 = vpop.f32.mrf.mxu0
  %v1352 = vadd.f32 %v1183, %v1351
  %1353 = vmatmul.bf16.gmra.mxu0 %v856
  %v1354 = vpop.f32.mrf.mxu0
  %v1355 = vadd.f32 %v1186, %v1354
  %v1356 = vpop.f32.mrf.mxu0
  %v1357 = vadd.f32 %v1188, %v1356
  %1358 = vmatmul.bf16.gmra.mxu0 %v859
  %v1359 = vpop.f32.mrf.mxu0
  %v1360 = vadd.f32 %v1191, %v1359
  %v1361 = vpop.f32.mrf.mxu0
  %v1362 = vadd.f32 %v1193, %v1361
  %1363 = vmatmul.bf16.gmra.mxu0 %v862
  %v1364 = vpop.f32.mrf.mxu0
  %v1365 = vadd.f32 %v1196, %v1364
  %v1366 = vpop.f32.mrf.mxu0
  %v1367 = vadd.f32 %v1198, %v1366
  %1368 = vmatmul.bf16.gmra.mxu0 %v865
  %v1369 = vpop.f32.mrf.mxu0
  %v1370 = vadd.f32 %v1201, %v1369
  %v1371 = vpop.f32.mrf.mxu0
  %v1372 = vadd.f32 %v1203, %v1371
  %1373 = vdwg.mxu0
  %v1374 = vld [vmem:[%s2] sm:$0x1]
  %v1376 = vperm.slane %v1374, 0
  %v1378 = vmul.f32 %v1215, %v1376
  %v1379 = vmul.f32 %v1217, %v1376
  %v1380 = vmul.f32 %v1220, %v1376
  %v1381 = vmul.f32 %v1222, %v1376
  %v1382 = vmul.f32 %v1225, %v1376
  %v1383 = vmul.f32 %v1227, %v1376
  %v1384 = vmul.f32 %v1230, %v1376
  %v1385 = vmul.f32 %v1232, %v1376
  %v1386 = vmul.f32 %v1235, %v1376
  %v1387 = vmul.f32 %v1237, %v1376
  %v1388 = vmul.f32 %v1240, %v1376
  %v1389 = vmul.f32 %v1242, %v1376
  %v1390 = vmul.f32 %v1245, %v1376
  %v1391 = vmul.f32 %v1247, %v1376
  %v1392 = vmul.f32 %v1250, %v1376
  %v1393 = vmul.f32 %v1252, %v1376
  %v1394 = vmul.f32 %v1255, %v1376
  %v1395 = vmul.f32 %v1257, %v1376
  %v1396 = vmul.f32 %v1260, %v1376
  %v1397 = vmul.f32 %v1262, %v1376
  %v1398 = vmul.f32 %v1265, %v1376
  %v1399 = vmul.f32 %v1267, %v1376
  %v1400 = vmul.f32 %v1270, %v1376
  %v1401 = vmul.f32 %v1272, %v1376
  %v1402 = vmul.f32 %v1275, %v1376
  %v1403 = vmul.f32 %v1277, %v1376
  %v1404 = vmul.f32 %v1280, %v1376
  %v1405 = vmul.f32 %v1282, %v1376
  %v1406 = vmul.f32 %v1285, %v1376
  %v1407 = vmul.f32 %v1287, %v1376
  %v1408 = vmul.f32 %v1290, %v1376
  %v1409 = vmul.f32 %v1292, %v1376
  %v1410 = vmul.f32 %v1295, %v1376
  %v1411 = vmul.f32 %v1297, %v1376
  %v1412 = vmul.f32 %v1300, %v1376
  %v1413 = vmul.f32 %v1302, %v1376
  %v1414 = vmul.f32 %v1305, %v1376
  %v1415 = vmul.f32 %v1307, %v1376
  %v1416 = vmul.f32 %v1310, %v1376
  %v1417 = vmul.f32 %v1312, %v1376
  %v1418 = vmul.f32 %v1315, %v1376
  %v1419 = vmul.f32 %v1317, %v1376
  %v1420 = vmul.f32 %v1320, %v1376
  %v1421 = vmul.f32 %v1322, %v1376
  %v1422 = vmul.f32 %v1325, %v1376
  %v1423 = vmul.f32 %v1327, %v1376
  %v1424 = vmul.f32 %v1330, %v1376
  %v1425 = vmul.f32 %v1332, %v1376
  %v1426 = vmul.f32 %v1335, %v1376
  %v1427 = vmul.f32 %v1337, %v1376
  %v1428 = vmul.f32 %v1340, %v1376
  %v1429 = vmul.f32 %v1342, %v1376
  %v1430 = vmul.f32 %v1345, %v1376
  %v1431 = vmul.f32 %v1347, %v1376
  %v1432 = vmul.f32 %v1350, %v1376
  %v1433 = vmul.f32 %v1352, %v1376
  %v1434 = vmul.f32 %v1355, %v1376
  %v1435 = vmul.f32 %v1357, %v1376
  %v1436 = vmul.f32 %v1360, %v1376
  %v1437 = vmul.f32 %v1362, %v1376
  %v1438 = vmul.f32 %v1365, %v1376
  %v1439 = vmul.f32 %v1367, %v1376
  %v1440 = vmul.f32 %v1370, %v1376
  %v1441 = vmul.f32 %v1372, %v1376
  %v1442 = vld [vmem:[%s3] sm:$0x1]
  %v1444 = vperm.slane %v1442, 0
  %v1446 = vadd.f32 %v1378, %v1444
  %v1447 = vadd.f32 %v1379, %v1444
  %v1448 = vadd.f32 %v1380, %v1444
  %v1449 = vadd.f32 %v1381, %v1444
  %v1450 = vadd.f32 %v1382, %v1444
  %v1451 = vadd.f32 %v1383, %v1444
  %v1452 = vadd.f32 %v1384, %v1444
  %v1453 = vadd.f32 %v1385, %v1444
  %v1454 = vadd.f32 %v1386, %v1444
  %v1455 = vadd.f32 %v1387, %v1444
  %v1456 = vadd.f32 %v1388, %v1444
  %v1457 = vadd.f32 %v1389, %v1444
  %v1458 = vadd.f32 %v1390, %v1444
  %v1459 = vadd.f32 %v1391, %v1444
  %v1460 = vadd.f32 %v1392, %v1444
  %v1461 = vadd.f32 %v1393, %v1444
  %v1462 = vadd.f32 %v1394, %v1444
  %v1463 = vadd.f32 %v1395, %v1444
  %v1464 = vadd.f32 %v1396, %v1444
  %v1465 = vadd.f32 %v1397, %v1444
  %v1466 = vadd.f32 %v1398, %v1444
  %v1467 = vadd.f32 %v1399, %v1444
  %v1468 = vadd.f32 %v1400, %v1444
  %v1469 = vadd.f32 %v1401, %v1444
  %v1470 = vadd.f32 %v1402, %v1444
  %v1471 = vadd.f32 %v1403, %v1444
  %v1472 = vadd.f32 %v1404, %v1444
  %v1473 = vadd.f32 %v1405, %v1444
  %v1474 = vadd.f32 %v1406, %v1444
  %v1475 = vadd.f32 %v1407, %v1444
  %v1476 = vadd.f32 %v1408, %v1444
  %v1477 = vadd.f32 %v1409, %v1444
  %v1478 = vadd.f32 %v1410, %v1444
  %v1479 = vadd.f32 %v1411, %v1444
  %v1480 = vadd.f32 %v1412, %v1444
  %v1481 = vadd.f32 %v1413, %v1444
  %v1482 = vadd.f32 %v1414, %v1444
  %v1483 = vadd.f32 %v1415, %v1444
  %v1484 = vadd.f32 %v1416, %v1444
  %v1485 = vadd.f32 %v1417, %v1444
  %v1486 = vadd.f32 %v1418, %v1444
  %v1487 = vadd.f32 %v1419, %v1444
  %v1488 = vadd.f32 %v1420, %v1444
  %v1489 = vadd.f32 %v1421, %v1444
  %v1490 = vadd.f32 %v1422, %v1444
  %v1491 = vadd.f32 %v1423, %v1444
  %v1492 = vadd.f32 %v1424, %v1444
  %v1493 = vadd.f32 %v1425, %v1444
  %v1494 = vadd.f32 %v1426, %v1444
  %v1495 = vadd.f32 %v1427, %v1444
  %v1496 = vadd.f32 %v1428, %v1444
  %v1497 = vadd.f32 %v1429, %v1444
  %v1498 = vadd.f32 %v1430, %v1444
  %v1499 = vadd.f32 %v1431, %v1444
  %v1500 = vadd.f32 %v1432, %v1444
  %v1501 = vadd.f32 %v1433, %v1444
  %v1502 = vadd.f32 %v1434, %v1444
  %v1503 = vadd.f32 %v1435, %v1444
  %v1504 = vadd.f32 %v1436, %v1444
  %v1505 = vadd.f32 %v1437, %v1444
  %v1506 = vadd.f32 %v1438, %v1444
  %v1507 = vadd.f32 %v1439, %v1444
  %v1508 = vadd.f32 %v1440, %v1444
  %v1509 = vadd.f32 %v1441, %v1444
  %v1510 = vmax.f32 %v1446, 0.0
  %v1511 = vmax.f32 %v1447, 0.0
  %v1512 = vmax.f32 %v1448, 0.0
  %v1513 = vmax.f32 %v1449, 0.0
  %v1514 = vmax.f32 %v1450, 0.0
  %v1515 = vmax.f32 %v1451, 0.0
  %v1516 = vmax.f32 %v1452, 0.0
  %v1517 = vmax.f32 %v1453, 0.0
  %v1518 = vmax.f32 %v1454, 0.0
  %v1519 = vmax.f32 %v1455, 0.0
  %v1520 = vmax.f32 %v1456, 0.0
  %v1521 = vmax.f32 %v1457, 0.0
  %v1522 = vmax.f32 %v1458, 0.0
  %v1523 = vmax.f32 %v1459, 0.0
  %v1524 = vmax.f32 %v1460, 0.0
  %v1525 = vmax.f32 %v1461, 0.0
  %v1526 = vmax.f32 %v1462, 0.0
  %v1527 = vmax.f32 %v1463, 0.0
  %v1528 = vmax.f32 %v1464, 0.0
  %v1529 = vmax.f32 %v1465, 0.0
  %v1530 = vmax.f32 %v1466, 0.0
  %v1531 = vmax.f32 %v1467, 0.0
  %v1532 = vmax.f32 %v1468, 0.0
  %v1533 = vmax.f32 %v1469, 0.0
  %v1534 = vmax.f32 %v1470, 0.0
  %v1535 = vmax.f32 %v1471, 0.0
  %v1536 = vmax.f32 %v1472, 0.0
  %v1537 = vmax.f32 %v1473, 0.0
  %v1538 = vmax.f32 %v1474, 0.0
  %v1539 = vmax.f32 %v1475, 0.0
  %v1540 = vmax.f32 %v1476, 0.0
  %v1541 = vmax.f32 %v1477, 0.0
  %v1542 = vmax.f32 %v1478, 0.0
  %v1543 = vmax.f32 %v1479, 0.0
  %v1544 = vmax.f32 %v1480, 0.0
  %v1545 = vmax.f32 %v1481, 0.0
  %v1546 = vmax.f32 %v1482, 0.0
  %v1547 = vmax.f32 %v1483, 0.0
  %v1548 = vmax.f32 %v1484, 0.0
  %v1549 = vmax.f32 %v1485, 0.0
  %v1550 = vmax.f32 %v1486, 0.0
  %v1551 = vmax.f32 %v1487, 0.0
  %v1552 = vmax.f32 %v1488, 0.0
  %v1553 = vmax.f32 %v1489, 0.0
  %v1554 = vmax.f32 %v1490, 0.0
  %v1555 = vmax.f32 %v1491, 0.0
  %v1556 = vmax.f32 %v1492, 0.0
  %v1557 = vmax.f32 %v1493, 0.0
  %v1558 = vmax.f32 %v1494, 0.0
  %v1559 = vmax.f32 %v1495, 0.0
  %v1560 = vmax.f32 %v1496, 0.0
  %v1561 = vmax.f32 %v1497, 0.0
  %v1562 = vmax.f32 %v1498, 0.0
  %v1563 = vmax.f32 %v1499, 0.0
  %v1564 = vmax.f32 %v1500, 0.0
  %v1565 = vmax.f32 %v1501, 0.0
  %v1566 = vmax.f32 %v1502, 0.0
  %v1567 = vmax.f32 %v1503, 0.0
  %v1568 = vmax.f32 %v1504, 0.0
  %v1569 = vmax.f32 %v1505, 0.0
  %v1570 = vmax.f32 %v1506, 0.0
  %v1571 = vmax.f32 %v1507, 0.0
  %v1572 = vmax.f32 %v1508, 0.0
  %v1573 = vmax.f32 %v1509, 0.0
  %v1574 = vpack.c.bf16 %v1510, %v1510
  %v1575 = vpack.c.bf16 %v1511, %v1511
  %v1576 = vpack.c.bf16 %v1512, %v1512
  %v1577 = vpack.c.bf16 %v1513, %v1513
  %v1578 = vpack.c.bf16 %v1514, %v1514
  %v1579 = vpack.c.bf16 %v1515, %v1515
  %v1580 = vpack.c.bf16 %v1516, %v1516
  %v1581 = vpack.c.bf16 %v1517, %v1517
  %v1582 = vpack.c.bf16 %v1518, %v1518
  %v1583 = vpack.c.bf16 %v1519, %v1519
  %v1584 = vpack.c.bf16 %v1520, %v1520
  %v1585 = vpack.c.bf16 %v1521, %v1521
  %v1586 = vpack.c.bf16 %v1522, %v1522
  %v1587 = vpack.c.bf16 %v1523, %v1523
  %v1588 = vpack.c.bf16 %v1524, %v1524
  %v1589 = vpack.c.bf16 %v1525, %v1525
  %v1590 = vpack.c.bf16 %v1526, %v1526
  %v1591 = vpack.c.bf16 %v1527, %v1527
  %v1592 = vpack.c.bf16 %v1528, %v1528
  %v1593 = vpack.c.bf16 %v1529, %v1529
  %v1594 = vpack.c.bf16 %v1530, %v1530
  %v1595 = vpack.c.bf16 %v1531, %v1531
  %v1596 = vpack.c.bf16 %v1532, %v1532
  %v1597 = vpack.c.bf16 %v1533, %v1533
  %v1598 = vpack.c.bf16 %v1534, %v1534
  %v1599 = vpack.c.bf16 %v1535, %v1535
  %v1600 = vpack.c.bf16 %v1536, %v1536
  %v1601 = vpack.c.bf16 %v1537, %v1537
  %v1602 = vpack.c.bf16 %v1538, %v1538
  %v1603 = vpack.c.bf16 %v1539, %v1539
  %v1604 = vpack.c.bf16 %v1540, %v1540
  %v1605 = vpack.c.bf16 %v1541, %v1541
  %v1606 = vpack.c.bf16 %v1542, %v1542
  %v1607 = vpack.c.bf16 %v1543, %v1543
  %v1608 = vpack.c.bf16 %v1544, %v1544
  %v1609 = vpack.c.bf16 %v1545, %v1545
  %v1610 = vpack.c.bf16 %v1546, %v1546
  %v1611 = vpack.c.bf16 %v1547, %v1547
  %v1612 = vpack.c.bf16 %v1548, %v1548
  %v1613 = vpack.c.bf16 %v1549, %v1549
  %v1614 = vpack.c.bf16 %v1550, %v1550
  %v1615 = vpack.c.bf16 %v1551, %v1551
  %v1616 = vpack.c.bf16 %v1552, %v1552
  %v1617 = vpack.c.bf16 %v1553, %v1553
  %v1618 = vpack.c.bf16 %v1554, %v1554
  %v1619 = vpack.c.bf16 %v1555, %v1555
  %v1620 = vpack.c.bf16 %v1556, %v1556
  %v1621 = vpack.c.bf16 %v1557, %v1557
  %v1622 = vpack.c.bf16 %v1558, %v1558
  %v1623 = vpack.c.bf16 %v1559, %v1559
  %v1624 = vpack.c.bf16 %v1560, %v1560
  %v1625 = vpack.c.bf16 %v1561, %v1561
  %v1626 = vpack.c.bf16 %v1562, %v1562
  %v1627 = vpack.c.bf16 %v1563, %v1563
  %v1628 = vpack.c.bf16 %v1564, %v1564
  %v1629 = vpack.c.bf16 %v1565, %v1565
  %v1630 = vpack.c.bf16 %v1566, %v1566
  %v1631 = vpack.c.bf16 %v1567, %v1567
  %v1632 = vpack.c.bf16 %v1568, %v1568
  %v1633 = vpack.c.bf16 %v1569, %v1569
  %v1634 = vpack.c.bf16 %v1570, %v1570
  %v1635 = vpack.c.bf16 %v1571, %v1571
  %v1636 = vpack.c.bf16 %v1572, %v1572
  %v1637 = vpack.c.bf16 %v1573, %v1573
  %vm1638 = vcmask 257024
  %1639 = vst.msk [vmem:[%s4] sm:$0xf] %vm1638, %v1574
  %1640 = vst.msk [vmem:[%s4 + $0x4] sm:$0xf] %vm1638, %v1575
  %1641 = vst.msk [vmem:[%s4 + $0x8] sm:$0xf] %vm1638, %v1576
  %1642 = vst.msk [vmem:[%s4 + $0xc] sm:$0xf] %vm1638, %v1577
  %1643 = vst.msk [vmem:[%s4 + $0x10] sm:$0xf] %vm1638, %v1578
  %1644 = vst.msk [vmem:[%s4 + $0x14] sm:$0xf] %vm1638, %v1579
  %1645 = vst.msk [vmem:[%s4 + $0x18] sm:$0xf] %vm1638, %v1580
  %1646 = vst.msk [vmem:[%s4 + $0x1c] sm:$0xf] %vm1638, %v1581
  %1647 = vst.msk [vmem:[%s4 + $0x20] sm:$0xf] %vm1638, %v1582
  %1648 = vst.msk [vmem:[%s4 + $0x24] sm:$0xf] %vm1638, %v1583
  %1649 = vst.msk [vmem:[%s4 + $0x28] sm:$0xf] %vm1638, %v1584
  %1650 = vst.msk [vmem:[%s4 + $0x2c] sm:$0xf] %vm1638, %v1585
  %1651 = vst.msk [vmem:[%s4 + $0x30] sm:$0xf] %vm1638, %v1586
  %1652 = vst.msk [vmem:[%s4 + $0x34] sm:$0xf] %vm1638, %v1587
  %1653 = vst.msk [vmem:[%s4 + $0x38] sm:$0xf] %vm1638, %v1588
  %1654 = vst.msk [vmem:[%s4 + $0x3c] sm:$0xf] %vm1638, %v1589
  %1655 = vst.msk [vmem:[%s4 + $0x40] sm:$0xf] %vm1638, %v1590
  %1656 = vst.msk [vmem:[%s4 + $0x44] sm:$0xf] %vm1638, %v1591
  %1657 = vst.msk [vmem:[%s4 + $0x48] sm:$0xf] %vm1638, %v1592
  %1658 = vst.msk [vmem:[%s4 + $0x4c] sm:$0xf] %vm1638, %v1593
  %1659 = vst.msk [vmem:[%s4 + $0x50] sm:$0xf] %vm1638, %v1594
  %1660 = vst.msk [vmem:[%s4 + $0x54] sm:$0xf] %vm1638, %v1595
  %1661 = vst.msk [vmem:[%s4 + $0x58] sm:$0xf] %vm1638, %v1596
  %1662 = vst.msk [vmem:[%s4 + $0x5c] sm:$0xf] %vm1638, %v1597
  %1663 = vst.msk [vmem:[%s4 + $0x60] sm:$0xf] %vm1638, %v1598
  %1664 = vst.msk [vmem:[%s4 + $0x64] sm:$0xf] %vm1638, %v1599
  %1665 = vst.msk [vmem:[%s4 + $0x68] sm:$0xf] %vm1638, %v1600
  %1666 = vst.msk [vmem:[%s4 + $0x6c] sm:$0xf] %vm1638, %v1601
  %1667 = vst.msk [vmem:[%s4 + $0x70] sm:$0xf] %vm1638, %v1602
  %1668 = vst.msk [vmem:[%s4 + $0x74] sm:$0xf] %vm1638, %v1603
  %1669 = vst.msk [vmem:[%s4 + $0x78] sm:$0xf] %vm1638, %v1604
  %1670 = vst.msk [vmem:[%s4 + $0x7c] sm:$0xf] %vm1638, %v1605
  %1671 = vst.msk [vmem:[%s4 + $0x80] sm:$0xf] %vm1638, %v1606
  %1672 = vst.msk [vmem:[%s4 + $0x84] sm:$0xf] %vm1638, %v1607
  %1673 = vst.msk [vmem:[%s4 + $0x88] sm:$0xf] %vm1638, %v1608
  %1674 = vst.msk [vmem:[%s4 + $0x8c] sm:$0xf] %vm1638, %v1609
  %1675 = vst.msk [vmem:[%s4 + $0x90] sm:$0xf] %vm1638, %v1610
  %1676 = vst.msk [vmem:[%s4 + $0x94] sm:$0xf] %vm1638, %v1611
  %1677 = vst.msk [vmem:[%s4 + $0x98] sm:$0xf] %vm1638, %v1612
  %1678 = vst.msk [vmem:[%s4 + $0x9c] sm:$0xf] %vm1638, %v1613
  %1679 = vst.msk [vmem:[%s4 + $0xa0] sm:$0xf] %vm1638, %v1614
  %1680 = vst.msk [vmem:[%s4 + $0xa4] sm:$0xf] %vm1638, %v1615
  %1681 = vst.msk [vmem:[%s4 + $0xa8] sm:$0xf] %vm1638, %v1616
  %1682 = vst.msk [vmem:[%s4 + $0xac] sm:$0xf] %vm1638, %v1617
  %1683 = vst.msk [vmem:[%s4 + $0xb0] sm:$0xf] %vm1638, %v1618
  %1684 = vst.msk [vmem:[%s4 + $0xb4] sm:$0xf] %vm1638, %v1619
  %1685 = vst.msk [vmem:[%s4 + $0xb8] sm:$0xf] %vm1638, %v1620
  %1686 = vst.msk [vmem:[%s4 + $0xbc] sm:$0xf] %vm1638, %v1621
  %1687 = vst.msk [vmem:[%s4 + $0xc0] sm:$0xf] %vm1638, %v1622
  %1688 = vst.msk [vmem:[%s4 + $0xc4] sm:$0xf] %vm1638, %v1623
  %1689 = vst.msk [vmem:[%s4 + $0xc8] sm:$0xf] %vm1638, %v1624
  %1690 = vst.msk [vmem:[%s4 + $0xcc] sm:$0xf] %vm1638, %v1625
  %1691 = vst.msk [vmem:[%s4 + $0xd0] sm:$0xf] %vm1638, %v1626
  %1692 = vst.msk [vmem:[%s4 + $0xd4] sm:$0xf] %vm1638, %v1627
  %1693 = vst.msk [vmem:[%s4 + $0xd8] sm:$0xf] %vm1638, %v1628
  %1694 = vst.msk [vmem:[%s4 + $0xdc] sm:$0xf] %vm1638, %v1629
  %1695 = vst.msk [vmem:[%s4 + $0xe0] sm:$0xf] %vm1638, %v1630
  %1696 = vst.msk [vmem:[%s4 + $0xe4] sm:$0xf] %vm1638, %v1631
  %1697 = vst.msk [vmem:[%s4 + $0xe8] sm:$0xf] %vm1638, %v1632
  %1698 = vst.msk [vmem:[%s4 + $0xec] sm:$0xf] %vm1638, %v1633
  %1699 = vst.msk [vmem:[%s4 + $0xf0] sm:$0xf] %vm1638, %v1634
  %1700 = vst.msk [vmem:[%s4 + $0xf4] sm:$0xf] %vm1638, %v1635
  %1701 = vst.msk [vmem:[%s4 + $0xf8] sm:$0xf] %vm1638, %v1636
  %1702 = vst.msk [vmem:[%s4 + $0xfc] sm:$0xf] %vm1638, %v1637
  // Predicated region
  $region18: #{net_forward.11} parent=0 // pred_check
    _
  $region19: #{net_forward.11} parent=0 // pred_check_branch
    %1704 = sbr.rel (0) target = $region21
  $region20: #{net_forward.11} parent=0 // pred_region
    _
  $region21: #{net_forward.11} parent=0 // pred_fallthru
    _
  // Predicated region
  $region22: #{net_forward.11} parent=0 // pred_check
    _
  $region23: #{net_forward.11} parent=0 // pred_check_branch
    %1706 = sbr.rel (0) target = $region25
  $region24: #{net_forward.11} parent=0 // pred_region
    _
  $region25: #{net_forward.11} parent=0 // pred_fallthru
    _

// kernel: net_forward.13
$region0: #{net_forward.13}
  #allocation0 [shape = 'u32[]', space=smem, size = 0x4, offset = 0x4, fixed_abs, tag = 'smem constant byte address 0x4 - core index']
  #allocation1 [shape = 'u32[72,128]{1,0:T(1,128)}', space=vmem, size = 0x9000, scoped, tag = 'internal scratch']
  %s0 = inlined_call_operand.vmem [shape: bf16[128,288], index: 0, kind: input, shape index: {}]
  %s1 = inlined_call_operand.vmem [shape: bf16[288,64], index: 1, kind: input, shape index: {}]
  %s2 = inlined_call_operand.vmem [shape: f32[1,64], index: 2, kind: input, shape index: {}]
  %s3 = inlined_call_operand.vmem [shape: f32[1,64], index: 3, kind: input, shape index: {}]
  %s4 = inlined_call_operand.vmem [shape: bf16[128,64], index: 4, kind: output, shape index: {}]
  %s5 = sld [smem:[#allocation0]]
  $region26: #{net_forward.13} parent=0
    _
  %s7 = ssub.s32 1, %s5
  %s8 = scalar_select 0, %s7, %s5
  // Predicated region
  $region2: #{net_forward.13} parent=0 // pred_check
    _
  $region3: #{net_forward.13} parent=0 // pred_check_branch
    %10 = sbr.rel (0) target = $region5
  $region4: #{net_forward.13} parent=0 // pred_region
    _
  $region5: #{net_forward.13} parent=0 // pred_fallthru
    _
  // Predicated region
  $region6: #{net_forward.13} parent=0 // pred_check
    _
  $region7: #{net_forward.13} parent=0 // pred_check_branch
    %12 = sbr.rel (0) target = $region9
  $region8: #{net_forward.13} parent=0 // pred_region
    _
  $region9: #{net_forward.13} parent=0 // pred_fallthru
    _
  // Predicated region
  $region10: #{net_forward.13} parent=0 // pred_check
    _
  $region11: #{net_forward.13} parent=0 // pred_check_branch
    %14 = sbr.rel (0) target = $region13
  $region12: #{net_forward.13} parent=0 // pred_region
    _
  $region13: #{net_forward.13} parent=0 // pred_fallthru
    _
  // Predicated region
  $region14: #{net_forward.13} parent=0 // pred_check
    _
  $region15: #{net_forward.13} parent=0 // pred_check_branch
    %16 = sbr.rel (0) target = $region17
  $region16: #{net_forward.13} parent=0 // pred_region
    _
  $region17: #{net_forward.13} parent=0 // pred_fallthru
    _
  %v18 = vld [vmem:[%s0] sm:$0xff]
  %v19 = vld [vmem:[%s0 + $0x8] sm:$0xf]
  %v20 = vld [vmem:[%s0 + $0xc] sm:$0xff]
  %v21 = vld [vmem:[%s0 + $0x14] sm:$0xf]
  %v22 = vld [vmem:[%s0 + $0x18] sm:$0xff]
  %v23 = vld [vmem:[%s0 + $0x20] sm:$0xf]
  %v24 = vld [vmem:[%s0 + $0x24] sm:$0xff]
  %v25 = vld [vmem:[%s0 + $0x2c] sm:$0xf]
  %v26 = vld [vmem:[%s0 + $0x30] sm:$0xff]
  %v27 = vld [vmem:[%s0 + $0x38] sm:$0xf]
  %v28 = vld [vmem:[%s0 + $0x3c] sm:$0xff]
  %v29 = vld [vmem:[%s0 + $0x44] sm:$0xf]
  %v30 = vld [vmem:[%s0 + $0x48] sm:$0xff]
  %v31 = vld [vmem:[%s0 + $0x50] sm:$0xf]
  %v32 = vld [vmem:[%s0 + $0x54] sm:$0xff]
  %v33 = vld [vmem:[%s0 + $0x5c] sm:$0xf]
  %v34 = vld [vmem:[%s0 + $0x60] sm:$0xff]
  %v35 = vld [vmem:[%s0 + $0x68] sm:$0xf]
  %v36 = vld [vmem:[%s0 + $0x6c] sm:$0xff]
  %v37 = vld [vmem:[%s0 + $0x74] sm:$0xf]
  %v38 = vld [vmem:[%s0 + $0x78] sm:$0xff]
  %v39 = vld [vmem:[%s0 + $0x80] sm:$0xf]
  %v40 = vld [vmem:[%s0 + $0x84] sm:$0xff]
  %v41 = vld [vmem:[%s0 + $0x8c] sm:$0xf]
  %v42 = vld [vmem:[%s0 + $0x90] sm:$0xff]
  %v43 = vld [vmem:[%s0 + $0x98] sm:$0xf]
  %v44 = vld [vmem:[%s0 + $0x9c] sm:$0xff]
  %v45 = vld [vmem:[%s0 + $0xa4] sm:$0xf]
  %v46 = vld [vmem:[%s0 + $0xa8] sm:$0xff]
  %v47 = vld [vmem:[%s0 + $0xb0] sm:$0xf]
  %v48 = vld [vmem:[%s0 + $0xb4] sm:$0xff]
  %v49 = vld [vmem:[%s0 + $0xbc] sm:$0xf]
  %v50 = vld [vmem:[%s1] sm:$0xf]
  %v51 = vld [vmem:[%s1 + $0x4] sm:$0xf]
  %v52 = vld [vmem:[%s1 + $0x8] sm:$0xf]
  %v53 = vld [vmem:[%s1 + $0xc] sm:$0xf]
  %v54 = vld [vmem:[%s1 + $0x10] sm:$0xf]
  %v55 = vld [vmem:[%s1 + $0x14] sm:$0xf]
  %v56 = vld [vmem:[%s1 + $0x18] sm:$0xf]
  %v57 = vld [vmem:[%s1 + $0x1c] sm:$0xf]
  %v58 = vld [vmem:[%s1 + $0x20] sm:$0xf]
  %v59 = vld [vmem:[%s1 + $0x24] sm:$0xf]
  %v60 = vld [vmem:[%s1 + $0x28] sm:$0xf]
  %v61 = vld [vmem:[%s1 + $0x2c] sm:$0xf]
  %v62 = vld [vmem:[%s1 + $0x30] sm:$0xf]
  %v63 = vld [vmem:[%s1 + $0x34] sm:$0xf]
  %v64 = vld [vmem:[%s1 + $0x38] sm:$0xf]
  %v65 = vld [vmem:[%s1 + $0x3c] sm:$0xf]
  %v66 = vld [vmem:[%s1 + $0x40] sm:$0xf]
  %v67 = vld [vmem:[%s1 + $0x44] sm:$0xf]
  %v68 = vld [vmem:[%s1 + $0x48] sm:$0xf]
  %v69 = vld [vmem:[%s1 + $0x4c] sm:$0xf]
  %v70 = vld [vmem:[%s1 + $0x50] sm:$0xf]
  %v71 = vld [vmem:[%s1 + $0x54] sm:$0xf]
  %v72 = vld [vmem:[%s1 + $0x58] sm:$0xf]
  %v73 = vld [vmem:[%s1 + $0x5c] sm:$0xf]
  %v74 = vld [vmem:[%s1 + $0x60] sm:$0xf]
  %v75 = vld [vmem:[%s1 + $0x64] sm:$0xf]
  %v76 = vld [vmem:[%s1 + $0x68] sm:$0xf]
  %v77 = vld [vmem:[%s1 + $0x6c] sm:$0xf]
  %v78 = vld [vmem:[%s1 + $0x70] sm:$0xf]
  %v79 = vld [vmem:[%s1 + $0x74] sm:$0xf]
  %v80 = vld [vmem:[%s1 + $0x78] sm:$0xf]
  %v81 = vld [vmem:[%s1 + $0x7c] sm:$0xf]
  %v82 = vld [vmem:[%s1 + $0x80] sm:$0xf]
  %v83 = vld [vmem:[%s1 + $0x84] sm:$0xf]
  %v84 = vld [vmem:[%s1 + $0x88] sm:$0xf]
  %v85 = vld [vmem:[%s1 + $0x8c] sm:$0xf]
  %v118 = vunpack.c.l.b16 %v18
  %v119 = vunpack.c.h.b16 %v18
  %v120 = vunpack.c.l.b16 %v19
  %v121 = vunpack.c.l.b16 %v20
  %v122 = vunpack.c.h.b16 %v20
  %v123 = vunpack.c.l.b16 %v21
  %v124 = vunpack.c.l.b16 %v22
  %v125 = vunpack.c.h.b16 %v22
  %v126 = vunpack.c.l.b16 %v23
  %v127 = vunpack.c.l.b16 %v24
  %v128 = vunpack.c.h.b16 %v24
  %v129 = vunpack.c.l.b16 %v25
  %v130 = vunpack.c.l.b16 %v26
  %v131 = vunpack.c.h.b16 %v26
  %v132 = vunpack.c.l.b16 %v27
  %v133 = vunpack.c.l.b16 %v28
  %v134 = vunpack.c.h.b16 %v28
  %v135 = vunpack.c.l.b16 %v29
  %v136 = vunpack.c.l.b16 %v30
  %v137 = vunpack.c.h.b16 %v30
  %v138 = vunpack.c.l.b16 %v31
  %v139 = vunpack.c.l.b16 %v32
  %v140 = vunpack.c.h.b16 %v32
  %v141 = vunpack.c.l.b16 %v33
  %v142 = vunpack.c.l.b16 %v34
  %v143 = vunpack.c.h.b16 %v34
  %v144 = vunpack.c.l.b16 %v35
  %v145 = vunpack.c.l.b16 %v36
  %v146 = vunpack.c.h.b16 %v36
  %v147 = vunpack.c.l.b16 %v37
  %v148 = vunpack.c.l.b16 %v38
  %v149 = vunpack.c.h.b16 %v38
  %v150 = vunpack.c.l.b16 %v39
  %v151 = vunpack.c.l.b16 %v40
  %v152 = vunpack.c.h.b16 %v40
  %v153 = vunpack.c.l.b16 %v41
  %v154 = vunpack.c.l.b16 %v42
  %v155 = vunpack.c.h.b16 %v42
  %v156 = vunpack.c.l.b16 %v43
  %v157 = vunpack.c.l.b16 %v44
  %v158 = vunpack.c.h.b16 %v44
  %v159 = vunpack.c.l.b16 %v45
  %v160 = vunpack.c.l.b16 %v46
  %v161 = vunpack.c.h.b16 %v46
  %v162 = vunpack.c.l.b16 %v47
  %v163 = vunpack.c.l.b16 %v48
  %v164 = vunpack.c.h.b16 %v48
  %v165 = vunpack.c.l.b16 %v49
  %v166 = vpack.c.b16 %v121, %v118
  %v167 = vpack.c.b16 %v122, %v119
  %v168 = vpack.c.b16 %v123, %v120
  %v169 = vpack.c.b16 %v127, %v124
  %v170 = vpack.c.b16 %v128, %v125
  %v171 = vpack.c.b16 %v129, %v126
  %v172 = vpack.c.b16 %v133, %v130
  %v173 = vpack.c.b16 %v134, %v131
  %v174 = vpack.c.b16 %v135, %v132
  %v175 = vpack.c.b16 %v139, %v136
  %v176 = vpack.c.b16 %v140, %v137
  %v177 = vpack.c.b16 %v141, %v138
  %v178 = vpack.c.b16 %v145, %v142
  %v179 = vpack.c.b16 %v146, %v143
  %v180 = vpack.c.b16 %v147, %v144
  %v181 = vpack.c.b16 %v151, %v148
  %v182 = vpack.c.b16 %v152, %v149
  %v183 = vpack.c.b16 %v153, %v150
  %v184 = vpack.c.b16 %v157, %v154
  %v185 = vpack.c.b16 %v158, %v155
  %v186 = vpack.c.b16 %v159, %v156
  %v187 = vpack.c.b16 %v163, %v160
  %v188 = vpack.c.b16 %v164, %v161
  %v189 = vpack.c.b16 %v165, %v162
  %v242 = vunpack.c.l.b16 %v50
  %v243 = vunpack.c.l.b16 %v51
  %v244 = vunpack.c.l.b16 %v52
  %v245 = vunpack.c.l.b16 %v53
  %v246 = vunpack.c.l.b16 %v54
  %v247 = vunpack.c.l.b16 %v55
  %v248 = vunpack.c.l.b16 %v56
  %v249 = vunpack.c.l.b16 %v57
  %v250 = vunpack.c.l.b16 %v58
  %v251 = vunpack.c.l.b16 %v59
  %v252 = vunpack.c.l.b16 %v60
  %v253 = vunpack.c.l.b16 %v61
  %v254 = vunpack.c.l.b16 %v62
  %v255 = vunpack.c.l.b16 %v63
  %v256 = vunpack.c.l.b16 %v64
  %v257 = vunpack.c.l.b16 %v65
  %v258 = vunpack.c.l.b16 %v66
  %v259 = vunpack.c.l.b16 %v67
  %v260 = vunpack.c.l.b16 %v68
  %v261 = vunpack.c.l.b16 %v69
  %v262 = vunpack.c.l.b16 %v70
  %v263 = vunpack.c.l.b16 %v71
  %v264 = vunpack.c.l.b16 %v72
  %v265 = vunpack.c.l.b16 %v73
  %v266 = vunpack.c.l.b16 %v74
  %v267 = vunpack.c.l.b16 %v75
  %v268 = vunpack.c.l.b16 %v76
  %v269 = vunpack.c.l.b16 %v77
  %v270 = vunpack.c.l.b16 %v78
  %v271 = vunpack.c.l.b16 %v79
  %v272 = vunpack.c.l.b16 %v80
  %v273 = vunpack.c.l.b16 %v81
  %v274 = vunpack.c.l.b16 %v82
  %v275 = vunpack.c.l.b16 %v83
  %v276 = vunpack.c.l.b16 %v84
  %v277 = vunpack.c.l.b16 %v85
  %v278 = vpack.c.b16 %v243, %v242
  %v279 = vpack.c.b16 %v245, %v244
  %v280 = vpack.c.b16 %v247, %v246
  %v281 = vpack.c.b16 %v249, %v248
  %v282 = vpack.c.b16 %v251, %v250
  %v283 = vpack.c.b16 %v253, %v252
  %v284 = vpack.c.b16 %v255, %v254
  %v285 = vpack.c.b16 %v257, %v256
  %v286 = vpack.c.b16 %v259, %v258
  %v287 = vpack.c.b16 %v261, %v260
  %v288 = vpack.c.b16 %v263, %v262
  %v289 = vpack.c.b16 %v265, %v264
  %v290 = vpack.c.b16 %v267, %v266
  %v291 = vpack.c.b16 %v269, %v268
  %v292 = vpack.c.b16 %v271, %v270
  %v293 = vpack.c.b16 %v273, %v272
  %v294 = vpack.c.b16 %v275, %v274
  %v295 = vpack.c.b16 %v277, %v276
  %vm314 = vcmask 261120
  %v316 = vsel %vm314, %v168, 0
  %v319 = vsel %vm314, %v171, 0
  %v322 = vsel %vm314, %v174, 0
  %v325 = vsel %vm314, %v177, 0
  %v328 = vsel %vm314, %v180, 0
  %v331 = vsel %vm314, %v183, 0
  %v334 = vsel %vm314, %v186, 0
  %v337 = vsel %vm314, %v189, 0
  %339 = vmatpush.bf16.msra.mxu0 %v285
  %340 = vmatpush.bf16.msra.mxu0 %v284
  %341 = vmatpush.bf16.msra.mxu0 %v283
  %342 = vmatpush.bf16.msra.mxu0 %v282
  %343 = vmatpush.bf16.msra.mxu0 %v281
  %344 = vmatpush.bf16.msra.mxu0 %v280
  %345 = vmatpush.bf16.msra.mxu0 %v279
  %346 = vmatpush.bf16.msra.mxu0 %v278
  %347 = vmatmul.bf16.gmra.mxu0 %v166
  %v348 = vpop.f32.mrf.mxu0
  %v349 = vadd.f32 0.0, %v348
  %v350 = vpop.f32.mrf.mxu0
  %v351 = vadd.f32 0.0, %v350
  %352 = vmatmul.bf16.gmra.mxu0 %v169
  %v353 = vpop.f32.mrf.mxu0
  %v354 = vadd.f32 0.0, %v353
  %v355 = vpop.f32.mrf.mxu0
  %v356 = vadd.f32 0.0, %v355
  %357 = vmatmul.bf16.gmra.mxu0 %v172
  %v358 = vpop.f32.mrf.mxu0
  %v359 = vadd.f32 0.0, %v358
  %v360 = vpop.f32.mrf.mxu0
  %v361 = vadd.f32 0.0, %v360
  %362 = vmatmul.bf16.gmra.mxu0 %v175
  %v363 = vpop.f32.mrf.mxu0
  %v364 = vadd.f32 0.0, %v363
  %v365 = vpop.f32.mrf.mxu0
  %v366 = vadd.f32 0.0, %v365
  %367 = vmatmul.bf16.gmra.mxu0 %v178
  %v368 = vpop.f32.mrf.mxu0
  %v369 = vadd.f32 0.0, %v368
  %v370 = vpop.f32.mrf.mxu0
  %v371 = vadd.f32 0.0, %v370
  %372 = vmatmul.bf16.gmra.mxu0 %v181
  %v373 = vpop.f32.mrf.mxu0
  %v374 = vadd.f32 0.0, %v373
  %v375 = vpop.f32.mrf.mxu0
  %v376 = vadd.f32 0.0, %v375
  %377 = vmatmul.bf16.gmra.mxu0 %v184
  %v378 = vpop.f32.mrf.mxu0
  %v379 = vadd.f32 0.0, %v378
  %v380 = vpop.f32.mrf.mxu0
  %v381 = vadd.f32 0.0, %v380
  %382 = vmatmul.bf16.gmra.mxu0 %v187
  %v383 = vpop.f32.mrf.mxu0
  %v384 = vadd.f32 0.0, %v383
  %v385 = vpop.f32.mrf.mxu0
  %v386 = vadd.f32 0.0, %v385
  %387 = vdwg.mxu0
  %388 = vmatpush.bf16.msra.mxu0 %v293
  %389 = vmatpush.bf16.msra.mxu0 %v292
  %390 = vmatpush.bf16.msra.mxu0 %v291
  %391 = vmatpush.bf16.msra.mxu0 %v290
  %392 = vmatpush.bf16.msra.mxu0 %v289
  %393 = vmatpush.bf16.msra.mxu0 %v288
  %394 = vmatpush.bf16.msra.mxu0 %v287
  %395 = vmatpush.bf16.msra.mxu0 %v286
  %396 = vmatmul.bf16.gmra.mxu0 %v167
  %v397 = vpop.f32.mrf.mxu0
  %v398 = vadd.f32 %v349, %v397
  %v399 = vpop.f32.mrf.mxu0
  %v400 = vadd.f32 %v351, %v399
  %401 = vmatmul.bf16.gmra.mxu0 %v170
  %v402 = vpop.f32.mrf.mxu0
  %v403 = vadd.f32 %v354, %v402
  %v404 = vpop.f32.mrf.mxu0
  %v405 = vadd.f32 %v356, %v404
  %406 = vmatmul.bf16.gmra.mxu0 %v173
  %v407 = vpop.f32.mrf.mxu0
  %v408 = vadd.f32 %v359, %v407
  %v409 = vpop.f32.mrf.mxu0
  %v410 = vadd.f32 %v361, %v409
  %411 = vmatmul.bf16.gmra.mxu0 %v176
  %v412 = vpop.f32.mrf.mxu0
  %v413 = vadd.f32 %v364, %v412
  %v414 = vpop.f32.mrf.mxu0
  %v415 = vadd.f32 %v366, %v414
  %416 = vmatmul.bf16.gmra.mxu0 %v179
  %v417 = vpop.f32.mrf.mxu0
  %v418 = vadd.f32 %v369, %v417
  %v419 = vpop.f32.mrf.mxu0
  %v420 = vadd.f32 %v371, %v419
  %421 = vmatmul.bf16.gmra.mxu0 %v182
  %v422 = vpop.f32.mrf.mxu0
  %v423 = vadd.f32 %v374, %v422
  %v424 = vpop.f32.mrf.mxu0
  %v425 = vadd.f32 %v376, %v424
  %426 = vmatmul.bf16.gmra.mxu0 %v185
  %v427 = vpop.f32.mrf.mxu0
  %v428 = vadd.f32 %v379, %v427
  %v429 = vpop.f32.mrf.mxu0
  %v430 = vadd.f32 %v381, %v429
  %431 = vmatmul.bf16.gmra.mxu0 %v188
  %v432 = vpop.f32.mrf.mxu0
  %v433 = vadd.f32 %v384, %v432
  %v434 = vpop.f32.mrf.mxu0
  %v435 = vadd.f32 %v386, %v434
  %436 = vdwg.mxu0
  %437 = vmatpush.bf16.msra.mxu0 0
  %438 = vmatpush.bf16.msra.mxu0 0
  %439 = vmatpush.bf16.msra.mxu0 0
  %440 = vmatpush.bf16.msra.mxu0 0
  %441 = vmatpush.bf16.msra.mxu0 0
  %442 = vmatpush.bf16.msra.mxu0 0
  %443 = vmatpush.bf16.msra.mxu0 %v295
  %444 = vmatpush.bf16.msra.mxu0 %v294
  %445 = vmatmul.bf16.gmra.mxu0 %v316
  %v446 = vpop.f32.mrf.mxu0
  %v447 = vadd.f32 %v398, %v446
  %v448 = vpop.f32.mrf.mxu0
  %v449 = vadd.f32 %v400, %v448
  %450 = vmatmul.bf16.gmra.mxu0 %v319
  %v451 = vpop.f32.mrf.mxu0
  %v452 = vadd.f32 %v403, %v451
  %v453 = vpop.f32.mrf.mxu0
  %v454 = vadd.f32 %v405, %v453
  %455 = vmatmul.bf16.gmra.mxu0 %v322
  %v456 = vpop.f32.mrf.mxu0
  %v457 = vadd.f32 %v408, %v456
  %v458 = vpop.f32.mrf.mxu0
  %v459 = vadd.f32 %v410, %v458
  %460 = vmatmul.bf16.gmra.mxu0 %v325
  %v461 = vpop.f32.mrf.mxu0
  %v462 = vadd.f32 %v413, %v461
  %v463 = vpop.f32.mrf.mxu0
  %v464 = vadd.f32 %v415, %v463
  %465 = vmatmul.bf16.gmra.mxu0 %v328
  %v466 = vpop.f32.mrf.mxu0
  %v467 = vadd.f32 %v418, %v466
  %v468 = vpop.f32.mrf.mxu0
  %v469 = vadd.f32 %v420, %v468
  %470 = vmatmul.bf16.gmra.mxu0 %v331
  %v471 = vpop.f32.mrf.mxu0
  %v472 = vadd.f32 %v423, %v471
  %v473 = vpop.f32.mrf.mxu0
  %v474 = vadd.f32 %v425, %v473
  %475 = vmatmul.bf16.gmra.mxu0 %v334
  %v476 = vpop.f32.mrf.mxu0
  %v477 = vadd.f32 %v428, %v476
  %v478 = vpop.f32.mrf.mxu0
  %v479 = vadd.f32 %v430, %v478
  %480 = vmatmul.bf16.gmra.mxu0 %v337
  %v481 = vpop.f32.mrf.mxu0
  %v482 = vadd.f32 %v433, %v481
  %v483 = vpop.f32.mrf.mxu0
  %v484 = vadd.f32 %v435, %v483
  %485 = vdwg.mxu0
  %v486 = vld [vmem:[%s2] sm:$0x1]
  %v488 = vperm.slane %v486, 0
  %v490 = vmul.f32 %v447, %v488
  %v491 = vmul.f32 %v449, %v488
  %v492 = vmul.f32 %v452, %v488
  %v493 = vmul.f32 %v454, %v488
  %v494 = vmul.f32 %v457, %v488
  %v495 = vmul.f32 %v459, %v488
  %v496 = vmul.f32 %v462, %v488
  %v497 = vmul.f32 %v464, %v488
  %v498 = vmul.f32 %v467, %v488
  %v499 = vmul.f32 %v469, %v488
  %v500 = vmul.f32 %v472, %v488
  %v501 = vmul.f32 %v474, %v488
  %v502 = vmul.f32 %v477, %v488
  %v503 = vmul.f32 %v479, %v488
  %v504 = vmul.f32 %v482, %v488
  %v505 = vmul.f32 %v484, %v488
  %v506 = vld [vmem:[%s3] sm:$0x1]
  %v508 = vperm.slane %v506, 0
  %v510 = vadd.f32 %v490, %v508
  %v511 = vadd.f32 %v491, %v508
  %v512 = vadd.f32 %v492, %v508
  %v513 = vadd.f32 %v493, %v508
  %v514 = vadd.f32 %v494, %v508
  %v515 = vadd.f32 %v495, %v508
  %v516 = vadd.f32 %v496, %v508
  %v517 = vadd.f32 %v497, %v508
  %v518 = vadd.f32 %v498, %v508
  %v519 = vadd.f32 %v499, %v508
  %v520 = vadd.f32 %v500, %v508
  %v521 = vadd.f32 %v501, %v508
  %v522 = vadd.f32 %v502, %v508
  %v523 = vadd.f32 %v503, %v508
  %v524 = vadd.f32 %v504, %v508
  %v525 = vadd.f32 %v505, %v508
  %v526 = vmax.f32 %v510, 0.0
  %v527 = vmax.f32 %v511, 0.0
  %v528 = vmax.f32 %v512, 0.0
  %v529 = vmax.f32 %v513, 0.0
  %v530 = vmax.f32 %v514, 0.0
  %v531 = vmax.f32 %v515, 0.0
  %v532 = vmax.f32 %v516, 0.0
  %v533 = vmax.f32 %v517, 0.0
  %v534 = vmax.f32 %v518, 0.0
  %v535 = vmax.f32 %v519, 0.0
  %v536 = vmax.f32 %v520, 0.0
  %v537 = vmax.f32 %v521, 0.0
  %v538 = vmax.f32 %v522, 0.0
  %v539 = vmax.f32 %v523, 0.0
  %v540 = vmax.f32 %v524, 0.0
  %v541 = vmax.f32 %v525, 0.0
  %v542 = vpack.c.bf16 %v526, %v526
  %v543 = vpack.c.bf16 %v527, %v527
  %v544 = vpack.c.bf16 %v528, %v528
  %v545 = vpack.c.bf16 %v529, %v529
  %v546 = vpack.c.bf16 %v530, %v530
  %v547 = vpack.c.bf16 %v531, %v531
  %v548 = vpack.c.bf16 %v532, %v532
  %v549 = vpack.c.bf16 %v533, %v533
  %v550 = vpack.c.bf16 %v534, %v534
  %v551 = vpack.c.bf16 %v535, %v535
  %v552 = vpack.c.bf16 %v536, %v536
  %v553 = vpack.c.bf16 %v537, %v537
  %v554 = vpack.c.bf16 %v538, %v538
  %v555 = vpack.c.bf16 %v539, %v539
  %v556 = vpack.c.bf16 %v540, %v540
  %v557 = vpack.c.bf16 %v541, %v541
  %vm558 = vcmask 519168
  %559 = vst.msk [vmem:[%s4] sm:$0xf] %vm558, %v542
  %560 = vst.msk [vmem:[%s4 + $0x4] sm:$0xf] %vm558, %v543
  %561 = vst.msk [vmem:[%s4 + $0x8] sm:$0xf] %vm558, %v544
  %562 = vst.msk [vmem:[%s4 + $0xc] sm:$0xf] %vm558, %v545
  %563 = vst.msk [vmem:[%s4 + $0x10] sm:$0xf] %vm558, %v546
  %564 = vst.msk [vmem:[%s4 + $0x14] sm:$0xf] %vm558, %v547
  %565 = vst.msk [vmem:[%s4 + $0x18] sm:$0xf] %vm558, %v548
  %566 = vst.msk [vmem:[%s4 + $0x1c] sm:$0xf] %vm558, %v549
  %567 = vst.msk [vmem:[%s4 + $0x20] sm:$0xf] %vm558, %v550
  %568 = vst.msk [vmem:[%s4 + $0x24] sm:$0xf] %vm558, %v551
  %569 = vst.msk [vmem:[%s4 + $0x28] sm:$0xf] %vm558, %v552
  %570 = vst.msk [vmem:[%s4 + $0x2c] sm:$0xf] %vm558, %v553
  %571 = vst.msk [vmem:[%s4 + $0x30] sm:$0xf] %vm558, %v554
  %572 = vst.msk [vmem:[%s4 + $0x34] sm:$0xf] %vm558, %v555
  %573 = vst.msk [vmem:[%s4 + $0x38] sm:$0xf] %vm558, %v556
  %574 = vst.msk [vmem:[%s4 + $0x3c] sm:$0xf] %vm558, %v557
  // Predicated region
  $region18: #{net_forward.13} parent=0 // pred_check
    _
  $region19: #{net_forward.13} parent=0 // pred_check_branch
    %576 = sbr.rel (0) target = $region21
  $region20: #{net_forward.13} parent=0 // pred_region
    _
  $region21: #{net_forward.13} parent=0 // pred_fallthru
    _
  // Predicated region
  $region22: #{net_forward.13} parent=0 // pred_check
    _
  $region23: #{net_forward.13} parent=0 // pred_check_branch
    %578 = sbr.rel (0) target = $region25
  $region24: #{net_forward.13} parent=0 // pred_region
    _
  $region25: #{net_forward.13} parent=0 // pred_fallthru
    _

// kernel: net_forward.15
$region0: #{net_forward.15}
  #allocation0 [shape = 'u32[]', space=smem, size = 0x4, offset = 0x4, fixed_abs, tag = 'smem constant byte address 0x4 - core index']
  #allocation1 [shape = 'u32[72,128]{1,0:T(1,128)}', space=vmem, size = 0x9000, scoped, tag = 'internal scratch']
  %s0 = inlined_call_operand.vmem [shape: bf16[2,8,4,128], index: 0, kind: input, shape index: {}]
  %s1 = inlined_call_operand.vmem [shape: bf16[2,4,4,64], index: 1, kind: output, shape index: {}]
  %s2 = sld [smem:[#allocation0]]
  $region37: #{net_forward.15} parent=0
    _
  %s4 = ssub.s32 1, %s2
  %s5 = scalar_select 0, %s4, %s2
  loop: start=0, step=1, limit=4
  $region2: #{net_forward.15} parent=0 // loop_pre_header
    _
  $region3: #{net_forward.15} parent=0 // loop_header
    %s7 = sphi 0, %s11
    %p8 = scmp.ge.s32.totalorder %s7, 4
    %s17 = sphi 0, %s19
    %s20 = sphi 0, %s17
    %s21 = sphi 0, %s20
    %s37 = sphi 0, %s21
    %s43 = sphi 0, %s45
    %s46 = sphi 0, %s43
    %s47 = sphi 0, %s46
    %s63 = sphi 0, %s47
  $region4: #{net_forward.15} parent=0 // loop_header_branch
    %10 = sbr.rel (%p8) target = $region8
  $region5: #{net_forward.15} parent=0 // loop_body
    %s12 = ssub.s32 %s7, 1
    %s13 = ssub.s32 %s7, 2
    %s14 = sadd.s32 %s7, 1
    %s15 = ssub.s32 %s7, %s14
    %p16 = scmp.eq.s32.totalorder %s15, 0
    %s18 = sadd.s32 %s17, 1
    %s19 = scalar_select %p16, %s17, %s18
    %p22 = pneg %p16
    %p23 = scmp.eq.s32.totalorder %s7, 1
    %p24 = por %p22, %p23
    %p25 = scmp.ne.s32.totalorder %s17, %s20
    %p26 = scmp.eq.s32.totalorder %s7, 0
    %p27 = por %p25, %p26
    %p28 = scmp.ne.s32.totalorder %s17, %s20
    %p29 = scmp.eq.s32.totalorder %s12, 1
    %p30 = por %p28, %p29
    %p31 = scmp.ne.s32.totalorder %s20, %s21
    %p32 = scmp.eq.s32.totalorder %s12, 0
    %p33 = por %p31, %p32
    %p34 = scmp.ne.s32.totalorder %s20, %s21
    %p35 = scmp.eq.s32.totalorder %s13, 1
    %p36 = por %p34, %p35
    %p38 = scmp.ne.s32.totalorder %s21, %s37
    %p39 = scmp.eq.s32.totalorder %s13, 0
    %p40 = por %p38, %p39
    %s41 = ssub.s32 %s7, %s14
    %p42 = scmp.eq.s32.totalorder %s41, 0
    %s44 = sadd.s32 %s43, 1
    %s45 = scalar_select %p42, %s43, %s44
    %p48 = pneg %p42
    %p49 = scmp.eq.s32.totalorder %s7, 1
    %p50 = por %p48, %p49
    %p51 = scmp.ne.s32.totalorder %s43, %s46
    %p52 = scmp.eq.s32.totalorder %s7, 0
    %p53 = por %p51, %p52
    %p54 = scmp.ne.s32.totalorder %s43, %s46
    %p55 = scmp.eq.s32.totalorder %s12, 1
    %p56 = por %p54, %p55
    %p57 = scmp.ne.s32.totalorder %s46, %s47
    %p58 = scmp.eq.s32.totalorder %s12, 0
    %p59 = por %p57, %p58
    %p60 = scmp.ne.s32.totalorder %s46, %s47
    %p61 = scmp.eq.s32.totalorder %s13, 1
    %p62 = por %p60, %p61
    %p64 = scmp.ne.s32.totalorder %s47, %s63
    %p65 = scmp.eq.s32.totalorder %s13, 0
    %p66 = por %p64, %p65
    %p67 = scmp.le.s32.totalorder 1, %s7
    %p68 = scmp.lt.s32.totalorder %s7, 3
    %p69 = pnand %p67, %p68
    %p70 = pneg %p69
    // Predicated region
    $region9: #{net_forward.15} parent=5 // pred_check
      _
    $region10: #{net_forward.15} parent=5 // pred_check_branch
      %72 = sbr.rel (%p69) target = $region12
    $region11: #{net_forward.15} parent=5 // pred_region
      %s73 = ssub.s32 %s7, 1
    $region12: #{net_forward.15} parent=5 // pred_fallthru
      _
    %p74 = scmp.lt.s32.totalorder %s7, 2
    // Predicated region
    $region13: #{net_forward.15} parent=5 // pred_check
      %p75 = pneg %p74
    $region14: #{net_forward.15} parent=5 // pred_check_branch
      %77 = sbr.rel (%p75) target = $region16
    $region15: #{net_forward.15} parent=5 // pred_region
      // Predicated region
      $region17: #{net_forward.15} parent=15 // pred_check
        %p78 = pneg %p27
      $region18: #{net_forward.15} parent=15 // pred_check_branch
        %80 = sbr.rel (%p78) target = $region20
      $region19: #{net_forward.15} parent=15 // pred_region
        %p81 = scmp.lt.s32.totalorder %s7, 1
        %s82 = scalar_select %p81, %s7, 1
        %s83 = smul.addr %s82, 8
        %s84 = smul.addr %s83, 2
        %s85 = scalar_lea.vmem %s0, %s84
      $region20: #{net_forward.15} parent=15 // pred_fallthru
        _
    $region16: #{net_forward.15} parent=5 // pred_fallthru
      _
    %p86 = scmp.le.s32.totalorder 1, %s7
    %p87 = scmp.lt.s32.totalorder %s7, 3
    %p88 = pnand %p86, %p87
    %p89 = pneg %p88
    // Predicated region
    $region21: #{net_forward.15} parent=5 // pred_check
      _
    $region22: #{net_forward.15} parent=5 // pred_check_branch
      %91 = sbr.rel (%p88) target = $region24
    $region23: #{net_forward.15} parent=5 // pred_region
      %s92 = ssub.s32 %s7, 1
      %p93 = scmp.lt.s32.totalorder %s12, 1
      %s94 = scalar_select %p93, %s12, 1
      %s95 = smul.addr %s94, 8
      %s96 = smul.addr %s95, 2
      %s97 = scalar_lea.vmem %s0, %s96
      %p98 = pneg %p33
      %p99 = pneg %p30
      %p100 = pneg %p59
      %p101 = pneg %p56
      %p102 = scmp.lt.s32.totalorder %s12, 1
      %s103 = scalar_select %p102, %s12, 1
      %s104 = smul.addr %s103, 4
      %s105 = smul.addr %s104, 2
      %s106 = scalar_lea.vmem %s1, %s105
      %p107 = scmp.lt.s32.totalorder %s12, 1
      %s108 = scalar_select %p107, %s12, 1
      %s109 = smul.addr %s108, 8
      %s110 = smul.addr %s109, 2
      %s111 = scalar_lea.vmem %s0, %s110
      %p112 = scmp.lt.s32.totalorder %s12, 1
      %s113 = scalar_select %p112, %s12, 1
      %s114 = smul.addr %s113, 4
      %s115 = smul.addr %s114, 2
      %s116 = scalar_lea.vmem %s1, %s115
      %v117 = vld [vmem:[%s111] sm:$0x3]
      %v118 = vld [vmem:[%s111 + $0x2] sm:$0x3]
      %v119 = vld [vmem:[%s111 + $0x4] sm:$0x3]
      %v120 = vld [vmem:[%s111 + $0x6] sm:$0x3]
      %v121 = vld [vmem:[%s111 + $0x8] sm:$0x3]
      %v122 = vld [vmem:[%s111 + $0xa] sm:$0x3]
      %v123 = vld [vmem:[%s111 + $0xc] sm:$0x3]
      %v124 = vld [vmem:[%s111 + $0xe] sm:$0x3]
      %v125 = vunpack.c.l.bf16 %v117
      %v126 = vunpack.c.l.bf16 %v119
      %v127 = vunpack.c.l.bf16 %v121
      %v128 = vunpack.c.l.bf16 %v123
      %v129 = vunpack.c.l.bf16 %v118
      %v130 = vunpack.c.l.bf16 %v120
      %v131 = vunpack.c.l.bf16 %v122
      %v132 = vunpack.c.l.bf16 %v124
      %v133 = vmax.f32 %v125, %v129
      %v134 = vmax.f32 %v126, %v130
      %v135 = vmax.f32 %v127, %v131
      %v136 = vmax.f32 %v128, %v132
      %v137 = vpack.c.bf16 %v133, %v133
      %v138 = vpack.c.bf16 %v134, %v134
      %v139 = vpack.c.bf16 %v135, %v135
      %v140 = vpack.c.bf16 %v136, %v136
      %v141 = vunpack.c.l.bf16 %v137
      %v142 = vunpack.c.l.bf16 %v138
      %v143 = vunpack.c.l.bf16 %v139
      %v144 = vunpack.c.l.bf16 %v140
      %149 = vrot.lane.b32.xlu0 %v141, 64
      %v150 = vpop.permute.xlu0 %149
      %151 = vrot.lane.b32.xlu0 %v142, 64
      %v152 = vpop.permute.xlu0 %151
      %153 = vrot.lane.b32.xlu0 %v143, 64
      %v154 = vpop.permute.xlu0 %153
      %155 = vrot.lane.b32.xlu0 %v144, 64
      %v156 = vpop.permute.xlu0 %155
      %v161 = vmax.f32 %v141, %v150
      %v162 = vmax.f32 %v142, %v152
      %v163 = vmax.f32 %v143, %v154
      %v164 = vmax.f32 %v144, %v156
      %v165 = vpack.c.bf16 %v161, %v161
      %v166 = vpack.c.bf16 %v162, %v162
      %v167 = vpack.c.bf16 %v163, %v163
      %v168 = vpack.c.bf16 %v164, %v164
      %vm169 = vcmask 517120
      %170 = vst.msk [vmem:[%s116] sm:$0x3] %vm169, %v165
      %171 = vst.msk [vmem:[%s116 + $0x2] sm:$0x3] %vm169, %v166
      %172 = vst.msk [vmem:[%s116 + $0x4] sm:$0x3] %vm169, %v167
      %173 = vst.msk [vmem:[%s116 + $0x6] sm:$0x3] %vm169, %v168
      %p174 = scmp.lt.s32.totalorder %s12, 1
      %s175 = scalar_select %p174, %s12, 1
      %s176 = smul.addr %s175, 4
      %s177 = smul.addr %s176, 2
      %s178 = scalar_lea.vmem %s1, %s177
      // Predicated region
      $region25: #{net_forward.15} parent=23 // pred_check
        %p179 = pneg %p56
      $region26: #{net_forward.15} parent=23 // pred_check_branch
        %181 = sbr.rel (%p179) target = $region28
      $region27: #{net_forward.15} parent=23 // pred_region
        _
      $region28: #{net_forward.15} parent=23 // pred_fallthru
        _
    $region24: #{net_forward.15} parent=5 // pred_fallthru
      _
    %p182 = scmp.le.s32.totalorder 2, %s7
    // Predicated region
    $region29: #{net_forward.15} parent=5 // pred_check
      %p183 = pneg %p182
    $region30: #{net_forward.15} parent=5 // pred_check_branch
      %185 = sbr.rel (%p183) target = $region32
    $region31: #{net_forward.15} parent=5 // pred_region
      %s186 = ssub.s32 %s7, 2
      // Predicated region
      $region33: #{net_forward.15} parent=31 // pred_check
        %p187 = pneg %p62
      $region34: #{net_forward.15} parent=31 // pred_check_branch
        %189 = sbr.rel (%p187) target = $region36
      $region35: #{net_forward.15} parent=31 // pred_region
        %p190 = scmp.lt.s32.totalorder %s13, 1
        %s191 = scalar_select %p190, %s13, 1
        %s192 = smul.addr %s191, 4
        %s193 = smul.addr %s192, 2
        %s194 = scalar_lea.vmem %s1, %s193
      $region36: #{net_forward.15} parent=31 // pred_fallthru
        _
    $region32: #{net_forward.15} parent=5 // pred_fallthru
      _
  $region6: #{net_forward.15} parent=0 // loop_footer
    %s11 = sadd.s32 1, %s7
  $region7: #{net_forward.15} parent=0 // loop_footer_branch
    %6 = sbr.rel target = $region3
  $region8: #{net_forward.15} parent=0 // loop_exit
    _

// kernel: net_forward.14
$region0: #{net_forward.14}
  #allocation0 [shape = 'u32[]', space=smem, size = 0x4, offset = 0x4, fixed_abs, tag = 'smem constant byte address 0x4 - core index']
  #allocation1 [shape = 'u32[72,128]{1,0:T(1,128)}', space=vmem, size = 0x9000, scoped, tag = 'internal scratch']
  %s0 = inlined_call_operand.vmem [shape: bf16[128,576], index: 0, kind: input, shape index: {}]
  %s1 = inlined_call_operand.vmem [shape: bf16[576,64], index: 1, kind: input, shape index: {}]
  %s2 = inlined_call_operand.vmem [shape: f32[1,64], index: 2, kind: input, shape index: {}]
  %s3 = inlined_call_operand.vmem [shape: f32[1,64], index: 3, kind: input, shape index: {}]
  %s4 = inlined_call_operand.vmem [shape: bf16[128,64], index: 4, kind: output, shape index: {}]
  %s5 = sld [smem:[#allocation0]]
  $region26: #{net_forward.14} parent=0
    _
  %s7 = ssub.s32 1, %s5
  %s8 = scalar_select 0, %s7, %s5
  // Predicated region
  $region2: #{net_forward.14} parent=0 // pred_check
    _
  $region3: #{net_forward.14} parent=0 // pred_check_branch
    %10 = sbr.rel (0) target = $region5
  $region4: #{net_forward.14} parent=0 // pred_region
    _
  $region5: #{net_forward.14} parent=0 // pred_fallthru
    _
  // Predicated region
  $region6: #{net_forward.14} parent=0 // pred_check
    _
  $region7: #{net_forward.14} parent=0 // pred_check_branch
    %12 = sbr.rel (0) target = $region9
  $region8: #{net_forward.14} parent=0 // pred_region
    _
  $region9: #{net_forward.14} parent=0 // pred_fallthru
    _
  // Predicated region
  $region10: #{net_forward.14} parent=0 // pred_check
    _
  $region11: #{net_forward.14} parent=0 // pred_check_branch
    %14 = sbr.rel (0) target = $region13
  $region12: #{net_forward.14} parent=0 // pred_region
    _
  $region13: #{net_forward.14} parent=0 // pred_fallthru
    _
  // Predicated region
  $region14: #{net_forward.14} parent=0 // pred_check
    _
  $region15: #{net_forward.14} parent=0 // pred_check_branch
    %16 = sbr.rel (0) target = $region17
  $region16: #{net_forward.14} parent=0 // pred_region
    _
  $region17: #{net_forward.14} parent=0 // pred_fallthru
    _
  %v18 = vld [vmem:[%s0] sm:$0xff]
  %v19 = vld [vmem:[%s0 + $0x8] sm:$0xff]
  %v20 = vld [vmem:[%s0 + $0x10] sm:$0xf]
  %v21 = vld [vmem:[%s0 + $0x14] sm:$0xff]
  %v22 = vld [vmem:[%s0 + $0x1c] sm:$0xff]
  %v23 = vld [vmem:[%s0 + $0x24] sm:$0xf]
  %v24 = vld [vmem:[%s0 + $0x28] sm:$0xff]
  %v25 = vld [vmem:[%s0 + $0x30] sm:$0xff]
  %v26 = vld [vmem:[%s0 + $0x38] sm:$0xf]
  %v27 = vld [vmem:[%s0 + $0x3c] sm:$0xff]
  %v28 = vld [vmem:[%s0 + $0x44] sm:$0xff]
  %v29 = vld [vmem:[%s0 + $0x4c] sm:$0xf]
  %v30 = vld [vmem:[%s0 + $0x50] sm:$0xff]
  %v31 = vld [vmem:[%s0 + $0x58] sm:$0xff]
  %v32 = vld [vmem:[%s0 + $0x60] sm:$0xf]
  %v33 = vld [vmem:[%s0 + $0x64] sm:$0xff]
  %v34 = vld [vmem:[%s0 + $0x6c] sm:$0xff]
  %v35 = vld [vmem:[%s0 + $0x74] sm:$0xf]
  %v36 = vld [vmem:[%s0 + $0x78] sm:$0xff]
  %v37 = vld [vmem:[%s0 + $0x80] sm:$0xff]
  %v38 = vld [vmem:[%s0 + $0x88] sm:$0xf]
  %v39 = vld [vmem:[%s0 + $0x8c] sm:$0xff]
  %v40 = vld [vmem:[%s0 + $0x94] sm:$0xff]
  %v41 = vld [vmem:[%s0 + $0x9c] sm:$0xf]
  %v42 = vld [vmem:[%s0 + $0xa0] sm:$0xff]
  %v43 = vld [vmem:[%s0 + $0xa8] sm:$0xff]
  %v44 = vld [vmem:[%s0 + $0xb0] sm:$0xf]
  %v45 = vld [vmem:[%s0 + $0xb4] sm:$0xff]
  %v46 = vld [vmem:[%s0 + $0xbc] sm:$0xff]
  %v47 = vld [vmem:[%s0 + $0xc4] sm:$0xf]
  %v48 = vld [vmem:[%s0 + $0xc8] sm:$0xff]
  %v49 = vld [vmem:[%s0 + $0xd0] sm:$0xff]
  %v50 = vld [vmem:[%s0 + $0xd8] sm:$0xf]
  %v51 = vld [vmem:[%s0 + $0xdc] sm:$0xff]
  %v52 = vld [vmem:[%s0 + $0xe4] sm:$0xff]
  %v53 = vld [vmem:[%s0 + $0xec] sm:$0xf]
  %v54 = vld [vmem:[%s0 + $0xf0] sm:$0xff]
  %v55 = vld [vmem:[%s0 + $0xf8] sm:$0xff]
  %v56 = vld [vmem:[%s0 + $0x100] sm:$0xf]
  %v57 = vld [vmem:[%s0 + $0x104] sm:$0xff]
  %v58 = vld [vmem:[%s0 + $0x10c] sm:$0xff]
  %v59 = vld [vmem:[%s0 + $0x114] sm:$0xf]
  %v60 = vld [vmem:[%s0 + $0x118] sm:$0xff]
  %v61 = vld [vmem:[%s0 + $0x120] sm:$0xff]
  %v62 = vld [vmem:[%s0 + $0x128] sm:$0xf]
  %v63 = vld [vmem:[%s0 + $0x12c] sm:$0xff]
  %v64 = vld [vmem:[%s0 + $0x134] sm:$0xff]
  %v65 = vld [vmem:[%s0 + $0x13c] sm:$0xf]
  %v66 = vld [vmem:[%s1] sm:$0xf]
  %v67 = vld [vmem:[%s1 + $0x4] sm:$0xf]
  %v68 = vld [vmem:[%s1 + $0x8] sm:$0xf]
  %v69 = vld [vmem:[%s1 + $0xc] sm:$0xf]
  %v70 = vld [vmem:[%s1 + $0x10] sm:$0xf]
  %v71 = vld [vmem:[%s1 + $0x14] sm:$0xf]
  %v72 = vld [vmem:[%s1 + $0x18] sm:$0xf]
  %v73 = vld [vmem:[%s1 + $0x1c] sm:$0xf]
  %v74 = vld [vmem:[%s1 + $0x20] sm:$0xf]
  %v75 = vld [vmem:[%s1 + $0x24] sm:$0xf]
  %v76 = vld [vmem:[%s1 + $0x28] sm:$0xf]
  %v77 = vld [vmem:[%s1 + $0x2c] sm:$0xf]
  %v78 = vld [vmem:[%s1 + $0x30] sm:$0xf]
  %v79 = vld [vmem:[%s1 + $0x34] sm:$0xf]
  %v80 = vld [vmem:[%s1 + $0x38] sm:$0xf]
  %v81 = vld [vmem:[%s1 + $0x3c] sm:$0xf]
  %v82 = vld [vmem:[%s1 + $0x40] sm:$0xf]
  %v83 = vld [vmem:[%s1 + $0x44] sm:$0xf]
  %v84 = vld [vmem:[%s1 + $0x48] sm:$0xf]
  %v85 = vld [vmem:[%s1 + $0x4c] sm:$0xf]
  %v86 = vld [vmem:[%s1 + $0x50] sm:$0xf]
  %v87 = vld [vmem:[%s1 + $0x54] sm:$0xf]
  %v88 = vld [vmem:[%s1 + $0x58] sm:$0xf]
  %v89 = vld [vmem:[%s1 + $0x5c] sm:$0xf]
  %v90 = vld [vmem:[%s1 + $0x60] sm:$0xf]
  %v91 = vld [vmem:[%s1 + $0x64] sm:$0xf]
  %v92 = vld [vmem:[%s1 + $0x68] sm:$0xf]
  %v93 = vld [vmem:[%s1 + $0x6c] sm:$0xf]
  %v94 = vld [vmem:[%s1 + $0x70] sm:$0xf]
  %v95 = vld [vmem:[%s1 + $0x74] sm:$0xf]
  %v96 = vld [vmem:[%s1 + $0x78] sm:$0xf]
  %v97 = vld [vmem:[%s1 + $0x7c] sm:$0xf]
  %v98 = vld [vmem:[%s1 + $0x80] sm:$0xf]
  %v99 = vld [vmem:[%s1 + $0x84] sm:$0xf]
  %v100 = vld [vmem:[%s1 + $0x88] sm:$0xf]
  %v101 = vld [vmem:[%s1 + $0x8c] sm:$0xf]
  %v102 = vld [vmem:[%s1 + $0x90] sm:$0xf]
  %v103 = vld [vmem:[%s1 + $0x94] sm:$0xf]
  %v104 = vld [vmem:[%s1 + $0x98] sm:$0xf]
  %v105 = vld [vmem:[%s1 + $0x9c] sm:$0xf]
  %v106 = vld [vmem:[%s1 + $0xa0] sm:$0xf]
  %v107 = vld [vmem:[%s1 + $0xa4] sm:$0xf]
  %v108 = vld [vmem:[%s1 + $0xa8] sm:$0xf]
  %v109 = vld [vmem:[%s1 + $0xac] sm:$0xf]
  %v110 = vld [vmem:[%s1 + $0xb0] sm:$0xf]
  %v111 = vld [vmem:[%s1 + $0xb4] sm:$0xf]
  %v112 = vld [vmem:[%s1 + $0xb8] sm:$0xf]
  %v113 = vld [vmem:[%s1 + $0xbc] sm:$0xf]
  %v114 = vld [vmem:[%s1 + $0xc0] sm:$0xf]
  %v115 = vld [vmem:[%s1 + $0xc4] sm:$0xf]
  %v116 = vld [vmem:[%s1 + $0xc8] sm:$0xf]
  %v117 = vld [vmem:[%s1 + $0xcc] sm:$0xf]
  %v118 = vld [vmem:[%s1 + $0xd0] sm:$0xf]
  %v119 = vld [vmem:[%s1 + $0xd4] sm:$0xf]
  %v120 = vld [vmem:[%s1 + $0xd8] sm:$0xf]
  %v121 = vld [vmem:[%s1 + $0xdc] sm:$0xf]
  %v122 = vld [vmem:[%s1 + $0xe0] sm:$0xf]
  %v123 = vld [vmem:[%s1 + $0xe4] sm:$0xf]
  %v124 = vld [vmem:[%s1 + $0xe8] sm:$0xf]
  %v125 = vld [vmem:[%s1 + $0xec] sm:$0xf]
  %v126 = vld [vmem:[%s1 + $0xf0] sm:$0xf]
  %v127 = vld [vmem:[%s1 + $0xf4] sm:$0xf]
  %v128 = vld [vmem:[%s1 + $0xf8] sm:$0xf]
  %v129 = vld [vmem:[%s1 + $0xfc] sm:$0xf]
  %v130 = vld [vmem:[%s1 + $0x100] sm:$0xf]
  %v131 = vld [vmem:[%s1 + $0x104] sm:$0xf]
  %v132 = vld [vmem:[%s1 + $0x108] sm:$0xf]
  %v133 = vld [vmem:[%s1 + $0x10c] sm:$0xf]
  %v134 = vld [vmem:[%s1 + $0x110] sm:$0xf]
  %v135 = vld [vmem:[%s1 + $0x114] sm:$0xf]
  %v136 = vld [vmem:[%s1 + $0x118] sm:$0xf]
  %v137 = vld [vmem:[%s1 + $0x11c] sm:$0xf]
  %v186 = vunpack.c.l.b16 %v18
  %v187 = vunpack.c.h.b16 %v18
  %v188 = vunpack.c.l.b16 %v19
  %v189 = vunpack.c.h.b16 %v19
  %v190 = vunpack.c.l.b16 %v20
  %v191 = vunpack.c.l.b16 %v21
  %v192 = vunpack.c.h.b16 %v21
  %v193 = vunpack.c.l.b16 %v22
  %v194 = vunpack.c.h.b16 %v22
  %v195 = vunpack.c.l.b16 %v23
  %v196 = vunpack.c.l.b16 %v24
  %v197 = vunpack.c.h.b16 %v24
  %v198 = vunpack.c.l.b16 %v25
  %v199 = vunpack.c.h.b16 %v25
  %v200 = vunpack.c.l.b16 %v26
  %v201 = vunpack.c.l.b16 %v27
  %v202 = vunpack.c.h.b16 %v27
  %v203 = vunpack.c.l.b16 %v28
  %v204 = vunpack.c.h.b16 %v28
  %v205 = vunpack.c.l.b16 %v29
  %v206 = vunpack.c.l.b16 %v30
  %v207 = vunpack.c.h.b16 %v30
  %v208 = vunpack.c.l.b16 %v31
  %v209 = vunpack.c.h.b16 %v31
  %v210 = vunpack.c.l.b16 %v32
  %v211 = vunpack.c.l.b16 %v33
  %v212 = vunpack.c.h.b16 %v33
  %v213 = vunpack.c.l.b16 %v34
  %v214 = vunpack.c.h.b16 %v34
  %v215 = vunpack.c.l.b16 %v35
  %v216 = vunpack.c.l.b16 %v36
  %v217 = vunpack.c.h.b16 %v36
  %v218 = vunpack.c.l.b16 %v37
  %v219 = vunpack.c.h.b16 %v37
  %v220 = vunpack.c.l.b16 %v38
  %v221 = vunpack.c.l.b16 %v39
  %v222 = vunpack.c.h.b16 %v39
  %v223 = vunpack.c.l.b16 %v40
  %v224 = vunpack.c.h.b16 %v40
  %v225 = vunpack.c.l.b16 %v41
  %v226 = vunpack.c.l.b16 %v42
  %v227 = vunpack.c.h.b16 %v42
  %v228 = vunpack.c.l.b16 %v43
  %v229 = vunpack.c.h.b16 %v43
  %v230 = vunpack.c.l.b16 %v44
  %v231 = vunpack.c.l.b16 %v45
  %v232 = vunpack.c.h.b16 %v45
  %v233 = vunpack.c.l.b16 %v46
  %v234 = vunpack.c.h.b16 %v46
  %v235 = vunpack.c.l.b16 %v47
  %v236 = vunpack.c.l.b16 %v48
  %v237 = vunpack.c.h.b16 %v48
  %v238 = vunpack.c.l.b16 %v49
  %v239 = vunpack.c.h.b16 %v49
  %v240 = vunpack.c.l.b16 %v50
  %v241 = vunpack.c.l.b16 %v51
  %v242 = vunpack.c.h.b16 %v51
  %v243 = vunpack.c.l.b16 %v52
  %v244 = vunpack.c.h.b16 %v52
  %v245 = vunpack.c.l.b16 %v53
  %v246 = vunpack.c.l.b16 %v54
  %v247 = vunpack.c.h.b16 %v54
  %v248 = vunpack.c.l.b16 %v55
  %v249 = vunpack.c.h.b16 %v55
  %v250 = vunpack.c.l.b16 %v56
  %v251 = vunpack.c.l.b16 %v57
  %v252 = vunpack.c.h.b16 %v57
  %v253 = vunpack.c.l.b16 %v58
  %v254 = vunpack.c.h.b16 %v58
  %v255 = vunpack.c.l.b16 %v59
  %v256 = vunpack.c.l.b16 %v60
  %v257 = vunpack.c.h.b16 %v60
  %v258 = vunpack.c.l.b16 %v61
  %v259 = vunpack.c.h.b16 %v61
  %v260 = vunpack.c.l.b16 %v62
  %v261 = vunpack.c.l.b16 %v63
  %v262 = vunpack.c.h.b16 %v63
  %v263 = vunpack.c.l.b16 %v64
  %v264 = vunpack.c.h.b16 %v64
  %v265 = vunpack.c.l.b16 %v65
  %v266 = vpack.c.b16 %v191, %v186
  %v267 = vpack.c.b16 %v192, %v187
  %v268 = vpack.c.b16 %v193, %v188
  %v269 = vpack.c.b16 %v194, %v189
  %v270 = vpack.c.b16 %v195, %v190
  %v271 = vpack.c.b16 %v201, %v196
  %v272 = vpack.c.b16 %v202, %v197
  %v273 = vpack.c.b16 %v203, %v198
  %v274 = vpack.c.b16 %v204, %v199
  %v275 = vpack.c.b16 %v205, %v200
  %v276 = vpack.c.b16 %v211, %v206
  %v277 = vpack.c.b16 %v212, %v207
  %v278 = vpack.c.b16 %v213, %v208
  %v279 = vpack.c.b16 %v214, %v209
  %v280 = vpack.c.b16 %v215, %v210
  %v281 = vpack.c.b16 %v221, %v216
  %v282 = vpack.c.b16 %v222, %v217
  %v283 = vpack.c.b16 %v223, %v218
  %v284 = vpack.c.b16 %v224, %v219
  %v285 = vpack.c.b16 %v225, %v220
  %v286 = vpack.c.b16 %v231, %v226
  %v287 = vpack.c.b16 %v232, %v227
  %v288 = vpack.c.b16 %v233, %v228
  %v289 = vpack.c.b16 %v234, %v229
  %v290 = vpack.c.b16 %v235, %v230
  %v291 = vpack.c.b16 %v241, %v236
  %v292 = vpack.c.b16 %v242, %v237
  %v293 = vpack.c.b16 %v243, %v238
  %v294 = vpack.c.b16 %v244, %v239
  %v295 = vpack.c.b16 %v245, %v240
  %v296 = vpack.c.b16 %v251, %v246
  %v297 = vpack.c.b16 %v252, %v247
  %v298 = vpack.c.b16 %v253, %v248
  %v299 = vpack.c.b16 %v254, %v249
  %v300 = vpack.c.b16 %v255, %v250
  %v301 = vpack.c.b16 %v261, %v256
  %v302 = vpack.c.b16 %v262, %v257
  %v303 = vpack.c.b16 %v263, %v258
  %v304 = vpack.c.b16 %v264, %v259
  %v305 = vpack.c.b16 %v265, %v260
  %v410 = vunpack.c.l.b16 %v66
  %v411 = vunpack.c.l.b16 %v67
  %v412 = vunpack.c.l.b16 %v68
  %v413 = vunpack.c.l.b16 %v69
  %v414 = vunpack.c.l.b16 %v70
  %v415 = vunpack.c.l.b16 %v71
  %v416 = vunpack.c.l.b16 %v72
  %v417 = vunpack.c.l.b16 %v73
  %v418 = vunpack.c.l.b16 %v74
  %v419 = vunpack.c.l.b16 %v75
  %v420 = vunpack.c.l.b16 %v76
  %v421 = vunpack.c.l.b16 %v77
  %v422 = vunpack.c.l.b16 %v78
  %v423 = vunpack.c.l.b16 %v79
  %v424 = vunpack.c.l.b16 %v80
  %v425 = vunpack.c.l.b16 %v81
  %v426 = vunpack.c.l.b16 %v82
  %v427 = vunpack.c.l.b16 %v83
  %v428 = vunpack.c.l.b16 %v84
  %v429 = vunpack.c.l.b16 %v85
  %v430 = vunpack.c.l.b16 %v86
  %v431 = vunpack.c.l.b16 %v87
  %v432 = vunpack.c.l.b16 %v88
  %v433 = vunpack.c.l.b16 %v89
  %v434 = vunpack.c.l.b16 %v90
  %v435 = vunpack.c.l.b16 %v91
  %v436 = vunpack.c.l.b16 %v92
  %v437 = vunpack.c.l.b16 %v93
  %v438 = vunpack.c.l.b16 %v94
  %v439 = vunpack.c.l.b16 %v95
  %v440 = vunpack.c.l.b16 %v96
  %v441 = vunpack.c.l.b16 %v97
  %v442 = vunpack.c.l.b16 %v98
  %v443 = vunpack.c.l.b16 %v99
  %v444 = vunpack.c.l.b16 %v100
  %v445 = vunpack.c.l.b16 %v101
  %v446 = vunpack.c.l.b16 %v102
  %v447 = vunpack.c.l.b16 %v103
  %v448 = vunpack.c.l.b16 %v104
  %v449 = vunpack.c.l.b16 %v105
  %v450 = vunpack.c.l.b16 %v106
  %v451 = vunpack.c.l.b16 %v107
  %v452 = vunpack.c.l.b16 %v108
  %v453 = vunpack.c.l.b16 %v109
  %v454 = vunpack.c.l.b16 %v110
  %v455 = vunpack.c.l.b16 %v111
  %v456 = vunpack.c.l.b16 %v112
  %v457 = vunpack.c.l.b16 %v113
  %v458 = vunpack.c.l.b16 %v114
  %v459 = vunpack.c.l.b16 %v115
  %v460 = vunpack.c.l.b16 %v116
  %v461 = vunpack.c.l.b16 %v117
  %v462 = vunpack.c.l.b16 %v118
  %v463 = vunpack.c.l.b16 %v119
  %v464 = vunpack.c.l.b16 %v120
  %v465 = vunpack.c.l.b16 %v121
  %v466 = vunpack.c.l.b16 %v122
  %v467 = vunpack.c.l.b16 %v123
  %v468 = vunpack.c.l.b16 %v124
  %v469 = vunpack.c.l.b16 %v125
  %v470 = vunpack.c.l.b16 %v126
  %v471 = vunpack.c.l.b16 %v127
  %v472 = vunpack.c.l.b16 %v128
  %v473 = vunpack.c.l.b16 %v129
  %v474 = vunpack.c.l.b16 %v130
  %v475 = vunpack.c.l.b16 %v131
  %v476 = vunpack.c.l.b16 %v132
  %v477 = vunpack.c.l.b16 %v133
  %v478 = vunpack.c.l.b16 %v134
  %v479 = vunpack.c.l.b16 %v135
  %v480 = vunpack.c.l.b16 %v136
  %v481 = vunpack.c.l.b16 %v137
  %v482 = vpack.c.b16 %v411, %v410
  %v483 = vpack.c.b16 %v413, %v412
  %v484 = vpack.c.b16 %v415, %v414
  %v485 = vpack.c.b16 %v417, %v416
  %v486 = vpack.c.b16 %v419, %v418
  %v487 = vpack.c.b16 %v421, %v420
  %v488 = vpack.c.b16 %v423, %v422
  %v489 = vpack.c.b16 %v425, %v424
  %v490 = vpack.c.b16 %v427, %v426
  %v491 = vpack.c.b16 %v429, %v428
  %v492 = vpack.c.b16 %v431, %v430
  %v493 = vpack.c.b16 %v433, %v432
  %v494 = vpack.c.b16 %v435, %v434
  %v495 = vpack.c.b16 %v437, %v436
  %v496 = vpack.c.b16 %v439, %v438
  %v497 = vpack.c.b16 %v441, %v440
  %v498 = vpack.c.b16 %v443, %v442
  %v499 = vpack.c.b16 %v445, %v444
  %v500 = vpack.c.b16 %v447, %v446
  %v501 = vpack.c.b16 %v449, %v448
  %v502 = vpack.c.b16 %v451, %v450
  %v503 = vpack.c.b16 %v453, %v452
  %v504 = vpack.c.b16 %v455, %v454
  %v505 = vpack.c.b16 %v457, %v456
  %v506 = vpack.c.b16 %v459, %v458
  %v507 = vpack.c.b16 %v461, %v460
  %v508 = vpack.c.b16 %v463, %v462
  %v509 = vpack.c.b16 %v465, %v464
  %v510 = vpack.c.b16 %v467, %v466
  %v511 = vpack.c.b16 %v469, %v468
  %v512 = vpack.c.b16 %v471, %v470
  %v513 = vpack.c.b16 %v473, %v472
  %v514 = vpack.c.b16 %v475, %v474
  %v515 = vpack.c.b16 %v477, %v476
  %v516 = vpack.c.b16 %v479, %v478
  %v517 = vpack.c.b16 %v481, %v480
  %vm554 = vcmask 523264
  %v556 = vsel %vm554, %v270, 0
  %v559 = vsel %vm554, %v275, 0
  %v562 = vsel %vm554, %v280, 0
  %v565 = vsel %vm554, %v285, 0
  %v568 = vsel %vm554, %v290, 0
  %v571 = vsel %vm554, %v295, 0
  %v574 = vsel %vm554, %v300, 0
  %v577 = vsel %vm554, %v305, 0
  %579 = vmatpush.bf16.msra.mxu0 %v489
  %580 = vmatpush.bf16.msra.mxu0 %v488
  %581 = vmatpush.bf16.msra.mxu0 %v487
  %582 = vmatpush.bf16.msra.mxu0 %v486
  %583 = vmatpush.bf16.msra.mxu0 %v485
  %584 = vmatpush.bf16.msra.mxu0 %v484
  %585 = vmatpush.bf16.msra.mxu0 %v483
  %586 = vmatpush.bf16.msra.mxu0 %v482
  %587 = vmatmul.bf16.gmra.mxu0 %v266
  %v588 = vpop.f32.mrf.mxu0
  %v589 = vadd.f32 0.0, %v588
  %v590 = vpop.f32.mrf.mxu0
  %v591 = vadd.f32 0.0, %v590
  %592 = vmatmul.bf16.gmra.mxu0 %v271
  %v593 = vpop.f32.mrf.mxu0
  %v594 = vadd.f32 0.0, %v593
  %v595 = vpop.f32.mrf.mxu0
  %v596 = vadd.f32 0.0, %v595
  %597 = vmatmul.bf16.gmra.mxu0 %v276
  %v598 = vpop.f32.mrf.mxu0
  %v599 = vadd.f32 0.0, %v598
  %v600 = vpop.f32.mrf.mxu0
  %v601 = vadd.f32 0.0, %v600
  %602 = vmatmul.bf16.gmra.mxu0 %v281
  %v603 = vpop.f32.mrf.mxu0
  %v604 = vadd.f32 0.0, %v603
  %v605 = vpop.f32.mrf.mxu0
  %v606 = vadd.f32 0.0, %v605
  %607 = vmatmul.bf16.gmra.mxu0 %v286
  %v608 = vpop.f32.mrf.mxu0
  %v609 = vadd.f32 0.0, %v608
  %v610 = vpop.f32.mrf.mxu0
  %v611 = vadd.f32 0.0, %v610
  %612 = vmatmul.bf16.gmra.mxu0 %v291
  %v613 = vpop.f32.mrf.mxu0
  %v614 = vadd.f32 0.0, %v613
  %v615 = vpop.f32.mrf.mxu0
  %v616 = vadd.f32 0.0, %v615
  %617 = vmatmul.bf16.gmra.mxu0 %v296
  %v618 = vpop.f32.mrf.mxu0
  %v619 = vadd.f32 0.0, %v618
  %v620 = vpop.f32.mrf.mxu0
  %v621 = vadd.f32 0.0, %v620
  %622 = vmatmul.bf16.gmra.mxu0 %v301
  %v623 = vpop.f32.mrf.mxu0
  %v624 = vadd.f32 0.0, %v623
  %v625 = vpop.f32.mrf.mxu0
  %v626 = vadd.f32 0.0, %v625
  %627 = vdwg.mxu0
  %628 = vmatpush.bf16.msra.mxu0 %v497
  %629 = vmatpush.bf16.msra.mxu0 %v496
  %630 = vmatpush.bf16.msra.mxu0 %v495
  %631 = vmatpush.bf16.msra.mxu0 %v494
  %632 = vmatpush.bf16.msra.mxu0 %v493
  %633 = vmatpush.bf16.msra.mxu0 %v492
  %634 = vmatpush.bf16.msra.mxu0 %v491
  %635 = vmatpush.bf16.msra.mxu0 %v490
  %636 = vmatmul.bf16.gmra.mxu0 %v267
  %v637 = vpop.f32.mrf.mxu0
  %v638 = vadd.f32 %v589, %v637
  %v639 = vpop.f32.mrf.mxu0
  %v640 = vadd.f32 %v591, %v639
  %641 = vmatmul.bf16.gmra.mxu0 %v272
  %v642 = vpop.f32.mrf.mxu0
  %v643 = vadd.f32 %v594, %v642
  %v644 = vpop.f32.mrf.mxu0
  %v645 = vadd.f32 %v596, %v644
  %646 = vmatmul.bf16.gmra.mxu0 %v277
  %v647 = vpop.f32.mrf.mxu0
  %v648 = vadd.f32 %v599, %v647
  %v649 = vpop.f32.mrf.mxu0
  %v650 = vadd.f32 %v601, %v649
  %651 = vmatmul.bf16.gmra.mxu0 %v282
  %v652 = vpop.f32.mrf.mxu0
  %v653 = vadd.f32 %v604, %v652
  %v654 = vpop.f32.mrf.mxu0
  %v655 = vadd.f32 %v606, %v654
  %656 = vmatmul.bf16.gmra.mxu0 %v287
  %v657 = vpop.f32.mrf.mxu0
  %v658 = vadd.f32 %v609, %v657
  %v659 = vpop.f32.mrf.mxu0
  %v660 = vadd.f32 %v611, %v659
  %661 = vmatmul.bf16.gmra.mxu0 %v292
  %v662 = vpop.f32.mrf.mxu0
  %v663 = vadd.f32 %v614, %v662
  %v664 = vpop.f32.mrf.mxu0
  %v665 = vadd.f32 %v616, %v664
  %666 = vmatmul.bf16.gmra.mxu0 %v297
  %v667 = vpop.f32.mrf.mxu0
  %v668 = vadd.f32 %v619, %v667
  %v669 = vpop.f32.mrf.mxu0
  %v670 = vadd.f32 %v621, %v669
  %671 = vmatmul.bf16.gmra.mxu0 %v302
  %v672 = vpop.f32.mrf.mxu0
  %v673 = vadd.f32 %v624, %v672
  %v674 = vpop.f32.mrf.mxu0
  %v675 = vadd.f32 %v626, %v674
  %676 = vdwg.mxu0
  %677 = vmatpush.bf16.msra.mxu0 %v505
  %678 = vmatpush.bf16.msra.mxu0 %v504
  %679 = vmatpush.bf16.msra.mxu0 %v503
  %680 = vmatpush.bf16.msra.mxu0 %v502
  %681 = vmatpush.bf16.msra.mxu0 %v501
  %682 = vmatpush.bf16.msra.mxu0 %v500
  %683 = vmatpush.bf16.msra.mxu0 %v499
  %684 = vmatpush.bf16.msra.mxu0 %v498
  %685 = vmatmul.bf16.gmra.mxu0 %v268
  %v686 = vpop.f32.mrf.mxu0
  %v687 = vadd.f32 %v638, %v686
  %v688 = vpop.f32.mrf.mxu0
  %v689 = vadd.f32 %v640, %v688
  %690 = vmatmul.bf16.gmra.mxu0 %v273
  %v691 = vpop.f32.mrf.mxu0
  %v692 = vadd.f32 %v643, %v691
  %v693 = vpop.f32.mrf.mxu0
  %v694 = vadd.f32 %v645, %v693
  %695 = vmatmul.bf16.gmra.mxu0 %v278
  %v696 = vpop.f32.mrf.mxu0
  %v697 = vadd.f32 %v648, %v696
  %v698 = vpop.f32.mrf.mxu0
  %v699 = vadd.f32 %v650, %v698
  %700 = vmatmul.bf16.gmra.mxu0 %v283
  %v701 = vpop.f32.mrf.mxu0
  %v702 = vadd.f32 %v653, %v701
  %v703 = vpop.f32.mrf.mxu0
  %v704 = vadd.f32 %v655, %v703
  %705 = vmatmul.bf16.gmra.mxu0 %v288
  %v706 = vpop.f32.mrf.mxu0
  %v707 = vadd.f32 %v658, %v706
  %v708 = vpop.f32.mrf.mxu0
  %v709 = vadd.f32 %v660, %v708
  %710 = vmatmul.bf16.gmra.mxu0 %v293
  %v711 = vpop.f32.mrf.mxu0
  %v712 = vadd.f32 %v663, %v711
  %v713 = vpop.f32.mrf.mxu0
  %v714 = vadd.f32 %v665, %v713
  %715 = vmatmul.bf16.gmra.mxu0 %v298
  %v716 = vpop.f32.mrf.mxu0
  %v717 = vadd.f32 %v668, %v716
  %v718 = vpop.f32.mrf.mxu0
  %v719 = vadd.f32 %v670, %v718
  %720 = vmatmul.bf16.gmra.mxu0 %v303
  %v721 = vpop.f32.mrf.mxu0
  %v722 = vadd.f32 %v673, %v721
  %v723 = vpop.f32.mrf.mxu0
  %v724 = vadd.f32 %v675, %v723
  %725 = vdwg.mxu0
  %726 = vmatpush.bf16.msra.mxu0 %v513
  %727 = vmatpush.bf16.msra.mxu0 %v512
  %728 = vmatpush.bf16.msra.mxu0 %v511
  %729 = vmatpush.bf16.msra.mxu0 %v510
  %730 = vmatpush.bf16.msra.mxu0 %v509
  %731 = vmatpush.bf16.msra.mxu0 %v508
  %732 = vmatpush.bf16.msra.mxu0 %v507
  %733 = vmatpush.bf16.msra.mxu0 %v506
  %734 = vmatmul.bf16.gmra.mxu0 %v269
  %v735 = vpop.f32.mrf.mxu0
  %v736 = vadd.f32 %v687, %v735
  %v737 = vpop.f32.mrf.mxu0
  %v738 = vadd.f32 %v689, %v737
  %739 = vmatmul.bf16.gmra.mxu0 %v274
  %v740 = vpop.f32.mrf.mxu0
  %v741 = vadd.f32 %v692, %v740
  %v742 = vpop.f32.mrf.mxu0
  %v743 = vadd.f32 %v694, %v742
  %744 = vmatmul.bf16.gmra.mxu0 %v279
  %v745 = vpop.f32.mrf.mxu0
  %v746 = vadd.f32 %v697, %v745
  %v747 = vpop.f32.mrf.mxu0
  %v748 = vadd.f32 %v699, %v747
  %749 = vmatmul.bf16.gmra.mxu0 %v284
  %v750 = vpop.f32.mrf.mxu0
  %v751 = vadd.f32 %v702, %v750
  %v752 = vpop.f32.mrf.mxu0
  %v753 = vadd.f32 %v704, %v752
  %754 = vmatmul.bf16.gmra.mxu0 %v289
  %v755 = vpop.f32.mrf.mxu0
  %v756 = vadd.f32 %v707, %v755
  %v757 = vpop.f32.mrf.mxu0
  %v758 = vadd.f32 %v709, %v757
  %759 = vmatmul.bf16.gmra.mxu0 %v294
  %v760 = vpop.f32.mrf.mxu0
  %v761 = vadd.f32 %v712, %v760
  %v762 = vpop.f32.mrf.mxu0
  %v763 = vadd.f32 %v714, %v762
  %764 = vmatmul.bf16.gmra.mxu0 %v299
  %v765 = vpop.f32.mrf.mxu0
  %v766 = vadd.f32 %v717, %v765
  %v767 = vpop.f32.mrf.mxu0
  %v768 = vadd.f32 %v719, %v767
  %769 = vmatmul.bf16.gmra.mxu0 %v304
  %v770 = vpop.f32.mrf.mxu0
  %v771 = vadd.f32 %v722, %v770
  %v772 = vpop.f32.mrf.mxu0
  %v773 = vadd.f32 %v724, %v772
  %774 = vdwg.mxu0
  %775 = vmatpush.bf16.msra.mxu0 0
  %776 = vmatpush.bf16.msra.mxu0 0
  %777 = vmatpush.bf16.msra.mxu0 0
  %778 = vmatpush.bf16.msra.mxu0 0
  %779 = vmatpush.bf16.msra.mxu0 %v517
  %780 = vmatpush.bf16.msra.mxu0 %v516
  %781 = vmatpush.bf16.msra.mxu0 %v515
  %782 = vmatpush.bf16.msra.mxu0 %v514
  %783 = vmatmul.bf16.gmra.mxu0 %v556
  %v784 = vpop.f32.mrf.mxu0
  %v785 = vadd.f32 %v736, %v784
  %v786 = vpop.f32.mrf.mxu0
  %v787 = vadd.f32 %v738, %v786
  %788 = vmatmul.bf16.gmra.mxu0 %v559
  %v789 = vpop.f32.mrf.mxu0
  %v790 = vadd.f32 %v741, %v789
  %v791 = vpop.f32.mrf.mxu0
  %v792 = vadd.f32 %v743, %v791
  %793 = vmatmul.bf16.gmra.mxu0 %v562
  %v794 = vpop.f32.mrf.mxu0
  %v795 = vadd.f32 %v746, %v794
  %v796 = vpop.f32.mrf.mxu0
  %v797 = vadd.f32 %v748, %v796
  %798 = vmatmul.bf16.gmra.mxu0 %v565
  %v799 = vpop.f32.mrf.mxu0
  %v800 = vadd.f32 %v751, %v799
  %v801 = vpop.f32.mrf.mxu0
  %v802 = vadd.f32 %v753, %v801
  %803 = vmatmul.bf16.gmra.mxu0 %v568
  %v804 = vpop.f32.mrf.mxu0
  %v805 = vadd.f32 %v756, %v804
  %v806 = vpop.f32.mrf.mxu0
  %v807 = vadd.f32 %v758, %v806
  %808 = vmatmul.bf16.gmra.mxu0 %v571
  %v809 = vpop.f32.mrf.mxu0
  %v810 = vadd.f32 %v761, %v809
  %v811 = vpop.f32.mrf.mxu0
  %v812 = vadd.f32 %v763, %v811
  %813 = vmatmul.bf16.gmra.mxu0 %v574
  %v814 = vpop.f32.mrf.mxu0
  %v815 = vadd.f32 %v766, %v814
  %v816 = vpop.f32.mrf.mxu0
  %v817 = vadd.f32 %v768, %v816
  %818 = vmatmul.bf16.gmra.mxu0 %v577
  %v819 = vpop.f32.mrf.mxu0
  %v820 = vadd.f32 %v771, %v819
  %v821 = vpop.f32.mrf.mxu0
  %v822 = vadd.f32 %v773, %v821
  %823 = vdwg.mxu0
  %v824 = vld [vmem:[%s2] sm:$0x1]
  %v826 = vperm.slane %v824, 0
  %v828 = vmul.f32 %v785, %v826
  %v829 = vmul.f32 %v787, %v826
  %v830 = vmul.f32 %v790, %v826
  %v831 = vmul.f32 %v792, %v826
  %v832 = vmul.f32 %v795, %v826
  %v833 = vmul.f32 %v797, %v826
  %v834 = vmul.f32 %v800, %v826
  %v835 = vmul.f32 %v802, %v826
  %v836 = vmul.f32 %v805, %v826
  %v837 = vmul.f32 %v807, %v826
  %v838 = vmul.f32 %v810, %v826
  %v839 = vmul.f32 %v812, %v826
  %v840 = vmul.f32 %v815, %v826
  %v841 = vmul.f32 %v817, %v826
  %v842 = vmul.f32 %v820, %v826
  %v843 = vmul.f32 %v822, %v826
  %v844 = vld [vmem:[%s3] sm:$0x1]
  %v846 = vperm.slane %v844, 0
  %v848 = vadd.f32 %v828, %v846
  %v849 = vadd.f32 %v829, %v846
  %v850 = vadd.f32 %v830, %v846
  %v851 = vadd.f32 %v831, %v846
  %v852 = vadd.f32 %v832, %v846
  %v853 = vadd.f32 %v833, %v846
  %v854 = vadd.f32 %v834, %v846
  %v855 = vadd.f32 %v835, %v846
  %v856 = vadd.f32 %v836, %v846
  %v857 = vadd.f32 %v837, %v846
  %v858 = vadd.f32 %v838, %v846
  %v859 = vadd.f32 %v839, %v846
  %v860 = vadd.f32 %v840, %v846
  %v861 = vadd.f32 %v841, %v846
  %v862 = vadd.f32 %v842, %v846
  %v863 = vadd.f32 %v843, %v846
  %v864 = vmax.f32 %v848, 0.0
  %v865 = vmax.f32 %v849, 0.0
  %v866 = vmax.f32 %v850, 0.0
  %v867 = vmax.f32 %v851, 0.0
  %v868 = vmax.f32 %v852, 0.0
  %v869 = vmax.f32 %v853, 0.0
  %v870 = vmax.f32 %v854, 0.0
  %v871 = vmax.f32 %v855, 0.0
  %v872 = vmax.f32 %v856, 0.0
  %v873 = vmax.f32 %v857, 0.0
  %v874 = vmax.f32 %v858, 0.0
  %v875 = vmax.f32 %v859, 0.0
  %v876 = vmax.f32 %v860, 0.0
  %v877 = vmax.f32 %v861, 0.0
  %v878 = vmax.f32 %v862, 0.0
  %v879 = vmax.f32 %v863, 0.0
  %v880 = vpack.c.bf16 %v864, %v864
  %v881 = vpack.c.bf16 %v865, %v865
  %v882 = vpack.c.bf16 %v866, %v866
  %v883 = vpack.c.bf16 %v867, %v867
  %v884 = vpack.c.bf16 %v868, %v868
  %v885 = vpack.c.bf16 %v869, %v869
  %v886 = vpack.c.bf16 %v870, %v870
  %v887 = vpack.c.bf16 %v871, %v871
  %v888 = vpack.c.bf16 %v872, %v872
  %v889 = vpack.c.bf16 %v873, %v873
  %v890 = vpack.c.bf16 %v874, %v874
  %v891 = vpack.c.bf16 %v875, %v875
  %v892 = vpack.c.bf16 %v876, %v876
  %v893 = vpack.c.bf16 %v877, %v877
  %v894 = vpack.c.bf16 %v878, %v878
  %v895 = vpack.c.bf16 %v879, %v879
  %vm896 = vcmask 519168
  %897 = vst.msk [vmem:[%s4] sm:$0xf] %vm896, %v880
  %898 = vst.msk [vmem:[%s4 + $0x4] sm:$0xf] %vm896, %v881
  %899 = vst.msk [vmem:[%s4 + $0x8] sm:$0xf] %vm896, %v882
  %900 = vst.msk [vmem:[%s4 + $0xc] sm:$0xf] %vm896, %v883
  %901 = vst.msk [vmem:[%s4 + $0x10] sm:$0xf] %vm896, %v884
  %902 = vst.msk [vmem:[%s4 + $0x14] sm:$0xf] %vm896, %v885
  %903 = vst.msk [vmem:[%s4 + $0x18] sm:$0xf] %vm896, %v886
  %904 = vst.msk [vmem:[%s4 + $0x1c] sm:$0xf] %vm896, %v887
  %905 = vst.msk [vmem:[%s4 + $0x20] sm:$0xf] %vm896, %v888
  %906 = vst.msk [vmem:[%s4 + $0x24] sm:$0xf] %vm896, %v889
  %907 = vst.msk [vmem:[%s4 + $0x28] sm:$0xf] %vm896, %v890
  %908 = vst.msk [vmem:[%s4 + $0x2c] sm:$0xf] %vm896, %v891
  %909 = vst.msk [vmem:[%s4 + $0x30] sm:$0xf] %vm896, %v892
  %910 = vst.msk [vmem:[%s4 + $0x34] sm:$0xf] %vm896, %v893
  %911 = vst.msk [vmem:[%s4 + $0x38] sm:$0xf] %vm896, %v894
  %912 = vst.msk [vmem:[%s4 + $0x3c] sm:$0xf] %vm896, %v895
  // Predicated region
  $region18: #{net_forward.14} parent=0 // pred_check
    _
  $region19: #{net_forward.14} parent=0 // pred_check_branch
    %914 = sbr.rel (0) target = $region21
  $region20: #{net_forward.14} parent=0 // pred_region
    _
  $region21: #{net_forward.14} parent=0 // pred_fallthru
    _
  // Predicated region
  $region22: #{net_forward.14} parent=0 // pred_check
    _
  $region23: #{net_forward.14} parent=0 // pred_check_branch
    %916 = sbr.rel (0) target = $region25
  $region24: #{net_forward.14} parent=0 // pred_region
    _
  $region25: #{net_forward.14} parent=0 // pred_fallthru
    _

// kernel: net_forward.16
$region0: #{net_forward.16}
  #allocation0 [shape = 'u32[]', space=smem, size = 0x4, offset = 0x4, fixed_abs, tag = 'smem constant byte address 0x4 - core index']
  #allocation1 [shape = 'u32[72,128]{1,0:T(1,128)}', space=vmem, size = 0x9000, scoped, tag = 'internal scratch']
  %s0 = inlined_call_operand.vmem [shape: bf16[32,576], index: 0, kind: input, shape index: {}]
  %s1 = inlined_call_operand.vmem [shape: bf16[576,128], index: 1, kind: input, shape index: {}]
  %s2 = inlined_call_operand.vmem [shape: f32[1,128], index: 2, kind: input, shape index: {}]
  %s3 = inlined_call_operand.vmem [shape: f32[1,128], index: 3, kind: input, shape index: {}]
  %s4 = inlined_call_operand.vmem [shape: bf16[32,128], index: 4, kind: output, shape index: {}]
  %s5 = sld [smem:[#allocation0]]
  $region26: #{net_forward.16} parent=0
    _
  %s7 = ssub.s32 1, %s5
  %s8 = scalar_select 0, %s7, %s5
  // Predicated region
  $region2: #{net_forward.16} parent=0 // pred_check
    _
  $region3: #{net_forward.16} parent=0 // pred_check_branch
    %10 = sbr.rel (0) target = $region5
  $region4: #{net_forward.16} parent=0 // pred_region
    _
  $region5: #{net_forward.16} parent=0 // pred_fallthru
    _
  // Predicated region
  $region6: #{net_forward.16} parent=0 // pred_check
    _
  $region7: #{net_forward.16} parent=0 // pred_check_branch
    %12 = sbr.rel (0) target = $region9
  $region8: #{net_forward.16} parent=0 // pred_region
    _
  $region9: #{net_forward.16} parent=0 // pred_fallthru
    _
  // Predicated region
  $region10: #{net_forward.16} parent=0 // pred_check
    _
  $region11: #{net_forward.16} parent=0 // pred_check_branch
    %14 = sbr.rel (0) target = $region13
  $region12: #{net_forward.16} parent=0 // pred_region
    _
  $region13: #{net_forward.16} parent=0 // pred_fallthru
    _
  // Predicated region
  $region14: #{net_forward.16} parent=0 // pred_check
    _
  $region15: #{net_forward.16} parent=0 // pred_check_branch
    %16 = sbr.rel (0) target = $region17
  $region16: #{net_forward.16} parent=0 // pred_region
    _
  $region17: #{net_forward.16} parent=0 // pred_fallthru
    _
  %v18 = vld [vmem:[%s0] sm:$0xff]
  %v19 = vld [vmem:[%s0 + $0x8] sm:$0xff]
  %v20 = vld [vmem:[%s0 + $0x10] sm:$0xf]
  %v21 = vld [vmem:[%s0 + $0x14] sm:$0xff]
  %v22 = vld [vmem:[%s0 + $0x1c] sm:$0xff]
  %v23 = vld [vmem:[%s0 + $0x24] sm:$0xf]
  %v24 = vld [vmem:[%s0 + $0x28] sm:$0xff]
  %v25 = vld [vmem:[%s0 + $0x30] sm:$0xff]
  %v26 = vld [vmem:[%s0 + $0x38] sm:$0xf]
  %v27 = vld [vmem:[%s0 + $0x3c] sm:$0xff]
  %v28 = vld [vmem:[%s0 + $0x44] sm:$0xff]
  %v29 = vld [vmem:[%s0 + $0x4c] sm:$0xf]
  %v30 = vld [vmem:[%s1] sm:$0xf]
  %v31 = vld [vmem:[%s1 + $0x4] sm:$0xf]
  %v32 = vld [vmem:[%s1 + $0x8] sm:$0xf]
  %v33 = vld [vmem:[%s1 + $0xc] sm:$0xf]
  %v34 = vld [vmem:[%s1 + $0x10] sm:$0xf]
  %v35 = vld [vmem:[%s1 + $0x14] sm:$0xf]
  %v36 = vld [vmem:[%s1 + $0x18] sm:$0xf]
  %v37 = vld [vmem:[%s1 + $0x1c] sm:$0xf]
  %v38 = vld [vmem:[%s1 + $0x20] sm:$0xf]
  %v39 = vld [vmem:[%s1 + $0x24] sm:$0xf]
  %v40 = vld [vmem:[%s1 + $0x28] sm:$0xf]
  %v41 = vld [vmem:[%s1 + $0x2c] sm:$0xf]
  %v42 = vld [vmem:[%s1 + $0x30] sm:$0xf]
  %v43 = vld [vmem:[%s1 + $0x34] sm:$0xf]
  %v44 = vld [vmem:[%s1 + $0x38] sm:$0xf]
  %v45 = vld [vmem:[%s1 + $0x3c] sm:$0xf]
  %v46 = vld [vmem:[%s1 + $0x40] sm:$0xf]
  %v47 = vld [vmem:[%s1 + $0x44] sm:$0xf]
  %v48 = vld [vmem:[%s1 + $0x48] sm:$0xf]
  %v49 = vld [vmem:[%s1 + $0x4c] sm:$0xf]
  %v50 = vld [vmem:[%s1 + $0x50] sm:$0xf]
  %v51 = vld [vmem:[%s1 + $0x54] sm:$0xf]
  %v52 = vld [vmem:[%s1 + $0x58] sm:$0xf]
  %v53 = vld [vmem:[%s1 + $0x5c] sm:$0xf]
  %v54 = vld [vmem:[%s1 + $0x60] sm:$0xf]
  %v55 = vld [vmem:[%s1 + $0x64] sm:$0xf]
  %v56 = vld [vmem:[%s1 + $0x68] sm:$0xf]
  %v57 = vld [vmem:[%s1 + $0x6c] sm:$0xf]
  %v58 = vld [vmem:[%s1 + $0x70] sm:$0xf]
  %v59 = vld [vmem:[%s1 + $0x74] sm:$0xf]
  %v60 = vld [vmem:[%s1 + $0x78] sm:$0xf]
  %v61 = vld [vmem:[%s1 + $0x7c] sm:$0xf]
  %v62 = vld [vmem:[%s1 + $0x80] sm:$0xf]
  %v63 = vld [vmem:[%s1 + $0x84] sm:$0xf]
  %v64 = vld [vmem:[%s1 + $0x88] sm:$0xf]
  %v65 = vld [vmem:[%s1 + $0x8c] sm:$0xf]
  %v66 = vld [vmem:[%s1 + $0x90] sm:$0xf]
  %v67 = vld [vmem:[%s1 + $0x94] sm:$0xf]
  %v68 = vld [vmem:[%s1 + $0x98] sm:$0xf]
  %v69 = vld [vmem:[%s1 + $0x9c] sm:$0xf]
  %v70 = vld [vmem:[%s1 + $0xa0] sm:$0xf]
  %v71 = vld [vmem:[%s1 + $0xa4] sm:$0xf]
  %v72 = vld [vmem:[%s1 + $0xa8] sm:$0xf]
  %v73 = vld [vmem:[%s1 + $0xac] sm:$0xf]
  %v74 = vld [vmem:[%s1 + $0xb0] sm:$0xf]
  %v75 = vld [vmem:[%s1 + $0xb4] sm:$0xf]
  %v76 = vld [vmem:[%s1 + $0xb8] sm:$0xf]
  %v77 = vld [vmem:[%s1 + $0xbc] sm:$0xf]
  %v78 = vld [vmem:[%s1 + $0xc0] sm:$0xf]
  %v79 = vld [vmem:[%s1 + $0xc4] sm:$0xf]
  %v80 = vld [vmem:[%s1 + $0xc8] sm:$0xf]
  %v81 = vld [vmem:[%s1 + $0xcc] sm:$0xf]
  %v82 = vld [vmem:[%s1 + $0xd0] sm:$0xf]
  %v83 = vld [vmem:[%s1 + $0xd4] sm:$0xf]
  %v84 = vld [vmem:[%s1 + $0xd8] sm:$0xf]
  %v85 = vld [vmem:[%s1 + $0xdc] sm:$0xf]
  %v86 = vld [vmem:[%s1 + $0xe0] sm:$0xf]
  %v87 = vld [vmem:[%s1 + $0xe4] sm:$0xf]
  %v88 = vld [vmem:[%s1 + $0xe8] sm:$0xf]
  %v89 = vld [vmem:[%s1 + $0xec] sm:$0xf]
  %v90 = vld [vmem:[%s1 + $0xf0] sm:$0xf]
  %v91 = vld [vmem:[%s1 + $0xf4] sm:$0xf]
  %v92 = vld [vmem:[%s1 + $0xf8] sm:$0xf]
  %v93 = vld [vmem:[%s1 + $0xfc] sm:$0xf]
  %v94 = vld [vmem:[%s1 + $0x100] sm:$0xf]
  %v95 = vld [vmem:[%s1 + $0x104] sm:$0xf]
  %v96 = vld [vmem:[%s1 + $0x108] sm:$0xf]
  %v97 = vld [vmem:[%s1 + $0x10c] sm:$0xf]
  %v98 = vld [vmem:[%s1 + $0x110] sm:$0xf]
  %v99 = vld [vmem:[%s1 + $0x114] sm:$0xf]
  %v100 = vld [vmem:[%s1 + $0x118] sm:$0xf]
  %v101 = vld [vmem:[%s1 + $0x11c] sm:$0xf]
  %v114 = vunpack.c.l.b16 %v18
  %v115 = vunpack.c.h.b16 %v18
  %v116 = vunpack.c.l.b16 %v19
  %v117 = vunpack.c.h.b16 %v19
  %v118 = vunpack.c.l.b16 %v20
  %v119 = vunpack.c.l.b16 %v21
  %v120 = vunpack.c.h.b16 %v21
  %v121 = vunpack.c.l.b16 %v22
  %v122 = vunpack.c.h.b16 %v22
  %v123 = vunpack.c.l.b16 %v23
  %v124 = vunpack.c.l.b16 %v24
  %v125 = vunpack.c.h.b16 %v24
  %v126 = vunpack.c.l.b16 %v25
  %v127 = vunpack.c.h.b16 %v25
  %v128 = vunpack.c.l.b16 %v26
  %v129 = vunpack.c.l.b16 %v27
  %v130 = vunpack.c.h.b16 %v27
  %v131 = vunpack.c.l.b16 %v28
  %v132 = vunpack.c.h.b16 %v28
  %v133 = vunpack.c.l.b16 %v29
  %v134 = vpack.c.b16 %v119, %v114
  %v135 = vpack.c.b16 %v120, %v115
  %v136 = vpack.c.b16 %v121, %v116
  %v137 = vpack.c.b16 %v122, %v117
  %v138 = vpack.c.b16 %v123, %v118
  %v139 = vpack.c.b16 %v129, %v124
  %v140 = vpack.c.b16 %v130, %v125
  %v141 = vpack.c.b16 %v131, %v126
  %v142 = vpack.c.b16 %v132, %v127
  %v143 = vpack.c.b16 %v133, %v128
  %v224 = vunpack.c.l.b16 %v30
  %v225 = vunpack.c.l.b16 %v31
  %v226 = vunpack.c.l.b16 %v32
  %v227 = vunpack.c.l.b16 %v33
  %v228 = vunpack.c.l.b16 %v34
  %v229 = vunpack.c.l.b16 %v35
  %v230 = vunpack.c.l.b16 %v36
  %v231 = vunpack.c.l.b16 %v37
  %v232 = vunpack.c.l.b16 %v38
  %v233 = vunpack.c.l.b16 %v39
  %v234 = vunpack.c.l.b16 %v40
  %v235 = vunpack.c.l.b16 %v41
  %v236 = vunpack.c.l.b16 %v42
  %v237 = vunpack.c.l.b16 %v43
  %v238 = vunpack.c.l.b16 %v44
  %v239 = vunpack.c.l.b16 %v45
  %v240 = vunpack.c.l.b16 %v46
  %v241 = vunpack.c.l.b16 %v47
  %v242 = vunpack.c.l.b16 %v48
  %v243 = vunpack.c.l.b16 %v49
  %v244 = vunpack.c.l.b16 %v50
  %v245 = vunpack.c.l.b16 %v51
  %v246 = vunpack.c.l.b16 %v52
  %v247 = vunpack.c.l.b16 %v53
  %v248 = vunpack.c.l.b16 %v54
  %v249 = vunpack.c.l.b16 %v55
  %v250 = vunpack.c.l.b16 %v56
  %v251 = vunpack.c.l.b16 %v57
  %v252 = vunpack.c.l.b16 %v58
  %v253 = vunpack.c.l.b16 %v59
  %v254 = vunpack.c.l.b16 %v60
  %v255 = vunpack.c.l.b16 %v61
  %v256 = vunpack.c.l.b16 %v62
  %v257 = vunpack.c.l.b16 %v63
  %v258 = vunpack.c.l.b16 %v64
  %v259 = vunpack.c.l.b16 %v65
  %v260 = vunpack.c.l.b16 %v66
  %v261 = vunpack.c.l.b16 %v67
  %v262 = vunpack.c.l.b16 %v68
  %v263 = vunpack.c.l.b16 %v69
  %v264 = vunpack.c.l.b16 %v70
  %v265 = vunpack.c.l.b16 %v71
  %v266 = vunpack.c.l.b16 %v72
  %v267 = vunpack.c.l.b16 %v73
  %v268 = vunpack.c.l.b16 %v74
  %v269 = vunpack.c.l.b16 %v75
  %v270 = vunpack.c.l.b16 %v76
  %v271 = vunpack.c.l.b16 %v77
  %v272 = vunpack.c.l.b16 %v78
  %v273 = vunpack.c.l.b16 %v79
  %v274 = vunpack.c.l.b16 %v80
  %v275 = vunpack.c.l.b16 %v81
  %v276 = vunpack.c.l.b16 %v82
  %v277 = vunpack.c.l.b16 %v83
  %v278 = vunpack.c.l.b16 %v84
  %v279 = vunpack.c.l.b16 %v85
  %v280 = vunpack.c.l.b16 %v86
  %v281 = vunpack.c.l.b16 %v87
  %v282 = vunpack.c.l.b16 %v88
  %v283 = vunpack.c.l.b16 %v89
  %v284 = vunpack.c.l.b16 %v90
  %v285 = vunpack.c.l.b16 %v91
  %v286 = vunpack.c.l.b16 %v92
  %v287 = vunpack.c.l.b16 %v93
  %v288 = vunpack.c.l.b16 %v94
  %v289 = vunpack.c.l.b16 %v95
  %v290 = vunpack.c.l.b16 %v96
  %v291 = vunpack.c.l.b16 %v97
  %v292 = vunpack.c.l.b16 %v98
  %v293 = vunpack.c.l.b16 %v99
  %v294 = vunpack.c.l.b16 %v100
  %v295 = vunpack.c.l.b16 %v101
  %v296 = vpack.c.b16 %v225, %v224
  %v297 = vpack.c.b16 %v227, %v226
  %v298 = vpack.c.b16 %v229, %v228
  %v299 = vpack.c.b16 %v231, %v230
  %v300 = vpack.c.b16 %v233, %v232
  %v301 = vpack.c.b16 %v235, %v234
  %v302 = vpack.c.b16 %v237, %v236
  %v303 = vpack.c.b16 %v239, %v238
  %v304 = vpack.c.b16 %v241, %v240
  %v305 = vpack.c.b16 %v243, %v242
  %v306 = vpack.c.b16 %v245, %v244
  %v307 = vpack.c.b16 %v247, %v246
  %v308 = vpack.c.b16 %v249, %v248
  %v309 = vpack.c.b16 %v251, %v250
  %v310 = vpack.c.b16 %v253, %v252
  %v311 = vpack.c.b16 %v255, %v254
  %v312 = vpack.c.b16 %v257, %v256
  %v313 = vpack.c.b16 %v259, %v258
  %v314 = vpack.c.b16 %v261, %v260
  %v315 = vpack.c.b16 %v263, %v262
  %v316 = vpack.c.b16 %v265, %v264
  %v317 = vpack.c.b16 %v267, %v266
  %v318 = vpack.c.b16 %v269, %v268
  %v319 = vpack.c.b16 %v271, %v270
  %v320 = vpack.c.b16 %v273, %v272
  %v321 = vpack.c.b16 %v275, %v274
  %v322 = vpack.c.b16 %v277, %v276
  %v323 = vpack.c.b16 %v279, %v278
  %v324 = vpack.c.b16 %v281, %v280
  %v325 = vpack.c.b16 %v283, %v282
  %v326 = vpack.c.b16 %v285, %v284
  %v327 = vpack.c.b16 %v287, %v286
  %v328 = vpack.c.b16 %v289, %v288
  %v329 = vpack.c.b16 %v291, %v290
  %v330 = vpack.c.b16 %v293, %v292
  %v331 = vpack.c.b16 %v295, %v294
  %vm368 = vcmask 523264
  %v370 = vsel %vm368, %v138, 0
  %v373 = vsel %vm368, %v143, 0
  %375 = vmatpush.bf16.msra.mxu0 %v303
  %376 = vmatpush.bf16.msra.mxu0 %v302
  %377 = vmatpush.bf16.msra.mxu0 %v301
  %378 = vmatpush.bf16.msra.mxu0 %v300
  %379 = vmatpush.bf16.msra.mxu0 %v299
  %380 = vmatpush.bf16.msra.mxu0 %v298
  %381 = vmatpush.bf16.msra.mxu0 %v297
  %382 = vmatpush.bf16.msra.mxu0 %v296
  %383 = vmatmul.bf16.gmra.mxu0 %v134
  %v384 = vpop.f32.mrf.mxu0
  %v385 = vadd.f32 0.0, %v384
  %v386 = vpop.f32.mrf.mxu0
  %v387 = vadd.f32 0.0, %v386
  %388 = vmatmul.bf16.gmra.mxu0 %v139
  %v389 = vpop.f32.mrf.mxu0
  %v390 = vadd.f32 0.0, %v389
  %v391 = vpop.f32.mrf.mxu0
  %v392 = vadd.f32 0.0, %v391
  %393 = vdwg.mxu0
  %394 = vmatpush.bf16.msra.mxu0 %v311
  %395 = vmatpush.bf16.msra.mxu0 %v310
  %396 = vmatpush.bf16.msra.mxu0 %v309
  %397 = vmatpush.bf16.msra.mxu0 %v308
  %398 = vmatpush.bf16.msra.mxu0 %v307
  %399 = vmatpush.bf16.msra.mxu0 %v306
  %400 = vmatpush.bf16.msra.mxu0 %v305
  %401 = vmatpush.bf16.msra.mxu0 %v304
  %402 = vmatmul.bf16.gmra.mxu0 %v135
  %v403 = vpop.f32.mrf.mxu0
  %v404 = vadd.f32 %v385, %v403
  %v405 = vpop.f32.mrf.mxu0
  %v406 = vadd.f32 %v387, %v405
  %407 = vmatmul.bf16.gmra.mxu0 %v140
  %v408 = vpop.f32.mrf.mxu0
  %v409 = vadd.f32 %v390, %v408
  %v410 = vpop.f32.mrf.mxu0
  %v411 = vadd.f32 %v392, %v410
  %412 = vdwg.mxu0
  %413 = vmatpush.bf16.msra.mxu0 %v319
  %414 = vmatpush.bf16.msra.mxu0 %v318
  %415 = vmatpush.bf16.msra.mxu0 %v317
  %416 = vmatpush.bf16.msra.mxu0 %v316
  %417 = vmatpush.bf16.msra.mxu0 %v315
  %418 = vmatpush.bf16.msra.mxu0 %v314
  %419 = vmatpush.bf16.msra.mxu0 %v313
  %420 = vmatpush.bf16.msra.mxu0 %v312
  %421 = vmatmul.bf16.gmra.mxu0 %v136
  %v422 = vpop.f32.mrf.mxu0
  %v423 = vadd.f32 %v404, %v422
  %v424 = vpop.f32.mrf.mxu0
  %v425 = vadd.f32 %v406, %v424
  %426 = vmatmul.bf16.gmra.mxu0 %v141
  %v427 = vpop.f32.mrf.mxu0
  %v428 = vadd.f32 %v409, %v427
  %v429 = vpop.f32.mrf.mxu0
  %v430 = vadd.f32 %v411, %v429
  %431 = vdwg.mxu0
  %432 = vmatpush.bf16.msra.mxu0 %v327
  %433 = vmatpush.bf16.msra.mxu0 %v326
  %434 = vmatpush.bf16.msra.mxu0 %v325
  %435 = vmatpush.bf16.msra.mxu0 %v324
  %436 = vmatpush.bf16.msra.mxu0 %v323
  %437 = vmatpush.bf16.msra.mxu0 %v322
  %438 = vmatpush.bf16.msra.mxu0 %v321
  %439 = vmatpush.bf16.msra.mxu0 %v320
  %440 = vmatmul.bf16.gmra.mxu0 %v137
  %v441 = vpop.f32.mrf.mxu0
  %v442 = vadd.f32 %v423, %v441
  %v443 = vpop.f32.mrf.mxu0
  %v444 = vadd.f32 %v425, %v443
  %445 = vmatmul.bf16.gmra.mxu0 %v142
  %v446 = vpop.f32.mrf.mxu0
  %v447 = vadd.f32 %v428, %v446
  %v448 = vpop.f32.mrf.mxu0
  %v449 = vadd.f32 %v430, %v448
  %450 = vdwg.mxu0
  %451 = vmatpush.bf16.msra.mxu0 0
  %452 = vmatpush.bf16.msra.mxu0 0
  %453 = vmatpush.bf16.msra.mxu0 0
  %454 = vmatpush.bf16.msra.mxu0 0
  %455 = vmatpush.bf16.msra.mxu0 %v331
  %456 = vmatpush.bf16.msra.mxu0 %v330
  %457 = vmatpush.bf16.msra.mxu0 %v329
  %458 = vmatpush.bf16.msra.mxu0 %v328
  %459 = vmatmul.bf16.gmra.mxu0 %v370
  %v460 = vpop.f32.mrf.mxu0
  %v461 = vadd.f32 %v442, %v460
  %v462 = vpop.f32.mrf.mxu0
  %v463 = vadd.f32 %v444, %v462
  %464 = vmatmul.bf16.gmra.mxu0 %v373
  %v465 = vpop.f32.mrf.mxu0
  %v466 = vadd.f32 %v447, %v465
  %v467 = vpop.f32.mrf.mxu0
  %v468 = vadd.f32 %v449, %v467
  %469 = vdwg.mxu0
  %v470 = vld [vmem:[%s2] sm:$0x1]
  %v472 = vperm.slane %v470, 0
  %v474 = vmul.f32 %v461, %v472
  %v475 = vmul.f32 %v463, %v472
  %v476 = vmul.f32 %v466, %v472
  %v477 = vmul.f32 %v468, %v472
  %v478 = vld [vmem:[%s3] sm:$0x1]
  %v480 = vperm.slane %v478, 0
  %v482 = vadd.f32 %v474, %v480
  %v483 = vadd.f32 %v475, %v480
  %v484 = vadd.f32 %v476, %v480
  %v485 = vadd.f32 %v477, %v480
  %v486 = vmax.f32 %v482, 0.0
  %v487 = vmax.f32 %v483, 0.0
  %v488 = vmax.f32 %v484, 0.0
  %v489 = vmax.f32 %v485, 0.0
  %v490 = vpack.c.bf16 %v486, %v486
  %v491 = vpack.c.bf16 %v487, %v487
  %v492 = vpack.c.bf16 %v488, %v488
  %v493 = vpack.c.bf16 %v489, %v489
  %494 = vst [vmem:[%s4] sm:$0xf] %v490
  %495 = vst [vmem:[%s4 + $0x4] sm:$0xf] %v491
  %496 = vst [vmem:[%s4 + $0x8] sm:$0xf] %v492
  %497 = vst [vmem:[%s4 + $0xc] sm:$0xf] %v493
  // Predicated region
  $region18: #{net_forward.16} parent=0 // pred_check
    _
  $region19: #{net_forward.16} parent=0 // pred_check_branch
    %499 = sbr.rel (0) target = $region21
  $region20: #{net_forward.16} parent=0 // pred_region
    _
  $region21: #{net_forward.16} parent=0 // pred_fallthru
    _
  // Predicated region
  $region22: #{net_forward.16} parent=0 // pred_check
    _
  $region23: #{net_forward.16} parent=0 // pred_check_branch
    %501 = sbr.rel (0) target = $region25
  $region24: #{net_forward.16} parent=0 // pred_region
    _
  $region25: #{net_forward.16} parent=0 // pred_fallthru
    _

// kernel: net_forward.19
$region0: #{net_forward.19}
  #allocation0 [shape = 'u32[]', space=smem, size = 0x4, offset = 0x4, fixed_abs, tag = 'smem constant byte address 0x4 - core index']
  #allocation1 [shape = 'u32[72,128]{1,0:T(1,128)}', space=vmem, size = 0x9000, scoped, tag = 'internal scratch']
  %s0 = inlined_call_operand.vmem [shape: bf16[2,4,128], index: 0, kind: input, shape index: {}]
  %s1 = inlined_call_operand.vmem [shape: f32[128,64], index: 1, kind: input, shape index: {}]
  %s2 = inlined_call_operand.vmem [shape: f32[1,64], index: 2, kind: input, shape index: {}]
  %s3 = inlined_call_operand.vmem [shape: f32[64,10], index: 3, kind: input, shape index: {}]
  %s4 = inlined_call_operand.vmem [shape: f32[1,10], index: 4, kind: input, shape index: {}]
  %s5 = inlined_call_operand.hbm [shape: f32[2,10], index: 5, kind: output, shape index: {}]
  %s6 = sld [smem:[#allocation0]]
  $region30: #{net_forward.19} parent=0
    _
  %s8 = ssub.s32 1, %s6
  %s9 = scalar_select 0, %s8, %s6
  $region1: #{net_forward.19} parent=0
    #allocation2 [shape = 'u8[1024]{0}', space=vmem, size = 0x400, scoped, tag = 'output window, operand 0, single buffered']
    #allocation3 [shape = 's32[1]{0}', space=sflag, size = 0x4, scoped, tag = 'scoped memory for net_forward.19']
    %10 = vsyncpa [#allocation3], 0
    // Predicated region
    $region2: #{net_forward.19} parent=1 // pred_check
      _
    $region3: #{net_forward.19} parent=1 // pred_check_branch
      %12 = sbr.rel (0) target = $region5
    $region4: #{net_forward.19} parent=1 // pred_region
      _
    $region5: #{net_forward.19} parent=1 // pred_fallthru
      _
    // Predicated region
    $region6: #{net_forward.19} parent=1 // pred_check
      _
    $region7: #{net_forward.19} parent=1 // pred_check_branch
      %14 = sbr.rel (0) target = $region9
    $region8: #{net_forward.19} parent=1 // pred_region
      _
    $region9: #{net_forward.19} parent=1 // pred_fallthru
      _
    // Predicated region
    $region10: #{net_forward.19} parent=1 // pred_check
      _
    $region11: #{net_forward.19} parent=1 // pred_check_branch
      %16 = sbr.rel (0) target = $region13
    $region12: #{net_forward.19} parent=1 // pred_region
      _
    $region13: #{net_forward.19} parent=1 // pred_fallthru
      _
    // Predicated region
    $region14: #{net_forward.19} parent=1 // pred_check
      _
    $region15: #{net_forward.19} parent=1 // pred_check_branch
      %18 = sbr.rel (0) target = $region17
    $region16: #{net_forward.19} parent=1 // pred_region
      _
    $region17: #{net_forward.19} parent=1 // pred_fallthru
      _
    // Predicated region
    $region18: #{net_forward.19} parent=1 // pred_check
      _
    $region19: #{net_forward.19} parent=1 // pred_check_branch
      %20 = sbr.rel (0) target = $region21
    $region20: #{net_forward.19} parent=1 // pred_region
      _
    $region21: #{net_forward.19} parent=1 // pred_fallthru
      _
    %v21 = vld [vmem:[%s0] sm:$0x3]
    %v22 = vld [vmem:[%s0 + $0x2] sm:$0x3]
    %v23 = vunpack.c.l.bf16 %v21
    %v24 = vunpack.c.l.bf16 %v22
    %vm25 = vcmask 1043456
    %v26 = vsel %vm25, %v23, 0.0
    %v27 = vrot.slane %v26, 4
    %v28 = vadd.f32 %v26, %v27
    %v29 = vrot.slane %v28, 2
    %v30 = vadd.f32 %v28, %v29
    %v31 = vrot.slane %v30, 1
    %v32 = vadd.f32 %v30, %v31
    %v33 = vsel %vm25, %v24, 0.0
    %v34 = vrot.slane %v33, 4
    %v35 = vadd.f32 %v33, %v34
    %v36 = vrot.slane %v35, 2
    %v37 = vadd.f32 %v35, %v36
    %v38 = vrot.slane %v37, 1
    %v39 = vadd.f32 %v37, %v38
    %v40 = vrcp.pop 4.0
    %v41 = vmul.f32 4.0, %v40
    %v42 = vsub.f32 1.0, %v41
    %v43 = vmul.f32 %v40, %v42
    %v44 = vadd.f32 %v40, %v43
    %vm45 = vweird.f32 %v40
    %v46 = vsel %vm45, %v40, %v44
    %v47 = vmul.f32 %v32, %v46
    %v48 = vmul.f32 %v39, %v46
    %v49 = vld [vmem:[%s1] sm:$0xff]
    %v50 = vld [vmem:[%s1 + $0x8] sm:$0xff]
    %v51 = vld [vmem:[%s1 + $0x10] sm:$0xff]
    %v52 = vld [vmem:[%s1 + $0x18] sm:$0xff]
    %v53 = vld [vmem:[%s1 + $0x20] sm:$0xff]
    %v54 = vld [vmem:[%s1 + $0x28] sm:$0xff]
    %v55 = vld [vmem:[%s1 + $0x30] sm:$0xff]
    %v56 = vld [vmem:[%s1 + $0x38] sm:$0xff]
    %v57 = vld [vmem:[%s1 + $0x40] sm:$0xff]
    %v58 = vld [vmem:[%s1 + $0x48] sm:$0xff]
    %v59 = vld [vmem:[%s1 + $0x50] sm:$0xff]
    %v60 = vld [vmem:[%s1 + $0x58] sm:$0xff]
    %v61 = vld [vmem:[%s1 + $0x60] sm:$0xff]
    %v62 = vld [vmem:[%s1 + $0x68] sm:$0xff]
    %v63 = vld [vmem:[%s1 + $0x70] sm:$0xff]
    %v64 = vld [vmem:[%s1 + $0x78] sm:$0xff]
    %v65 = vld [vmem:[%s2] sm:$0x1]
    %v67 = vperm.slane %v65, 0
    %vm71 = vcmask 1041409
    %v72 = vsel %vm71, %v48, %v47
    %74 = vmatpush.msra.mxu0 %v64
    %75 = vmatpush.msra.mxu0 %v63
    %76 = vmatpush.msra.mxu0 %v62
    %77 = vmatpush.msra.mxu0 %v61
    %78 = vmatpush.msra.mxu0 %v60
    %79 = vmatpush.msra.mxu0 %v59
    %80 = vmatpush.msra.mxu0 %v58
    %81 = vmatpush.msra.mxu0 %v57
    %82 = vmatpush.msra.mxu0 %v56
    %83 = vmatpush.msra.mxu0 %v55
    %84 = vmatpush.msra.mxu0 %v54
    %85 = vmatpush.msra.mxu0 %v53
    %86 = vmatpush.msra.mxu0 %v52
    %87 = vmatpush.msra.mxu0 %v51
    %88 = vmatpush.msra.mxu0 %v50
    %89 = vmatpush.msra.mxu0 %v49
    %90 = vmatmul.f32.gmra.mxu0 %v72
    %v91 = vpop.f32.mrf.mxu0
    %v92 = vadd.f32 %v67, %v91
    %93 = vdwg.mxu0
    %v94 = vmax.f32 %v92, 0.0
    %v95 = vld [vmem:[%s3] sm:$0xff]
    %v96 = vld [vmem:[%s3 + $0x8] sm:$0xff]
    %v97 = vld [vmem:[%s3 + $0x10] sm:$0xff]
    %v98 = vld [vmem:[%s3 + $0x18] sm:$0xff]
    %v99 = vld [vmem:[%s3 + $0x20] sm:$0xff]
    %v100 = vld [vmem:[%s3 + $0x28] sm:$0xff]
    %v101 = vld [vmem:[%s3 + $0x30] sm:$0xff]
    %v102 = vld [vmem:[%s3 + $0x38] sm:$0xff]
    %v103 = vld [vmem:[%s4] sm:$0x1]
    %v105 = vperm.slane %v103, 0
    %vm107 = vcmask 523264
    %v109 = vsel %vm107, %v94, 0
    %111 = vmatpush.msra.mxu0 0.0
    %112 = vmatpush.msra.mxu0 0.0
    %113 = vmatpush.msra.mxu0 0.0
    %114 = vmatpush.msra.mxu0 0.0
    %115 = vmatpush.msra.mxu0 0.0
    %116 = vmatpush.msra.mxu0 0.0
    %117 = vmatpush.msra.mxu0 0.0
    %118 = vmatpush.msra.mxu0 0.0
    %119 = vmatpush.msra.mxu0 %v102
    %120 = vmatpush.msra.mxu0 %v101
    %121 = vmatpush.msra.mxu0 %v100
    %122 = vmatpush.msra.mxu0 %v99
    %123 = vmatpush.msra.mxu0 %v98
    %124 = vmatpush.msra.mxu0 %v97
    %125 = vmatpush.msra.mxu0 %v96
    %126 = vmatpush.msra.mxu0 %v95
    %127 = vmatmul.f32.gmra.mxu0 %v109
    %v128 = vpop.f32.mrf.mxu0
    %v129 = vadd.f32 %v105, %v128
    %130 = vdwg.mxu0
    %vm131 = vcmask 74752
    %132 = vst.msk [vmem:[#allocation2] sm:$0x3] %vm131, %v129
    // Predicated region
    $region22: #{net_forward.19} parent=1 // pred_check
      _
    $region23: #{net_forward.19} parent=1 // pred_check_branch
      %134 = sbr.rel (0) target = $region25
    $region24: #{net_forward.19} parent=1 // pred_region
      %136 = vsyncadd [#allocation3], 0
      %s138 = sshll.u32 [#allocation2], 4
      %s139 = int_to_ptr.vmem [resolvable:$true] %s138
      %s140 = sshll.u32 %s5, 4
      %s141 = int_to_ptr.hbm [resolvable:$true] %s140
      %143 = dma.vmem_to_hbm [thread:$0]  %s139, 32, %s141, [#allocation3]
    $region25: #{net_forward.19} parent=1 // pred_fallthru
      _
    // Predicated region
    $region26: #{net_forward.19} parent=1 // pred_check
      _
    $region27: #{net_forward.19} parent=1 // pred_check_branch
      %145 = sbr.rel (0) target = $region29
    $region28: #{net_forward.19} parent=1 // pred_region
      %147 = dma.done [#allocation3], 32
    $region29: #{net_forward.19} parent=1 // pred_fallthru
      _
    %148 = vsyncpa [#allocation3], 1

// kernel: net_forward.18
$region0: #{net_forward.18}
  #allocation0 [shape = 'u32[]', space=smem, size = 0x4, offset = 0x4, fixed_abs, tag = 'smem constant byte address 0x4 - core index']
  #allocation1 [shape = 'u32[72,128]{1,0:T(1,128)}', space=vmem, size = 0x9000, scoped, tag = 'internal scratch']
  %s0 = inlined_call_operand.vmem [shape: bf16[2,4,2,256], index: 0, kind: input, shape index: {}]
  %s1 = inlined_call_operand.vmem [shape: bf16[2,2,2,128], index: 1, kind: output, shape index: {}]
  %s2 = sld [smem:[#allocation0]]
  $region37: #{net_forward.18} parent=0
    _
  %s4 = ssub.s32 1, %s2
  %s5 = scalar_select 0, %s4, %s2
  loop: start=0, step=1, limit=4
  $region2: #{net_forward.18} parent=0 // loop_pre_header
    _
  $region3: #{net_forward.18} parent=0 // loop_header
    %s7 = sphi 0, %s11
    %p8 = scmp.ge.s32.totalorder %s7, 4
    %s17 = sphi 0, %s19
    %s20 = sphi 0, %s17
    %s21 = sphi 0, %s20
    %s37 = sphi 0, %s21
    %s43 = sphi 0, %s45
    %s46 = sphi 0, %s43
    %s47 = sphi 0, %s46
    %s63 = sphi 0, %s47
  $region4: #{net_forward.18} parent=0 // loop_header_branch
    %10 = sbr.rel (%p8) target = $region8
  $region5: #{net_forward.18} parent=0 // loop_body
    %s12 = ssub.s32 %s7, 1
    %s13 = ssub.s32 %s7, 2
    %s14 = sadd.s32 %s7, 1
    %s15 = ssub.s32 %s7, %s14
    %p16 = scmp.eq.s32.totalorder %s15, 0
    %s18 = sadd.s32 %s17, 1
    %s19 = scalar_select %p16, %s17, %s18
    %p22 = pneg %p16
    %p23 = scmp.eq.s32.totalorder %s7, 1
    %p24 = por %p22, %p23
    %p25 = scmp.ne.s32.totalorder %s17, %s20
    %p26 = scmp.eq.s32.totalorder %s7, 0
    %p27 = por %p25, %p26
    %p28 = scmp.ne.s32.totalorder %s17, %s20
    %p29 = scmp.eq.s32.totalorder %s12, 1
    %p30 = por %p28, %p29
    %p31 = scmp.ne.s32.totalorder %s20, %s21
    %p32 = scmp.eq.s32.totalorder %s12, 0
    %p33 = por %p31, %p32
    %p34 = scmp.ne.s32.totalorder %s20, %s21
    %p35 = scmp.eq.s32.totalorder %s13, 1
    %p36 = por %p34, %p35
    %p38 = scmp.ne.s32.totalorder %s21, %s37
    %p39 = scmp.eq.s32.totalorder %s13, 0
    %p40 = por %p38, %p39
    %s41 = ssub.s32 %s7, %s14
    %p42 = scmp.eq.s32.totalorder %s41, 0
    %s44 = sadd.s32 %s43, 1
    %s45 = scalar_select %p42, %s43, %s44
    %p48 = pneg %p42
    %p49 = scmp.eq.s32.totalorder %s7, 1
    %p50 = por %p48, %p49
    %p51 = scmp.ne.s32.totalorder %s43, %s46
    %p52 = scmp.eq.s32.totalorder %s7, 0
    %p53 = por %p51, %p52
    %p54 = scmp.ne.s32.totalorder %s43, %s46
    %p55 = scmp.eq.s32.totalorder %s12, 1
    %p56 = por %p54, %p55
    %p57 = scmp.ne.s32.totalorder %s46, %s47
    %p58 = scmp.eq.s32.totalorder %s12, 0
    %p59 = por %p57, %p58
    %p60 = scmp.ne.s32.totalorder %s46, %s47
    %p61 = scmp.eq.s32.totalorder %s13, 1
    %p62 = por %p60, %p61
    %p64 = scmp.ne.s32.totalorder %s47, %s63
    %p65 = scmp.eq.s32.totalorder %s13, 0
    %p66 = por %p64, %p65
    %p67 = scmp.le.s32.totalorder 1, %s7
    %p68 = scmp.lt.s32.totalorder %s7, 3
    %p69 = pnand %p67, %p68
    %p70 = pneg %p69
    // Predicated region
    $region9: #{net_forward.18} parent=5 // pred_check
      _
    $region10: #{net_forward.18} parent=5 // pred_check_branch
      %72 = sbr.rel (%p69) target = $region12
    $region11: #{net_forward.18} parent=5 // pred_region
      %s73 = ssub.s32 %s7, 1
    $region12: #{net_forward.18} parent=5 // pred_fallthru
      _
    %p74 = scmp.lt.s32.totalorder %s7, 2
    // Predicated region
    $region13: #{net_forward.18} parent=5 // pred_check
      %p75 = pneg %p74
    $region14: #{net_forward.18} parent=5 // pred_check_branch
      %77 = sbr.rel (%p75) target = $region16
    $region15: #{net_forward.18} parent=5 // pred_region
      // Predicated region
      $region17: #{net_forward.18} parent=15 // pred_check
        %p78 = pneg %p27
      $region18: #{net_forward.18} parent=15 // pred_check_branch
        %80 = sbr.rel (%p78) target = $region20
      $region19: #{net_forward.18} parent=15 // pred_region
        %p81 = scmp.lt.s32.totalorder %s7, 1
        %s82 = scalar_select %p81, %s7, 1
        %s83 = smul.addr %s82, 8
        %s84 = scalar_lea.vmem %s0, %s83
      $region20: #{net_forward.18} parent=15 // pred_fallthru
        _
    $region16: #{net_forward.18} parent=5 // pred_fallthru
      _
    %p85 = scmp.le.s32.totalorder 1, %s7
    %p86 = scmp.lt.s32.totalorder %s7, 3
    %p87 = pnand %p85, %p86
    %p88 = pneg %p87
    // Predicated region
    $region21: #{net_forward.18} parent=5 // pred_check
      _
    $region22: #{net_forward.18} parent=5 // pred_check_branch
      %90 = sbr.rel (%p87) target = $region24
    $region23: #{net_forward.18} parent=5 // pred_region
      %s91 = ssub.s32 %s7, 1
      %p92 = scmp.lt.s32.totalorder %s12, 1
      %s93 = scalar_select %p92, %s12, 1
      %s94 = smul.addr %s93, 8
      %s95 = scalar_lea.vmem %s0, %s94
      %p96 = pneg %p33
      %p97 = pneg %p30
      %p98 = pneg %p59
      %p99 = pneg %p56
      %p100 = scmp.lt.s32.totalorder %s12, 1
      %s101 = scalar_select %p100, %s12, 1
      %s102 = smul.addr %s101, 2
      %s103 = scalar_lea.vmem %s1, %s102
      %p104 = scmp.lt.s32.totalorder %s12, 1
      %s105 = scalar_select %p104, %s12, 1
      %s106 = smul.addr %s105, 8
      %s107 = scalar_lea.vmem %s0, %s106
      %p108 = scmp.lt.s32.totalorder %s12, 1
      %s109 = scalar_select %p108, %s12, 1
      %s110 = smul.addr %s109, 2
      %s111 = scalar_lea.vmem %s1, %s110
      %v112 = vld [vmem:[%s107] sm:$0x3]
      %v113 = vld [vmem:[%s107 + $0x2] sm:$0x3]
      %v114 = vld [vmem:[%s107 + $0x4] sm:$0x3]
      %v115 = vld [vmem:[%s107 + $0x6] sm:$0x3]
      %v116 = vunpack.c.l.bf16 %v112
      %v117 = vunpack.c.l.bf16 %v114
      %v118 = vunpack.c.l.bf16 %v113
      %v119 = vunpack.c.l.bf16 %v115
      %v120 = vmax.f32 %v116, %v118
      %v121 = vmax.f32 %v117, %v119
      %124 = vst [vmem:[#allocation1] ss:$4 sm:$0xff] %v120
      %v125 = vld.sshfl [vmem:[#allocation1] sm:$0xff pattern:$0x73625140]
      %v126 = vld.sshfl [vmem:[#allocation1 + $0x8] sm:$0xff pattern:$0x73625140]
      %s127 = scalar_lea.vmem [#allocation1], 32
      %128 = vst [vmem:[%s127] ss:$4 sm:$0xff] %v121
      %v129 = vld.sshfl [vmem:[#allocation1 + $0x20] sm:$0xff pattern:$0x73625140]
      %v130 = vld.sshfl [vmem:[#allocation1 + $0x28] sm:$0xff pattern:$0x73625140]
      %v135 = vpack.c.bf16 %v126, %v125
      %v136 = vpack.c.bf16 %v130, %v129
      %v137 = vunpack.c.l.bf16 %v135
      %v138 = vunpack.c.l.bf16 %v136
      %v141 = vrot.slane %v135, 4
      %v142 = vrot.slane %v136, 4
      %v145 = vunpack.c.l.bf16 %v141
      %v146 = vunpack.c.l.bf16 %v142
      %v147 = vmax.f32 %v137, %v145
      %v148 = vmax.f32 %v138, %v146
      %v149 = vpack.c.bf16 %v147, %v147
      %v150 = vpack.c.bf16 %v148, %v148
      %151 = vst [vmem:[%s111] sm:$0x1] %v149
      %152 = vst [vmem:[%s111 + $0x1] sm:$0x1] %v150
      %p153 = scmp.lt.s32.totalorder %s12, 1
      %s154 = scalar_select %p153, %s12, 1
      %s155 = smul.addr %s154, 2
      %s156 = scalar_lea.vmem %s1, %s155
      // Predicated region
      $region25: #{net_forward.18} parent=23 // pred_check
        %p157 = pneg %p56
      $region26: #{net_forward.18} parent=23 // pred_check_branch
        %159 = sbr.rel (%p157) target = $region28
      $region27: #{net_forward.18} parent=23 // pred_region
        _
      $region28: #{net_forward.18} parent=23 // pred_fallthru
        _
    $region24: #{net_forward.18} parent=5 // pred_fallthru
      _
    %p160 = scmp.le.s32.totalorder 2, %s7
    // Predicated region
    $region29: #{net_forward.18} parent=5 // pred_check
      %p161 = pneg %p160
    $region30: #{net_forward.18} parent=5 // pred_check_branch
      %163 = sbr.rel (%p161) target = $region32
    $region31: #{net_forward.18} parent=5 // pred_region
      %s164 = ssub.s32 %s7, 2
      // Predicated region
      $region33: #{net_forward.18} parent=31 // pred_check
        %p165 = pneg %p62
      $region34: #{net_forward.18} parent=31 // pred_check_branch
        %167 = sbr.rel (%p165) target = $region36
      $region35: #{net_forward.18} parent=31 // pred_region
        %p168 = scmp.lt.s32.totalorder %s13, 1
        %s169 = scalar_select %p168, %s13, 1
        %s170 = smul.addr %s169, 2
        %s171 = scalar_lea.vmem %s1, %s170
      $region36: #{net_forward.18} parent=31 // pred_fallthru
        _
    $region32: #{net_forward.18} parent=5 // pred_fallthru
      _
  $region6: #{net_forward.18} parent=0 // loop_footer
    %s11 = sadd.s32 1, %s7
  $region7: #{net_forward.18} parent=0 // loop_footer_branch
    %6 = sbr.rel target = $region3
  $region8: #{net_forward.18} parent=0 // loop_exit
    _

// kernel: net_forward.17
$region0: #{net_forward.17}
  #allocation0 [shape = 'u32[]', space=smem, size = 0x4, offset = 0x4, fixed_abs, tag = 'smem constant byte address 0x4 - core index']
  #allocation1 [shape = 'u32[72,128]{1,0:T(1,128)}', space=vmem, size = 0x9000, scoped, tag = 'internal scratch']
  %s0 = inlined_call_operand.vmem [shape: bf16[32,1152], index: 0, kind: input, shape index: {}]
  %s1 = inlined_call_operand.vmem [shape: bf16[1152,128], index: 1, kind: input, shape index: {}]
  %s2 = inlined_call_operand.vmem [shape: f32[1,128], index: 2, kind: input, shape index: {}]
  %s3 = inlined_call_operand.vmem [shape: f32[1,128], index: 3, kind: input, shape index: {}]
  %s4 = inlined_call_operand.vmem [shape: bf16[32,128], index: 4, kind: output, shape index: {}]
  %s5 = sld [smem:[#allocation0]]
  $region26: #{net_forward.17} parent=0
    _
  %s7 = ssub.s32 1, %s5
  %s8 = scalar_select 0, %s7, %s5
  // Predicated region
  $region2: #{net_forward.17} parent=0 // pred_check
    _
  $region3: #{net_forward.17} parent=0 // pred_check_branch
    %10 = sbr.rel (0) target = $region5
  $region4: #{net_forward.17} parent=0 // pred_region
    _
  $region5: #{net_forward.17} parent=0 // pred_fallthru
    _
  // Predicated region
  $region6: #{net_forward.17} parent=0 // pred_check
    _
  $region7: #{net_forward.17} parent=0 // pred_check_branch
    %12 = sbr.rel (0) target = $region9
  $region8: #{net_forward.17} parent=0 // pred_region
    _
  $region9: #{net_forward.17} parent=0 // pred_fallthru
    _
  // Predicated region
  $region10: #{net_forward.17} parent=0 // pred_check
    _
  $region11: #{net_forward.17} parent=0 // pred_check_branch
    %14 = sbr.rel (0) target = $region13
  $region12: #{net_forward.17} parent=0 // pred_region
    _
  $region13: #{net_forward.17} parent=0 // pred_fallthru
    _
  // Predicated region
  $region14: #{net_forward.17} parent=0 // pred_check
    _
  $region15: #{net_forward.17} parent=0 // pred_check_branch
    %16 = sbr.rel (0) target = $region17
  $region16: #{net_forward.17} parent=0 // pred_region
    _
  $region17: #{net_forward.17} parent=0 // pred_fallthru
    _
  %v17 = vld [vmem:[%s0] sm:$0xff]
  %v18 = vld [vmem:[%s0 + $0x8] sm:$0xff]
  %v19 = vld [vmem:[%s0 + $0x10] sm:$0xff]
  %v20 = vld [vmem:[%s0 + $0x18] sm:$0xff]
  %v21 = vld [vmem:[%s0 + $0x20] sm:$0xf]
  %v22 = vld [vmem:[%s0 + $0x24] sm:$0xff]
  %v23 = vld [vmem:[%s0 + $0x2c] sm:$0xff]
  %v24 = vld [vmem:[%s0 + $0x34] sm:$0xff]
  %v25 = vld [vmem:[%s0 + $0x3c] sm:$0xff]
  %v26 = vld [vmem:[%s0 + $0x44] sm:$0xf]
  %v27 = vld [vmem:[%s0 + $0x48] sm:$0xff]
  %v28 = vld [vmem:[%s0 + $0x50] sm:$0xff]
  %v29 = vld [vmem:[%s0 + $0x58] sm:$0xff]
  %v30 = vld [vmem:[%s0 + $0x60] sm:$0xff]
  %v31 = vld [vmem:[%s0 + $0x68] sm:$0xf]
  %v32 = vld [vmem:[%s0 + $0x6c] sm:$0xff]
  %v33 = vld [vmem:[%s0 + $0x74] sm:$0xff]
  %v34 = vld [vmem:[%s0 + $0x7c] sm:$0xff]
  %v35 = vld [vmem:[%s0 + $0x84] sm:$0xff]
  %v36 = vld [vmem:[%s0 + $0x8c] sm:$0xf]
  %v37 = vld [vmem:[%s1] sm:$0xf]
  %v38 = vld [vmem:[%s1 + $0x4] sm:$0xf]
  %v39 = vld [vmem:[%s1 + $0x8] sm:$0xf]
  %v40 = vld [vmem:[%s1 + $0xc] sm:$0xf]
  %v41 = vld [vmem:[%s1 + $0x10] sm:$0xf]
  %v42 = vld [vmem:[%s1 + $0x14] sm:$0xf]
  %v43 = vld [vmem:[%s1 + $0x18] sm:$0xf]
  %v44 = vld [vmem:[%s1 + $0x1c] sm:$0xf]
  %v45 = vld [vmem:[%s1 + $0x20] sm:$0xf]
  %v46 = vld [vmem:[%s1 + $0x24] sm:$0xf]
  %v47 = vld [vmem:[%s1 + $0x28] sm:$0xf]
  %v48 = vld [vmem:[%s1 + $0x2c] sm:$0xf]
  %v49 = vld [vmem:[%s1 + $0x30] sm:$0xf]
  %v50 = vld [vmem:[%s1 + $0x34] sm:$0xf]
  %v51 = vld [vmem:[%s1 + $0x38] sm:$0xf]
  %v52 = vld [vmem:[%s1 + $0x3c] sm:$0xf]
  %v53 = vld [vmem:[%s1 + $0x40] sm:$0xf]
  %v54 = vld [vmem:[%s1 + $0x44] sm:$0xf]
  %v55 = vld [vmem:[%s1 + $0x48] sm:$0xf]
  %v56 = vld [vmem:[%s1 + $0x4c] sm:$0xf]
  %v57 = vld [vmem:[%s1 + $0x50] sm:$0xf]
  %v58 = vld [vmem:[%s1 + $0x54] sm:$0xf]
  %v59 = vld [vmem:[%s1 + $0x58] sm:$0xf]
  %v60 = vld [vmem:[%s1 + $0x5c] sm:$0xf]
  %v61 = vld [vmem:[%s1 + $0x60] sm:$0xf]
  %v62 = vld [vmem:[%s1 + $0x64] sm:$0xf]
  %v63 = vld [vmem:[%s1 + $0x68] sm:$0xf]
  %v64 = vld [vmem:[%s1 + $0x6c] sm:$0xf]
  %v65 = vld [vmem:[%s1 + $0x70] sm:$0xf]
  %v66 = vld [vmem:[%s1 + $0x74] sm:$0xf]
  %v67 = vld [vmem:[%s1 + $0x78] sm:$0xf]
  %v68 = vld [vmem:[%s1 + $0x7c] sm:$0xf]
  %v69 = vld [vmem:[%s1 + $0x80] sm:$0xf]
  %v70 = vld [vmem:[%s1 + $0x84] sm:$0xf]
  %v71 = vld [vmem:[%s1 + $0x88] sm:$0xf]
  %v72 = vld [vmem:[%s1 + $0x8c] sm:$0xf]
  %v73 = vld [vmem:[%s1 + $0x90] sm:$0xf]
  %v74 = vld [vmem:[%s1 + $0x94] sm:$0xf]
  %v75 = vld [vmem:[%s1 + $0x98] sm:$0xf]
  %v76 = vld [vmem:[%s1 + $0x9c] sm:$0xf]
  %v77 = vld [vmem:[%s1 + $0xa0] sm:$0xf]
  %v78 = vld [vmem:[%s1 + $0xa4] sm:$0xf]
  %v79 = vld [vmem:[%s1 + $0xa8] sm:$0xf]
  %v80 = vld [vmem:[%s1 + $0xac] sm:$0xf]
  %v81 = vld [vmem:[%s1 + $0xb0] sm:$0xf]
  %v82 = vld [vmem:[%s1 + $0xb4] sm:$0xf]
  %v83 = vld [vmem:[%s1 + $0xb8] sm:$0xf]
  %v84 = vld [vmem:[%s1 + $0xbc] sm:$0xf]
  %v85 = vld [vmem:[%s1 + $0xc0] sm:$0xf]
  %v86 = vld [vmem:[%s1 + $0xc4] sm:$0xf]
  %v87 = vld [vmem:[%s1 + $0xc8] sm:$0xf]
  %v88 = vld [vmem:[%s1 + $0xcc] sm:$0xf]
  %v89 = vld [vmem:[%s1 + $0xd0] sm:$0xf]
  %v90 = vld [vmem:[%s1 + $0xd4] sm:$0xf]
  %v91 = vld [vmem:[%s1 + $0xd8] sm:$0xf]
  %v92 = vld [vmem:[%s1 + $0xdc] sm:$0xf]
  %v93 = vld [vmem:[%s1 + $0xe0] sm:$0xf]
  %v94 = vld [vmem:[%s1 + $0xe4] sm:$0xf]
  %v95 = vld [vmem:[%s1 + $0xe8] sm:$0xf]
  %v96 = vld [vmem:[%s1 + $0xec] sm:$0xf]
  %v97 = vld [vmem:[%s1 + $0xf0] sm:$0xf]
  %v98 = vld [vmem:[%s1 + $0xf4] sm:$0xf]
  %v99 = vld [vmem:[%s1 + $0xf8] sm:$0xf]
  %v100 = vld [vmem:[%s1 + $0xfc] sm:$0xf]
  %v101 = vld [vmem:[%s1 + $0x100] sm:$0xf]
  %v102 = vld [vmem:[%s1 + $0x104] sm:$0xf]
  %v103 = vld [vmem:[%s1 + $0x108] sm:$0xf]
  %v104 = vld [vmem:[%s1 + $0x10c] sm:$0xf]
  %v105 = vld [vmem:[%s1 + $0x110] sm:$0xf]
  %v106 = vld [vmem:[%s1 + $0x114] sm:$0xf]
  %v107 = vld [vmem:[%s1 + $0x118] sm:$0xf]
  %v108 = vld [vmem:[%s1 + $0x11c] sm:$0xf]
  %v109 = vld [vmem:[%s1 + $0x120] sm:$0xf]
  %v110 = vld [vmem:[%s1 + $0x124] sm:$0xf]
  %v111 = vld [vmem:[%s1 + $0x128] sm:$0xf]
  %v112 = vld [vmem:[%s1 + $0x12c] sm:$0xf]
  %v113 = vld [vmem:[%s1 + $0x130] sm:$0xf]
  %v114 = vld [vmem:[%s1 + $0x134] sm:$0xf]
  %v115 = vld [vmem:[%s1 + $0x138] sm:$0xf]
  %v116 = vld [vmem:[%s1 + $0x13c] sm:$0xf]
  %v117 = vld [vmem:[%s1 + $0x140] sm:$0xf]
  %v118 = vld [vmem:[%s1 + $0x144] sm:$0xf]
  %v119 = vld [vmem:[%s1 + $0x148] sm:$0xf]
  %v120 = vld [vmem:[%s1 + $0x14c] sm:$0xf]
  %v121 = vld [vmem:[%s1 + $0x150] sm:$0xf]
  %v122 = vld [vmem:[%s1 + $0x154] sm:$0xf]
  %v123 = vld [vmem:[%s1 + $0x158] sm:$0xf]
  %v124 = vld [vmem:[%s1 + $0x15c] sm:$0xf]
  %v125 = vld [vmem:[%s1 + $0x160] sm:$0xf]
  %v126 = vld [vmem:[%s1 + $0x164] sm:$0xf]
  %v127 = vld [vmem:[%s1 + $0x168] sm:$0xf]
  %v128 = vld [vmem:[%s1 + $0x16c] sm:$0xf]
  %v129 = vld [vmem:[%s1 + $0x170] sm:$0xf]
  %v130 = vld [vmem:[%s1 + $0x174] sm:$0xf]
  %v131 = vld [vmem:[%s1 + $0x178] sm:$0xf]
  %v132 = vld [vmem:[%s1 + $0x17c] sm:$0xf]
  %v133 = vld [vmem:[%s1 + $0x180] sm:$0xf]
  %v134 = vld [vmem:[%s1 + $0x184] sm:$0xf]
  %v135 = vld [vmem:[%s1 + $0x188] sm:$0xf]
  %v136 = vld [vmem:[%s1 + $0x18c] sm:$0xf]
  %v137 = vld [vmem:[%s1 + $0x190] sm:$0xf]
  %v138 = vld [vmem:[%s1 + $0x194] sm:$0xf]
  %v139 = vld [vmem:[%s1 + $0x198] sm:$0xf]
  %v140 = vld [vmem:[%s1 + $0x19c] sm:$0xf]
  %v141 = vld [vmem:[%s1 + $0x1a0] sm:$0xf]
  %v142 = vld [vmem:[%s1 + $0x1a4] sm:$0xf]
  %v143 = vld [vmem:[%s1 + $0x1a8] sm:$0xf]
  %v144 = vld [vmem:[%s1 + $0x1ac] sm:$0xf]
  %v145 = vld [vmem:[%s1 + $0x1b0] sm:$0xf]
  %v146 = vld [vmem:[%s1 + $0x1b4] sm:$0xf]
  %v147 = vld [vmem:[%s1 + $0x1b8] sm:$0xf]
  %v148 = vld [vmem:[%s1 + $0x1bc] sm:$0xf]
  %v149 = vld [vmem:[%s1 + $0x1c0] sm:$0xf]
  %v150 = vld [vmem:[%s1 + $0x1c4] sm:$0xf]
  %v151 = vld [vmem:[%s1 + $0x1c8] sm:$0xf]
  %v152 = vld [vmem:[%s1 + $0x1cc] sm:$0xf]
  %v153 = vld [vmem:[%s1 + $0x1d0] sm:$0xf]
  %v154 = vld [vmem:[%s1 + $0x1d4] sm:$0xf]
  %v155 = vld [vmem:[%s1 + $0x1d8] sm:$0xf]
  %v156 = vld [vmem:[%s1 + $0x1dc] sm:$0xf]
  %v157 = vld [vmem:[%s1 + $0x1e0] sm:$0xf]
  %v158 = vld [vmem:[%s1 + $0x1e4] sm:$0xf]
  %v159 = vld [vmem:[%s1 + $0x1e8] sm:$0xf]
  %v160 = vld [vmem:[%s1 + $0x1ec] sm:$0xf]
  %v161 = vld [vmem:[%s1 + $0x1f0] sm:$0xf]
  %v162 = vld [vmem:[%s1 + $0x1f4] sm:$0xf]
  %v163 = vld [vmem:[%s1 + $0x1f8] sm:$0xf]
  %v164 = vld [vmem:[%s1 + $0x1fc] sm:$0xf]
  %v165 = vld [vmem:[%s1 + $0x200] sm:$0xf]
  %v166 = vld [vmem:[%s1 + $0x204] sm:$0xf]
  %v167 = vld [vmem:[%s1 + $0x208] sm:$0xf]
  %v168 = vld [vmem:[%s1 + $0x20c] sm:$0xf]
  %v169 = vld [vmem:[%s1 + $0x210] sm:$0xf]
  %v170 = vld [vmem:[%s1 + $0x214] sm:$0xf]
  %v171 = vld [vmem:[%s1 + $0x218] sm:$0xf]
  %v172 = vld [vmem:[%s1 + $0x21c] sm:$0xf]
  %v173 = vld [vmem:[%s1 + $0x220] sm:$0xf]
  %v174 = vld [vmem:[%s1 + $0x224] sm:$0xf]
  %v175 = vld [vmem:[%s1 + $0x228] sm:$0xf]
  %v176 = vld [vmem:[%s1 + $0x22c] sm:$0xf]
  %v177 = vld [vmem:[%s1 + $0x230] sm:$0xf]
  %v178 = vld [vmem:[%s1 + $0x234] sm:$0xf]
  %v179 = vld [vmem:[%s1 + $0x238] sm:$0xf]
  %v180 = vld [vmem:[%s1 + $0x23c] sm:$0xf]
  %v201 = vunpack.c.l.b16 %v17
  %v202 = vunpack.c.h.b16 %v17
  %v203 = vunpack.c.l.b16 %v18
  %v204 = vunpack.c.h.b16 %v18
  %v205 = vunpack.c.l.b16 %v19
  %v206 = vunpack.c.h.b16 %v19
  %v207 = vunpack.c.l.b16 %v20
  %v208 = vunpack.c.h.b16 %v20
  %v209 = vunpack.c.l.b16 %v21
  %v210 = vunpack.c.l.b16 %v22
  %v211 = vunpack.c.h.b16 %v22
  %v212 = vunpack.c.l.b16 %v23
  %v213 = vunpack.c.h.b16 %v23
  %v214 = vunpack.c.l.b16 %v24
  %v215 = vunpack.c.h.b16 %v24
  %v216 = vunpack.c.l.b16 %v25
  %v217 = vunpack.c.h.b16 %v25
  %v218 = vunpack.c.l.b16 %v26
  %v219 = vunpack.c.l.b16 %v27
  %v220 = vunpack.c.h.b16 %v27
  %v221 = vunpack.c.l.b16 %v28
  %v222 = vunpack.c.h.b16 %v28
  %v223 = vunpack.c.l.b16 %v29
  %v224 = vunpack.c.h.b16 %v29
  %v225 = vunpack.c.l.b16 %v30
  %v226 = vunpack.c.h.b16 %v30
  %v227 = vunpack.c.l.b16 %v31
  %v228 = vunpack.c.l.b16 %v32
  %v229 = vunpack.c.h.b16 %v32
  %v230 = vunpack.c.l.b16 %v33
  %v231 = vunpack.c.h.b16 %v33
  %v232 = vunpack.c.l.b16 %v34
  %v233 = vunpack.c.h.b16 %v34
  %v234 = vunpack.c.l.b16 %v35
  %v235 = vunpack.c.h.b16 %v35
  %v236 = vunpack.c.l.b16 %v36
  %v237 = vpack.c.b16 %v210, %v201
  %v238 = vpack.c.b16 %v211, %v202
  %v239 = vpack.c.b16 %v212, %v203
  %v240 = vpack.c.b16 %v213, %v204
  %v241 = vpack.c.b16 %v214, %v205
  %v242 = vpack.c.b16 %v215, %v206
  %v243 = vpack.c.b16 %v216, %v207
  %v244 = vpack.c.b16 %v217, %v208
  %v245 = vpack.c.b16 %v218, %v209
  %v246 = vpack.c.b16 %v228, %v219
  %v247 = vpack.c.b16 %v229, %v220
  %v248 = vpack.c.b16 %v230, %v221
  %v249 = vpack.c.b16 %v231, %v222
  %v250 = vpack.c.b16 %v232, %v223
  %v251 = vpack.c.b16 %v233, %v224
  %v252 = vpack.c.b16 %v234, %v225
  %v253 = vpack.c.b16 %v235, %v226
  %v254 = vpack.c.b16 %v236, %v227
  %v417 = vunpack.c.l.b16 %v37
  %v418 = vunpack.c.l.b16 %v38
  %v419 = vunpack.c.l.b16 %v39
  %v420 = vunpack.c.l.b16 %v40
  %v421 = vunpack.c.l.b16 %v41
  %v422 = vunpack.c.l.b16 %v42
  %v423 = vunpack.c.l.b16 %v43
  %v424 = vunpack.c.l.b16 %v44
  %v425 = vunpack.c.l.b16 %v45
  %v426 = vunpack.c.l.b16 %v46
  %v427 = vunpack.c.l.b16 %v47
  %v428 = vunpack.c.l.b16 %v48
  %v429 = vunpack.c.l.b16 %v49
  %v430 = vunpack.c.l.b16 %v50
  %v431 = vunpack.c.l.b16 %v51
  %v432 = vunpack.c.l.b16 %v52
  %v433 = vunpack.c.l.b16 %v53
  %v434 = vunpack.c.l.b16 %v54
  %v435 = vunpack.c.l.b16 %v55
  %v436 = vunpack.c.l.b16 %v56
  %v437 = vunpack.c.l.b16 %v57
  %v438 = vunpack.c.l.b16 %v58
  %v439 = vunpack.c.l.b16 %v59
  %v440 = vunpack.c.l.b16 %v60
  %v441 = vunpack.c.l.b16 %v61
  %v442 = vunpack.c.l.b16 %v62
  %v443 = vunpack.c.l.b16 %v63
  %v444 = vunpack.c.l.b16 %v64
  %v445 = vunpack.c.l.b16 %v65
  %v446 = vunpack.c.l.b16 %v66
  %v447 = vunpack.c.l.b16 %v67
  %v448 = vunpack.c.l.b16 %v68
  %v449 = vunpack.c.l.b16 %v69
  %v450 = vunpack.c.l.b16 %v70
  %v451 = vunpack.c.l.b16 %v71
  %v452 = vunpack.c.l.b16 %v72
  %v453 = vunpack.c.l.b16 %v73
  %v454 = vunpack.c.l.b16 %v74
  %v455 = vunpack.c.l.b16 %v75
  %v456 = vunpack.c.l.b16 %v76
  %v457 = vunpack.c.l.b16 %v77
  %v458 = vunpack.c.l.b16 %v78
  %v459 = vunpack.c.l.b16 %v79
  %v460 = vunpack.c.l.b16 %v80
  %v461 = vunpack.c.l.b16 %v81
  %v462 = vunpack.c.l.b16 %v82
  %v463 = vunpack.c.l.b16 %v83
  %v464 = vunpack.c.l.b16 %v84
  %v465 = vunpack.c.l.b16 %v85
  %v466 = vunpack.c.l.b16 %v86
  %v467 = vunpack.c.l.b16 %v87
  %v468 = vunpack.c.l.b16 %v88
  %v469 = vunpack.c.l.b16 %v89
  %v470 = vunpack.c.l.b16 %v90
  %v471 = vunpack.c.l.b16 %v91
  %v472 = vunpack.c.l.b16 %v92
  %v473 = vunpack.c.l.b16 %v93
  %v474 = vunpack.c.l.b16 %v94
  %v475 = vunpack.c.l.b16 %v95
  %v476 = vunpack.c.l.b16 %v96
  %v477 = vunpack.c.l.b16 %v97
  %v478 = vunpack.c.l.b16 %v98
  %v479 = vunpack.c.l.b16 %v99
  %v480 = vunpack.c.l.b16 %v100
  %v481 = vunpack.c.l.b16 %v101
  %v482 = vunpack.c.l.b16 %v102
  %v483 = vunpack.c.l.b16 %v103
  %v484 = vunpack.c.l.b16 %v104
  %v485 = vunpack.c.l.b16 %v105
  %v486 = vunpack.c.l.b16 %v106
  %v487 = vunpack.c.l.b16 %v107
  %v488 = vunpack.c.l.b16 %v108
  %v489 = vunpack.c.l.b16 %v109
  %v490 = vunpack.c.l.b16 %v110
  %v491 = vunpack.c.l.b16 %v111
  %v492 = vunpack.c.l.b16 %v112
  %v493 = vunpack.c.l.b16 %v113
  %v494 = vunpack.c.l.b16 %v114
  %v495 = vunpack.c.l.b16 %v115
  %v496 = vunpack.c.l.b16 %v116
  %v497 = vunpack.c.l.b16 %v117
  %v498 = vunpack.c.l.b16 %v118
  %v499 = vunpack.c.l.b16 %v119
  %v500 = vunpack.c.l.b16 %v120
  %v501 = vunpack.c.l.b16 %v121
  %v502 = vunpack.c.l.b16 %v122
  %v503 = vunpack.c.l.b16 %v123
  %v504 = vunpack.c.l.b16 %v124
  %v505 = vunpack.c.l.b16 %v125
  %v506 = vunpack.c.l.b16 %v126
  %v507 = vunpack.c.l.b16 %v127
  %v508 = vunpack.c.l.b16 %v128
  %v509 = vunpack.c.l.b16 %v129
  %v510 = vunpack.c.l.b16 %v130
  %v511 = vunpack.c.l.b16 %v131
  %v512 = vunpack.c.l.b16 %v132
  %v513 = vunpack.c.l.b16 %v133
  %v514 = vunpack.c.l.b16 %v134
  %v515 = vunpack.c.l.b16 %v135
  %v516 = vunpack.c.l.b16 %v136
  %v517 = vunpack.c.l.b16 %v137
  %v518 = vunpack.c.l.b16 %v138
  %v519 = vunpack.c.l.b16 %v139
  %v520 = vunpack.c.l.b16 %v140
  %v521 = vunpack.c.l.b16 %v141
  %v522 = vunpack.c.l.b16 %v142
  %v523 = vunpack.c.l.b16 %v143
  %v524 = vunpack.c.l.b16 %v144
  %v525 = vunpack.c.l.b16 %v145
  %v526 = vunpack.c.l.b16 %v146
  %v527 = vunpack.c.l.b16 %v147
  %v528 = vunpack.c.l.b16 %v148
  %v529 = vunpack.c.l.b16 %v149
  %v530 = vunpack.c.l.b16 %v150
  %v531 = vunpack.c.l.b16 %v151
  %v532 = vunpack.c.l.b16 %v152
  %v533 = vunpack.c.l.b16 %v153
  %v534 = vunpack.c.l.b16 %v154
  %v535 = vunpack.c.l.b16 %v155
  %v536 = vunpack.c.l.b16 %v156
  %v537 = vunpack.c.l.b16 %v157
  %v538 = vunpack.c.l.b16 %v158
  %v539 = vunpack.c.l.b16 %v159
  %v540 = vunpack.c.l.b16 %v160
  %v541 = vunpack.c.l.b16 %v161
  %v542 = vunpack.c.l.b16 %v162
  %v543 = vunpack.c.l.b16 %v163
  %v544 = vunpack.c.l.b16 %v164
  %v545 = vunpack.c.l.b16 %v165
  %v546 = vunpack.c.l.b16 %v166
  %v547 = vunpack.c.l.b16 %v167
  %v548 = vunpack.c.l.b16 %v168
  %v549 = vunpack.c.l.b16 %v169
  %v550 = vunpack.c.l.b16 %v170
  %v551 = vunpack.c.l.b16 %v171
  %v552 = vunpack.c.l.b16 %v172
  %v553 = vunpack.c.l.b16 %v173
  %v554 = vunpack.c.l.b16 %v174
  %v555 = vunpack.c.l.b16 %v175
  %v556 = vunpack.c.l.b16 %v176
  %v557 = vunpack.c.l.b16 %v177
  %v558 = vunpack.c.l.b16 %v178
  %v559 = vunpack.c.l.b16 %v179
  %v560 = vunpack.c.l.b16 %v180
  %v561 = vpack.c.b16 %v418, %v417
  %v562 = vpack.c.b16 %v420, %v419
  %v563 = vpack.c.b16 %v422, %v421
  %v564 = vpack.c.b16 %v424, %v423
  %v565 = vpack.c.b16 %v426, %v425
  %v566 = vpack.c.b16 %v428, %v427
  %v567 = vpack.c.b16 %v430, %v429
  %v568 = vpack.c.b16 %v432, %v431
  %v569 = vpack.c.b16 %v434, %v433
  %v570 = vpack.c.b16 %v436, %v435
  %v571 = vpack.c.b16 %v438, %v437
  %v572 = vpack.c.b16 %v440, %v439
  %v573 = vpack.c.b16 %v442, %v441
  %v574 = vpack.c.b16 %v444, %v443
  %v575 = vpack.c.b16 %v446, %v445
  %v576 = vpack.c.b16 %v448, %v447
  %v577 = vpack.c.b16 %v450, %v449
  %v578 = vpack.c.b16 %v452, %v451
  %v579 = vpack.c.b16 %v454, %v453
  %v580 = vpack.c.b16 %v456, %v455
  %v581 = vpack.c.b16 %v458, %v457
  %v582 = vpack.c.b16 %v460, %v459
  %v583 = vpack.c.b16 %v462, %v461
  %v584 = vpack.c.b16 %v464, %v463
  %v585 = vpack.c.b16 %v466, %v465
  %v586 = vpack.c.b16 %v468, %v467
  %v587 = vpack.c.b16 %v470, %v469
  %v588 = vpack.c.b16 %v472, %v471
  %v589 = vpack.c.b16 %v474, %v473
  %v590 = vpack.c.b16 %v476, %v475
  %v591 = vpack.c.b16 %v478, %v477
  %v592 = vpack.c.b16 %v480, %v479
  %v593 = vpack.c.b16 %v482, %v481
  %v594 = vpack.c.b16 %v484, %v483
  %v595 = vpack.c.b16 %v486, %v485
  %v596 = vpack.c.b16 %v488, %v487
  %v597 = vpack.c.b16 %v490, %v489
  %v598 = vpack.c.b16 %v492, %v491
  %v599 = vpack.c.b16 %v494, %v493
  %v600 = vpack.c.b16 %v496, %v495
  %v601 = vpack.c.b16 %v498, %v497
  %v602 = vpack.c.b16 %v500, %v499
  %v603 = vpack.c.b16 %v502, %v501
  %v604 = vpack.c.b16 %v504, %v503
  %v605 = vpack.c.b16 %v506, %v505
  %v606 = vpack.c.b16 %v508, %v507
  %v607 = vpack.c.b16 %v510, %v509
  %v608 = vpack.c.b16 %v512, %v511
  %v609 = vpack.c.b16 %v514, %v513
  %v610 = vpack.c.b16 %v516, %v515
  %v611 = vpack.c.b16 %v518, %v517
  %v612 = vpack.c.b16 %v520, %v519
  %v613 = vpack.c.b16 %v522, %v521
  %v614 = vpack.c.b16 %v524, %v523
  %v615 = vpack.c.b16 %v526, %v525
  %v616 = vpack.c.b16 %v528, %v527
  %v617 = vpack.c.b16 %v530, %v529
  %v618 = vpack.c.b16 %v532, %v531
  %v619 = vpack.c.b16 %v534, %v533
  %v620 = vpack.c.b16 %v536, %v535
  %v621 = vpack.c.b16 %v538, %v537
  %v622 = vpack.c.b16 %v540, %v539
  %v623 = vpack.c.b16 %v542, %v541
  %v624 = vpack.c.b16 %v544, %v543
  %v625 = vpack.c.b16 %v546, %v545
  %v626 = vpack.c.b16 %v548, %v547
  %v627 = vpack.c.b16 %v550, %v549
  %v628 = vpack.c.b16 %v552, %v551
  %v629 = vpack.c.b16 %v554, %v553
  %v630 = vpack.c.b16 %v556, %v555
  %v631 = vpack.c.b16 %v558, %v557
  %v632 = vpack.c.b16 %v560, %v559
  %705 = vmatpush.bf16.msra.mxu0 %v568
  %706 = vmatpush.bf16.msra.mxu0 %v567
  %707 = vmatpush.bf16.msra.mxu0 %v566
  %708 = vmatpush.bf16.msra.mxu0 %v565
  %709 = vmatpush.bf16.msra.mxu0 %v564
  %710 = vmatpush.bf16.msra.mxu0 %v563
  %711 = vmatpush.bf16.msra.mxu0 %v562
  %712 = vmatpush.bf16.msra.mxu0 %v561
  %713 = vmatmul.bf16.gmra.mxu0 %v237
  %v714 = vpop.f32.mrf.mxu0
  %v715 = vadd.f32 0.0, %v714
  %v716 = vpop.f32.mrf.mxu0
  %v717 = vadd.f32 0.0, %v716
  %718 = vmatmul.bf16.gmra.mxu0 %v246
  %v719 = vpop.f32.mrf.mxu0
  %v720 = vadd.f32 0.0, %v719
  %v721 = vpop.f32.mrf.mxu0
  %v722 = vadd.f32 0.0, %v721
  %723 = vdwg.mxu0
  %724 = vmatpush.bf16.msra.mxu0 %v576
  %725 = vmatpush.bf16.msra.mxu0 %v575
  %726 = vmatpush.bf16.msra.mxu0 %v574
  %727 = vmatpush.bf16.msra.mxu0 %v573
  %728 = vmatpush.bf16.msra.mxu0 %v572
  %729 = vmatpush.bf16.msra.mxu0 %v571
  %730 = vmatpush.bf16.msra.mxu0 %v570
  %731 = vmatpush.bf16.msra.mxu0 %v569
  %732 = vmatmul.bf16.gmra.mxu0 %v238
  %v733 = vpop.f32.mrf.mxu0
  %v734 = vadd.f32 %v715, %v733
  %v735 = vpop.f32.mrf.mxu0
  %v736 = vadd.f32 %v717, %v735
  %737 = vmatmul.bf16.gmra.mxu0 %v247
  %v738 = vpop.f32.mrf.mxu0
  %v739 = vadd.f32 %v720, %v738
  %v740 = vpop.f32.mrf.mxu0
  %v741 = vadd.f32 %v722, %v740
  %742 = vdwg.mxu0
  %743 = vmatpush.bf16.msra.mxu0 %v584
  %744 = vmatpush.bf16.msra.mxu0 %v583
  %745 = vmatpush.bf16.msra.mxu0 %v582
  %746 = vmatpush.bf16.msra.mxu0 %v581
  %747 = vmatpush.bf16.msra.mxu0 %v580
  %748 = vmatpush.bf16.msra.mxu0 %v579
  %749 = vmatpush.bf16.msra.mxu0 %v578
  %750 = vmatpush.bf16.msra.mxu0 %v577
  %751 = vmatmul.bf16.gmra.mxu0 %v239
  %v752 = vpop.f32.mrf.mxu0
  %v753 = vadd.f32 %v734, %v752
  %v754 = vpop.f32.mrf.mxu0
  %v755 = vadd.f32 %v736, %v754
  %756 = vmatmul.bf16.gmra.mxu0 %v248
  %v757 = vpop.f32.mrf.mxu0
  %v758 = vadd.f32 %v739, %v757
  %v759 = vpop.f32.mrf.mxu0
  %v760 = vadd.f32 %v741, %v759
  %761 = vdwg.mxu0
  %762 = vmatpush.bf16.msra.mxu0 %v592
  %763 = vmatpush.bf16.msra.mxu0 %v591
  %764 = vmatpush.bf16.msra.mxu0 %v590
  %765 = vmatpush.bf16.msra.mxu0 %v589
  %766 = vmatpush.bf16.msra.mxu0 %v588
  %767 = vmatpush.bf16.msra.mxu0 %v587
  %768 = vmatpush.bf16.msra.mxu0 %v586
  %769 = vmatpush.bf16.msra.mxu0 %v585
  %770 = vmatmul.bf16.gmra.mxu0 %v240
  %v771 = vpop.f32.mrf.mxu0
  %v772 = vadd.f32 %v753, %v771
  %v773 = vpop.f32.mrf.mxu0
  %v774 = vadd.f32 %v755, %v773
  %775 = vmatmul.bf16.gmra.mxu0 %v249
  %v776 = vpop.f32.mrf.mxu0
  %v777 = vadd.f32 %v758, %v776
  %v778 = vpop.f32.mrf.mxu0
  %v779 = vadd.f32 %v760, %v778
  %780 = vdwg.mxu0
  %781 = vmatpush.bf16.msra.mxu0 %v600
  %782 = vmatpush.bf16.msra.mxu0 %v599
  %783 = vmatpush.bf16.msra.mxu0 %v598
  %784 = vmatpush.bf16.msra.mxu0 %v597
  %785 = vmatpush.bf16.msra.mxu0 %v596
  %786 = vmatpush.bf16.msra.mxu0 %v595
  %787 = vmatpush.bf16.msra.mxu0 %v594
  %788 = vmatpush.bf16.msra.mxu0 %v593
  %789 = vmatmul.bf16.gmra.mxu0 %v241
  %v790 = vpop.f32.mrf.mxu0
  %v791 = vadd.f32 %v772, %v790
  %v792 = vpop.f32.mrf.mxu0
  %v793 = vadd.f32 %v774, %v792
  %794 = vmatmul.bf16.gmra.mxu0 %v250
  %v795 = vpop.f32.mrf.mxu0
  %v796 = vadd.f32 %v777, %v795
  %v797 = vpop.f32.mrf.mxu0
  %v798 = vadd.f32 %v779, %v797
  %799 = vdwg.mxu0
  %800 = vmatpush.bf16.msra.mxu0 %v608
  %801 = vmatpush.bf16.msra.mxu0 %v607
  %802 = vmatpush.bf16.msra.mxu0 %v606
  %803 = vmatpush.bf16.msra.mxu0 %v605
  %804 = vmatpush.bf16.msra.mxu0 %v604
  %805 = vmatpush.bf16.msra.mxu0 %v603
  %806 = vmatpush.bf16.msra.mxu0 %v602
  %807 = vmatpush.bf16.msra.mxu0 %v601
  %808 = vmatmul.bf16.gmra.mxu0 %v242
  %v809 = vpop.f32.mrf.mxu0
  %v810 = vadd.f32 %v791, %v809
  %v811 = vpop.f32.mrf.mxu0
  %v812 = vadd.f32 %v793, %v811
  %813 = vmatmul.bf16.gmra.mxu0 %v251
  %v814 = vpop.f32.mrf.mxu0
  %v815 = vadd.f32 %v796, %v814
  %v816 = vpop.f32.mrf.mxu0
  %v817 = vadd.f32 %v798, %v816
  %818 = vdwg.mxu0
  %819 = vmatpush.bf16.msra.mxu0 %v616
  %820 = vmatpush.bf16.msra.mxu0 %v615
  %821 = vmatpush.bf16.msra.mxu0 %v614
  %822 = vmatpush.bf16.msra.mxu0 %v613
  %823 = vmatpush.bf16.msra.mxu0 %v612
  %824 = vmatpush.bf16.msra.mxu0 %v611
  %825 = vmatpush.bf16.msra.mxu0 %v610
  %826 = vmatpush.bf16.msra.mxu0 %v609
  %827 = vmatmul.bf16.gmra.mxu0 %v243
  %v828 = vpop.f32.mrf.mxu0
  %v829 = vadd.f32 %v810, %v828
  %v830 = vpop.f32.mrf.mxu0
  %v831 = vadd.f32 %v812, %v830
  %832 = vmatmul.bf16.gmra.mxu0 %v252
  %v833 = vpop.f32.mrf.mxu0
  %v834 = vadd.f32 %v815, %v833
  %v835 = vpop.f32.mrf.mxu0
  %v836 = vadd.f32 %v817, %v835
  %837 = vdwg.mxu0
  %838 = vmatpush.bf16.msra.mxu0 %v624
  %839 = vmatpush.bf16.msra.mxu0 %v623
  %840 = vmatpush.bf16.msra.mxu0 %v622
  %841 = vmatpush.bf16.msra.mxu0 %v621
  %842 = vmatpush.bf16.msra.mxu0 %v620
  %843 = vmatpush.bf16.msra.mxu0 %v619
  %844 = vmatpush.bf16.msra.mxu0 %v618
  %845 = vmatpush.bf16.msra.mxu0 %v617
  %846 = vmatmul.bf16.gmra.mxu0 %v244
  %v847 = vpop.f32.mrf.mxu0
  %v848 = vadd.f32 %v829, %v847
  %v849 = vpop.f32.mrf.mxu0
  %v850 = vadd.f32 %v831, %v849
  %851 = vmatmul.bf16.gmra.mxu0 %v253
  %v852 = vpop.f32.mrf.mxu0
  %v853 = vadd.f32 %v834, %v852
  %v854 = vpop.f32.mrf.mxu0
  %v855 = vadd.f32 %v836, %v854
  %856 = vdwg.mxu0
  %857 = vmatpush.bf16.msra.mxu0 %v632
  %858 = vmatpush.bf16.msra.mxu0 %v631
  %859 = vmatpush.bf16.msra.mxu0 %v630
  %860 = vmatpush.bf16.msra.mxu0 %v629
  %861 = vmatpush.bf16.msra.mxu0 %v628
  %862 = vmatpush.bf16.msra.mxu0 %v627
  %863 = vmatpush.bf16.msra.mxu0 %v626
  %864 = vmatpush.bf16.msra.mxu0 %v625
  %865 = vmatmul.bf16.gmra.mxu0 %v245
  %v866 = vpop.f32.mrf.mxu0
  %v867 = vadd.f32 %v848, %v866
  %v868 = vpop.f32.mrf.mxu0
  %v869 = vadd.f32 %v850, %v868
  %870 = vmatmul.bf16.gmra.mxu0 %v254
  %v871 = vpop.f32.mrf.mxu0
  %v872 = vadd.f32 %v853, %v871
  %v873 = vpop.f32.mrf.mxu0
  %v874 = vadd.f32 %v855, %v873
  %875 = vdwg.mxu0
  %v876 = vld [vmem:[%s2] sm:$0x1]
  %v878 = vperm.slane %v876, 0
  %v880 = vmul.f32 %v867, %v878
  %v881 = vmul.f32 %v869, %v878
  %v882 = vmul.f32 %v872, %v878
  %v883 = vmul.f32 %v874, %v878
  %v884 = vld [vmem:[%s3] sm:$0x1]
  %v886 = vperm.slane %v884, 0
  %v888 = vadd.f32 %v880, %v886
  %v889 = vadd.f32 %v881, %v886
  %v890 = vadd.f32 %v882, %v886
  %v891 = vadd.f32 %v883, %v886
  %v892 = vmax.f32 %v888, 0.0
  %v893 = vmax.f32 %v889, 0.0
  %v894 = vmax.f32 %v890, 0.0
  %v895 = vmax.f32 %v891, 0.0
  %v896 = vpack.c.bf16 %v892, %v892
  %v897 = vpack.c.bf16 %v893, %v893
  %v898 = vpack.c.bf16 %v894, %v894
  %v899 = vpack.c.bf16 %v895, %v895
  %900 = vst [vmem:[%s4] sm:$0xf] %v896
  %901 = vst [vmem:[%s4 + $0x4] sm:$0xf] %v897
  %902 = vst [vmem:[%s4 + $0x8] sm:$0xf] %v898
  %903 = vst [vmem:[%s4 + $0xc] sm:$0xf] %v899
  // Predicated region
  $region18: #{net_forward.17} parent=0 // pred_check
    _
  $region19: #{net_forward.17} parent=0 // pred_check_branch
    %905 = sbr.rel (0) target = $region21
  $region20: #{net_forward.17} parent=0 // pred_region
    _
  $region21: #{net_forward.17} parent=0 // pred_fallthru
    _
  // Predicated region
  $region22: #{net_forward.17} parent=0 // pred_check
    _
  $region23: #{net_forward.17} parent=0 // pred_check_branch
    %907 = sbr.rel (0) target = $region25
  $region24: #{net_forward.17} parent=0 // pred_region
    _
  $region25: #{net_forward.17} parent=0 // pred_fallthru
    _

</llo_original>
